<compile_context>
chip_gen: v7x
topology: tpu7x:2x2x1
jax: 0.10.0
libtpu: 0.0.40
codegen_flags: <defaults>
</compile_context>

<pallas_src>
import math

import numpy as np

import jax
import jax.numpy as jnp
from jax.experimental import pallas as pl
from jax.experimental.pallas import tpu as pltpu


def _round_up(n, m):
    return ((n + m - 1) // m) * m


def _embedding_kernel(m_ref, scale_ref, phase_ref, idm_ref, x_ref, o_ref):
    """One grid step over `tile` folded rows.

    m_ref:     (KC, W) bf16  0/1 replication matrix: rep[t, r*opr+j] = x[t, r*C + j%C]
    scale_ref: (1, W)  f32   per-lane frequency (1.0 on identity lanes)
    phase_ref: (1, W)  f32   pi/2 on cos lanes, 0 elsewhere (single-sin trick)
    idm_ref:   (1, W)  f32   1.0 on identity (pass-through x) lanes
    x_ref:     (tile, KC)    folded input rows  (KC = fold*C, multiple of 128)
    o_ref:     (tile, W)     folded output rows (W = KC*(1+2*N_freqs), multiple of 128)

    NOTE: padded rows of a ragged last block flow through sin() but are masked on
    store; there is no cross-row reduction, so the garbage never reaches valid output.
    """
    x = x_ref[...].astype(jnp.float32)

    # Exact 3-way bf16 split: hi + mid + lo == x bit-exactly (each residual fits in a
    # bf16 mantissa), so the bf16 MXU matmuls transport x at full f32 precision.
    hi_b = x.astype(jnp.bfloat16)
    r1 = x - hi_b.astype(jnp.float32)
    mid_b = r1.astype(jnp.bfloat16)
    lo_b = (r1 - mid_b.astype(jnp.float32)).astype(jnp.bfloat16)

    # Constant MXU matmul does lane replication + identity placement in one shot,
    # producing a lane-dense (tile, W) slab ready for a single wide store.
    m = m_ref[...]
    rep = jnp.dot(hi_b, m, preferred_element_type=jnp.float32)
    rep = rep + jnp.dot(mid_b, m, preferred_element_type=jnp.float32)
    rep = rep + jnp.dot(lo_b, m, preferred_element_type=jnp.float32)      # == x, replicated

    # One wide EUP sin over the whole slab; cos lanes via the +pi/2 phase row.
    arg = rep * scale_ref[...] + phase_ref[...]
    trig = jnp.sin(arg)

    o_ref[...] = jnp.where(idm_ref[...] > 0.5, rep, trig).astype(o_ref.dtype)


def make_embedding(N_freqs=8, logscale=True):
    if logscale:
        freq_bands = tuple(float(2.0 ** k) for k in range(N_freqs))          # exact powers of two
    else:
        freq_bands = tuple(
            float(v) for v in np.linspace(1.0, 2.0 ** (N_freqs - 1), N_freqs).astype(np.float32)
        )

    out_mult = 1 + 2 * N_freqs                      # 17 for N_freqs=8

    def embedding(x, *, tile_rows=512, out_dtype=None):
        """Channel-last positional embedding. out_dtype=bf16 is worthwhile on v6e/v7x."""
        orig_shape = x.shape
        C = int(orig_shape[-1])
        rows = 1
        for d in orig_shape[:-1]:
            rows *= int(d)
        rows = max(rows, 1)
        odt = jnp.dtype(x.dtype if out_dtype is None else out_dtype)
        opr = C * out_mult                          # output channels per original row

        # Fold rows into lanes so both I/O blocks are lane-dense multiples of 128.
        fold = 128 // math.gcd(C, 128)              # fold*C = lcm(C, 128)
        KC = fold * C
        W = fold * opr                              # = KC * out_mult, multiple of 128

        rows_p = _round_up(rows, fold)
        x2 = x.reshape(rows, C)
        if rows_p != rows:
            x2 = jnp.pad(x2, ((0, rows_p - rows), (0, 0)))      # pads the small input stream only
        folded = rows_p // fold
        xf = x2.reshape(folded, KC)                 # free reshape (row-major layout unchanged)

        # ---- trace-time constants (replication matrix + per-lane scale/phase/id mask) ----
        m01 = np.zeros((KC, W), np.float32)
        scale = np.ones((1, W), np.float32)
        phase = np.zeros((1, W), np.float32)
        idm = np.zeros((1, W), np.float32)
        half_pi = np.float32(np.pi / 2)
        for r in range(fold):
            base = r * opr
            for j in range(opr):
                col = base + j
                m01[r * C + (j % C), col] = 1.0
                if j < C:
                    idm[0, col] = 1.0
                else:
                    scale[0, col] = freq_bands[(j - C) // (2 * C)]
                    if ((j - C) // C) % 2 == 1:     # odd C-chunk after identity -> cos
                        phase[0, col] = half_pi
        m01 = jnp.asarray(m01, dtype=jnp.bfloat16)  # 0/1 entries -> exact in bf16
        scale = jnp.asarray(scale)
        phase = jnp.asarray(phase)
        idm = jnp.asarray(idm)

        tile = _round_up(max(1, min(int(tile_rows), folded)), 16)
        n_blocks = pl.cdiv(folded, tile)

        in_bytes = rows_p * C * x2.dtype.itemsize
        out_bytes = rows_p * opr * odt.itemsize
        cost = pl.CostEstimate(
            flops=int(2 * folded * (3 * KC) * W + 4 * folded * W),
            transcendentals=int(folded * W),
            bytes_accessed=int(in_bytes + out_bytes + m01.size * 2),
        )

        out = pl.pallas_call(
            _embedding_kernel,
            out_shape=jax.ShapeDtypeStruct((folded, W), odt),
            grid_spec=pltpu.PrefetchScalarGridSpec(
                num_scalar_prefetch=0,
                grid=(n_blocks,),
                in_specs=[
                    pl.BlockSpec((KC, W), lambda i: (0, 0)),     # replication matrix (constant)
                    pl.BlockSpec((1, W), lambda i: (0, 0)),      # frequency scale row
                    pl.BlockSpec((1, W), lambda i: (0, 0)),      # phase row (pi/2 on cos lanes)
                    pl.BlockSpec((1, W), lambda i: (0, 0)),      # identity-lane mask
                    pl.BlockSpec((tile, KC), lambda i: (i, 0)),  # folded input rows
                ],
                out_specs=pl.BlockSpec((tile, W), lambda i: (i, 0)),
            ),
            compiler_params=pltpu.CompilerParams(
                dimension_semantics=("parallel",),               # megacore / v7x 2-TC sharding
                vmem_limit_bytes=48 * 1024 * 1024,
            ),
            cost_estimate=cost,
        )(m01, scale, phase, idm, xf)

        out = out.reshape(rows_p, opr)              # free un-fold
        if rows_p != rows:
            out = out[:rows]
        return out.reshape(*orig_shape[:-1], opr)

    return embedding, freq_bands


def _reference(x, freq_bands):
    parts = [x]
    for f in freq_bands:
        parts.append(jnp.sin(f * x))
        parts.append(jnp.cos(f * x))
    return jnp.concatenate(parts, axis=-1)


if __name__ == "__main__":
    embedding, freq_bands = make_embedding(N_freqs=8, logscale=True)

    # Case 1: small NeRF-like input (batch=2, 64 points, 4 channels); 128 rows fold
    # exactly into 4 folded rows -> single block.
    x = jax.random.normal(jax.random.PRNGKey(0), (2, 64, 4), dtype=jnp.float32)
    out = jax.block_until_ready(embedding(x))
    ref = _reference(x, freq_bands)
    assert out.shape == (2, 64, 4 * 17), out.shape
    # sin / identity lanes are argument-exact; cos lanes use sin(arg + pi/2), which adds
    # <= 1 ulp(arg) of argument rounding (arg up to ~500 here) -> relaxed atol.
    err1 = float(jnp.max(jnp.abs(out - ref)))
    assert jnp.allclose(out, ref, atol=2e-4, rtol=1e-4), f"mismatch case 1: {err1}"

    # Case 2: rows not divisible by the fold (3*200 = 600 -> padded to 608 -> 19 folded
    # rows) plus a multi-step grid with a ragged last block (tile=16 -> grid=2).
    x2 = jax.random.normal(jax.random.PRNGKey(1), (3, 200, 4), dtype=jnp.float32)
    out2 = jax.block_until_ready(embedding(x2, tile_rows=16))
    ref2 = _reference(x2, freq_bands)
    assert out2.shape == (3, 200, 4 * 17), out2.shape
    err2 = float(jnp.max(jnp.abs(out2 - ref2)))
    assert jnp.allclose(out2, ref2, atol=2e-4, rtol=1e-4), f"mismatch case 2: {err2}"

    # Case 3: bf16 output (recommended on v6e/v7x: halves the dominant HBM write stream;
    # compute stays f32 in-kernel, cast only at the store).
    out3 = jax.block_until_ready(embedding(x, out_dtype=jnp.bfloat16))
    assert out3.dtype == jnp.bfloat16
    assert jnp.allclose(out3.astype(jnp.float32), ref, atol=4e-2, rtol=4e-2), "mismatch case 3"

    print("KERNEL_OK")
</pallas_src>

<mosaic_0001>
module attributes {stable_mosaic.version = 11 : i64} {
  func.func @_embedding_kernel(%arg0: i32, %arg1: memref<128x2176xbf16, #tpu.memory_space<vmem>>, %arg2: memref<1x2176xf32, #tpu.memory_space<vmem>>, %arg3: memref<1x2176xf32, #tpu.memory_space<vmem>>, %arg4: memref<1x2176xf32, #tpu.memory_space<vmem>>, %arg5: memref<16x128xf32, #tpu.memory_space<vmem>>, %arg6: memref<16x2176xf32, #tpu.memory_space<vmem>>) attributes {dimension_semantics = [#tpu.dimension_semantics<parallel>], iteration_bounds = array<i64: 1>, scalar_prefetch = 0 : i64, scratch_operands = 0 : i64, tpu.core_type = #tpu.core_type<tc>, window_params = [{pipeline_mode = #tpu.pipeline_mode<synchronous>, transform_indices = @transform_0, window_bounds = array<i64: 128, 2176>}, {pipeline_mode = #tpu.pipeline_mode<synchronous>, transform_indices = @transform_1, window_bounds = array<i64: 1, 2176>}, {pipeline_mode = #tpu.pipeline_mode<synchronous>, transform_indices = @transform_2, window_bounds = array<i64: 1, 2176>}, {pipeline_mode = #tpu.pipeline_mode<synchronous>, transform_indices = @transform_3, window_bounds = array<i64: 1, 2176>}, {transform_indices = @transform_4, window_bounds = array<i64: 16, 128>}, {transform_indices = @transform_5, window_bounds = array<i64: 16, 2176>}]} {
    %c0 = arith.constant 0 : index
    %c0_0 = arith.constant 0 : index
    %0 = vector.load %arg5[%c0, %c0_0] : memref<16x128xf32, #tpu.memory_space<vmem>>, vector<16x128xf32>
    %1 = arith.truncf %0 : vector<16x128xf32> to vector<16x128xbf16>
    %2 = arith.extf %1 : vector<16x128xbf16> to vector<16x128xf32>
    %3 = arith.subf %0, %2 : vector<16x128xf32>
    %4 = arith.truncf %3 : vector<16x128xf32> to vector<16x128xbf16>
    %5 = arith.extf %4 : vector<16x128xbf16> to vector<16x128xf32>
    %6 = arith.subf %3, %5 : vector<16x128xf32>
    %7 = arith.truncf %6 : vector<16x128xf32> to vector<16x128xbf16>
    %c0_1 = arith.constant 0 : index
    %c0_2 = arith.constant 0 : index
    %8 = vector.load %arg1[%c0_1, %c0_2] : memref<128x2176xbf16, #tpu.memory_space<vmem>>, vector<128x2176xbf16>
    %cst = arith.constant dense<0.000000e+00> : vector<16x2176xf32>
    %9 = tpu.matmul %1, %8, %cst {dimension_numbers = #tpu.dot_dimension_numbers<[1], [0], [0], [1], [0, 0, 1, 1], [], []>} : vector<16x128xbf16>, vector<128x2176xbf16>, vector<16x2176xf32> -> vector<16x2176xf32>
    %cst_3 = arith.constant dense<0.000000e+00> : vector<16x2176xf32>
    %10 = tpu.matmul %4, %8, %cst_3 {dimension_numbers = #tpu.dot_dimension_numbers<[1], [0], [0], [1], [0, 0, 1, 1], [], []>} : vector<16x128xbf16>, vector<128x2176xbf16>, vector<16x2176xf32> -> vector<16x2176xf32>
    %11 = arith.addf %9, %10 : vector<16x2176xf32>
    %cst_4 = arith.constant dense<0.000000e+00> : vector<16x2176xf32>
    %12 = tpu.matmul %7, %8, %cst_4 {dimension_numbers = #tpu.dot_dimension_numbers<[1], [0], [0], [1], [0, 0, 1, 1], [], []>} : vector<16x128xbf16>, vector<128x2176xbf16>, vector<16x2176xf32> -> vector<16x2176xf32>
    %13 = arith.addf %11, %12 : vector<16x2176xf32>
    %c0_5 = arith.constant 0 : index
    %c0_6 = arith.constant 0 : index
    %14 = vector.load %arg2[%c0_5, %c0_6] : memref<1x2176xf32, #tpu.memory_space<vmem>>, vector<1x2176xf32>
    %15 = vector.broadcast %14 : vector<1x2176xf32> to vector<16x2176xf32>
    %16 = arith.mulf %13, %15 : vector<16x2176xf32>
    %c0_7 = arith.constant 0 : index
    %c0_8 = arith.constant 0 : index
    %17 = vector.load %arg3[%c0_7, %c0_8] : memref<1x2176xf32, #tpu.memory_space<vmem>>, vector<1x2176xf32>
    %18 = vector.broadcast %17 : vector<1x2176xf32> to vector<16x2176xf32>
    %19 = arith.addf %16, %18 : vector<16x2176xf32>
    %20 = math.sin %19 : vector<16x2176xf32>
    %c0_9 = arith.constant 0 : index
    %c0_10 = arith.constant 0 : index
    %21 = vector.load %arg4[%c0_9, %c0_10] : memref<1x2176xf32, #tpu.memory_space<vmem>>, vector<1x2176xf32>
    %cst_11 = arith.constant 5.000000e-01 : f32
    %22 = vector.broadcast %cst_11 : f32 to vector<1x2176xf32>
    %23 = arith.cmpf ogt, %21, %22 : vector<1x2176xf32>
    %24 = vector.shape_cast %23 : vector<1x2176xi1> to vector<1x2176xi1>
    %25 = vector.broadcast %24 : vector<1x2176xi1> to vector<16x2176xi1>
    %26 = arith.select %25, %13, %20 : vector<16x2176xi1>, vector<16x2176xf32>
    %c0_12 = arith.constant 0 : index
    %c0_13 = arith.constant 0 : index
    %27 = vector.load %arg6[%c0_12, %c0_13] : memref<16x2176xf32, #tpu.memory_space<vmem>>, vector<16x2176xf32>
    tpu.vector_store %arg6[%c0_12, %c0_13], %26 {strides = array<i32>} : memref<16x2176xf32, #tpu.memory_space<vmem>>, vector<16x2176xf32>,
    return
  }
  func.func @transform_0(%arg0: i32) -> (i32, i32) {
    %c0_i32 = arith.constant 0 : i32
    %c0_i32_0 = arith.constant 0 : i32
    %c0_i32_1 = arith.constant 0 : i32
    return %c0_i32, %c0_i32_0 : i32, i32
  }
  func.func @transform_1(%arg0: i32) -> (i32, i32) {
    %c0_i32 = arith.constant 0 : i32
    %c0_i32_0 = arith.constant 0 : i32
    %c0_i32_1 = arith.constant 0 : i32
    return %c0_i32, %c0_i32_0 : i32, i32
  }
  func.func @transform_2(%arg0: i32) -> (i32, i32) {
    %c0_i32 = arith.constant 0 : i32
    %c0_i32_0 = arith.constant 0 : i32
    %c0_i32_1 = arith.constant 0 : i32
    return %c0_i32, %c0_i32_0 : i32, i32
  }
  func.func @transform_3(%arg0: i32) -> (i32, i32) {
    %c0_i32 = arith.constant 0 : i32
    %c0_i32_0 = arith.constant 0 : i32
    %c0_i32_1 = arith.constant 0 : i32
    return %c0_i32, %c0_i32_0 : i32, i32
  }
  func.func @transform_4(%arg0: i32) -> (i32, i32) {
    %c0_i32 = arith.constant 0 : i32
    %c0_i32_0 = arith.constant 0 : i32
    return %arg0, %c0_i32 : i32, i32
  }
  func.func @transform_5(%arg0: i32) -> (i32, i32) {
    %c0_i32 = arith.constant 0 : i32
    %c0_i32_0 = arith.constant 0 : i32
    return %arg0, %c0_i32 : i32, i32
  }
}

</mosaic_0001>

<llo_original>
// kernel: tpu_custom_call.1
$region0: #{tpu_custom_call.1}
  #allocation0 [shape = 'u32[]', space=smem, size = 0x4, offset = 0x4, fixed_abs, tag = 'smem constant byte address 0x4 - core index']
  #allocation1 [shape = 'u32[144,128]{1,0:T(1,128)}', space=vmem, size = 0x12000, scoped, tag = 'internal scratch']
  %s0 = inlined_call_operand.hbm [shape: bf16[128,2176], index: 0, kind: input, shape index: {}]
  %s1 = inlined_call_operand.hbm [shape: f32[1,2176], index: 1, kind: input, shape index: {}]
  %s2 = inlined_call_operand.hbm [shape: f32[1,2176], index: 2, kind: input, shape index: {}]
  %s3 = inlined_call_operand.hbm [shape: f32[1,2176], index: 3, kind: input, shape index: {}]
  %s4 = inlined_call_operand.vmem [shape: f32[4,128], index: 4, kind: input, shape index: {}]
  %s5 = inlined_call_operand.hbm [shape: f32[4,2176], index: 5, kind: output, shape index: {}]
  %s6 = sld [smem:[#allocation0]]
  $region46: #{tpu_custom_call.1} parent=0
    _
  %s8 = ssub.s32 1, %s6
  %s9 = scalar_select 0, %s8, %s6
  $region1: #{tpu_custom_call.1} parent=0
    #allocation2 [shape = 'u8[557056]{0}', space=vmem, size = 0x88000, scoped, tag = 'input window, operand 0, single buffered']
    #allocation3 [shape = 's32[1]{0}', space=sflag, size = 0x4, scoped, tag = 'scoped memory for tpu_custom_call.1']
    #allocation4 [shape = 's32[1]{0}', space=sflag, size = 0x4, scoped, tag = 'scoped memory for tpu_custom_call.1']
    #allocation5 [shape = 'u8[8704]{0}', space=vmem, size = 0x2400, scoped, tag = 'input window, operand 1, single buffered']
    #allocation6 [shape = 's32[1]{0}', space=sflag, size = 0x4, scoped, tag = 'scoped memory for tpu_custom_call.1']
    #allocation7 [shape = 'u8[8704]{0}', space=vmem, size = 0x2400, scoped, tag = 'input window, operand 2, single buffered']
    #allocation8 [shape = 'u8[8704]{0}', space=vmem, size = 0x2400, scoped, tag = 'input window, operand 3, single buffered']
    #allocation9 [shape = 's32[1]{0}', space=sflag, size = 0x4, scoped, tag = 'scoped memory for tpu_custom_call.1']
    #allocation10 [shape = 'u8[139264]{0}', space=vmem, size = 0x22000, scoped, tag = 'output window, operand 0, single buffered']
    %10 = vsyncpa [#allocation3], 0
    %11 = vsyncpa [#allocation6], 0
    %12 = vsyncpa [#allocation9], 0
    %13 = vsyncpa [#allocation4], 0
    // Predicated region
    $region2: #{tpu_custom_call.1} parent=1 // pred_check
      _
    $region3: #{tpu_custom_call.1} parent=1 // pred_check_branch
      %15 = sbr.rel (0) target = $region5
    $region4: #{tpu_custom_call.1} parent=1 // pred_region
      %s17 = ssub.s32 17408, 17408
      %18 = vsyncadd [#allocation3], %s17
      %s19 = sshll.u32 [#allocation2], 4
      %s20 = int_to_ptr.vmem [resolvable:$true] %s19
      %25 = dma.hbm_to_vmem [thread:$0]  %s0, 17408, %s20, [#allocation3], 1088, 1088, 68
    $region5: #{tpu_custom_call.1} parent=1 // pred_fallthru
      _
    // Predicated region
    $region6: #{tpu_custom_call.1} parent=1 // pred_check
      _
    $region7: #{tpu_custom_call.1} parent=1 // pred_check_branch
      %27 = sbr.rel (0) target = $region9
    $region8: #{tpu_custom_call.1} parent=1 // pred_region
      %s29 = ssub.s32 272, 272
      %30 = vsyncadd [#allocation6], %s29
      %s32 = sshll.u32 [#allocation5], 4
      %s33 = int_to_ptr.vmem [resolvable:$true] %s32
      %35 = dma.hbm_to_vmem [thread:$0]  %s1, 272, %s33, [#allocation6]
    $region9: #{tpu_custom_call.1} parent=1 // pred_fallthru
      _
    // Predicated region
    $region10: #{tpu_custom_call.1} parent=1 // pred_check
      _
    $region11: #{tpu_custom_call.1} parent=1 // pred_check_branch
      %37 = sbr.rel (0) target = $region13
    $region12: #{tpu_custom_call.1} parent=1 // pred_region
      %s39 = ssub.s32 272, 272
      %40 = vsyncadd [#allocation6], %s39
      %s42 = sshll.u32 [#allocation7], 4
      %s43 = int_to_ptr.vmem [resolvable:$true] %s42
      %45 = dma.hbm_to_vmem [thread:$0]  %s2, 272, %s43, [#allocation6]
    $region13: #{tpu_custom_call.1} parent=1 // pred_fallthru
      _
    // Predicated region
    $region14: #{tpu_custom_call.1} parent=1 // pred_check
      _
    $region15: #{tpu_custom_call.1} parent=1 // pred_check_branch
      %47 = sbr.rel (0) target = $region17
    $region16: #{tpu_custom_call.1} parent=1 // pred_region
      %s49 = ssub.s32 272, 272
      %50 = vsyncadd [#allocation9], %s49
      %s52 = sshll.u32 [#allocation8], 4
      %s53 = int_to_ptr.vmem [resolvable:$true] %s52
      %55 = dma.hbm_to_vmem [thread:$0]  %s3, 272, %s53, [#allocation9]
    $region17: #{tpu_custom_call.1} parent=1 // pred_fallthru
      _
    // Predicated region
    $region18: #{tpu_custom_call.1} parent=1 // pred_check
      _
    $region19: #{tpu_custom_call.1} parent=1 // pred_check_branch
      %57 = sbr.rel (0) target = $region21
    $region20: #{tpu_custom_call.1} parent=1 // pred_region
      _
    $region21: #{tpu_custom_call.1} parent=1 // pred_fallthru
      _
    // Predicated region
    $region22: #{tpu_custom_call.1} parent=1 // pred_check
      _
    $region23: #{tpu_custom_call.1} parent=1 // pred_check_branch
      %59 = sbr.rel (0) target = $region25
    $region24: #{tpu_custom_call.1} parent=1 // pred_region
      %60 = dma.done [#allocation3], 17408
    $region25: #{tpu_custom_call.1} parent=1 // pred_fallthru
      _
    // Predicated region
    $region26: #{tpu_custom_call.1} parent=1 // pred_check
      _
    $region27: #{tpu_custom_call.1} parent=1 // pred_check_branch
      %62 = sbr.rel (0) target = $region29
    $region28: #{tpu_custom_call.1} parent=1 // pred_region
      %63 = dma.done [#allocation6], 272
    $region29: #{tpu_custom_call.1} parent=1 // pred_fallthru
      _
    // Predicated region
    $region30: #{tpu_custom_call.1} parent=1 // pred_check
      _
    $region31: #{tpu_custom_call.1} parent=1 // pred_check_branch
      %65 = sbr.rel (0) target = $region33
    $region32: #{tpu_custom_call.1} parent=1 // pred_region
      %66 = dma.done [#allocation6], 272
    $region33: #{tpu_custom_call.1} parent=1 // pred_fallthru
      _
    // Predicated region
    $region34: #{tpu_custom_call.1} parent=1 // pred_check
      _
    $region35: #{tpu_custom_call.1} parent=1 // pred_check_branch
      %68 = sbr.rel (0) target = $region37
    $region36: #{tpu_custom_call.1} parent=1 // pred_region
      %69 = dma.done [#allocation9], 272
    $region37: #{tpu_custom_call.1} parent=1 // pred_fallthru
      _
    %v71 = vld [vmem:[%s4] sm:$0xff]
    %v72 = vld [vmem:[%s4 + $0x8] sm:$0xff]
    %v73 = vpack.c.bf16 %v72, %v71
    %v74 = vunpack.c.l.bf16 %v73
    %v75 = vunpack.c.h.bf16 %v73
    %v76 = vsub.f32 %v71, %v74
    %v77 = vsub.f32 %v72, %v75
    %v78 = vpack.c.bf16 %v77, %v76
    %v79 = vunpack.c.l.bf16 %v78
    %v80 = vunpack.c.h.bf16 %v78
    %v81 = vsub.f32 %v76, %v79
    %v82 = vsub.f32 %v77, %v80
    %v83 = vpack.c.bf16 %v82, %v81
    %v84 = vld [vmem:[#allocation2] sm:$0xff]
    %v85 = vld [vmem:[#allocation2 + $0x8] sm:$0xff]
    %v86 = vld [vmem:[#allocation2 + $0x10] sm:$0xff]
    %v87 = vld [vmem:[#allocation2 + $0x18] sm:$0xff]
    %v88 = vld [vmem:[#allocation2 + $0x20] sm:$0xff]
    %v89 = vld [vmem:[#allocation2 + $0x28] sm:$0xff]
    %v90 = vld [vmem:[#allocation2 + $0x30] sm:$0xff]
    %v91 = vld [vmem:[#allocation2 + $0x38] sm:$0xff]
    %v92 = vld [vmem:[#allocation2 + $0x40] sm:$0xf]
    %v93 = vld [vmem:[#allocation2 + $0x44] sm:$0xff]
    %v94 = vld [vmem:[#allocation2 + $0x4c] sm:$0xff]
    %v95 = vld [vmem:[#allocation2 + $0x54] sm:$0xff]
    %v96 = vld [vmem:[#allocation2 + $0x5c] sm:$0xff]
    %v97 = vld [vmem:[#allocation2 + $0x64] sm:$0xff]
    %v98 = vld [vmem:[#allocation2 + $0x6c] sm:$0xff]
    %v99 = vld [vmem:[#allocation2 + $0x74] sm:$0xff]
    %v100 = vld [vmem:[#allocation2 + $0x7c] sm:$0xff]
    %v101 = vld [vmem:[#allocation2 + $0x84] sm:$0xf]
    %v102 = vld [vmem:[#allocation2 + $0x88] sm:$0xff]
    %v103 = vld [vmem:[#allocation2 + $0x90] sm:$0xff]
    %v104 = vld [vmem:[#allocation2 + $0x98] sm:$0xff]
    %v105 = vld [vmem:[#allocation2 + $0xa0] sm:$0xff]
    %v106 = vld [vmem:[#allocation2 + $0xa8] sm:$0xff]
    %v107 = vld [vmem:[#allocation2 + $0xb0] sm:$0xff]
    %v108 = vld [vmem:[#allocation2 + $0xb8] sm:$0xff]
    %v109 = vld [vmem:[#allocation2 + $0xc0] sm:$0xff]
    %v110 = vld [vmem:[#allocation2 + $0xc8] sm:$0xf]
    %v111 = vld [vmem:[#allocation2 + $0xcc] sm:$0xff]
    %v112 = vld [vmem:[#allocation2 + $0xd4] sm:$0xff]
    %v113 = vld [vmem:[#allocation2 + $0xdc] sm:$0xff]
    %v114 = vld [vmem:[#allocation2 + $0xe4] sm:$0xff]
    %v115 = vld [vmem:[#allocation2 + $0xec] sm:$0xff]
    %v116 = vld [vmem:[#allocation2 + $0xf4] sm:$0xff]
    %v117 = vld [vmem:[#allocation2 + $0xfc] sm:$0xff]
    %v118 = vld [vmem:[#allocation2 + $0x104] sm:$0xff]
    %v119 = vld [vmem:[#allocation2 + $0x10c] sm:$0xf]
    %v120 = vld [vmem:[#allocation2 + $0x110] sm:$0xff]
    %v121 = vld [vmem:[#allocation2 + $0x118] sm:$0xff]
    %v122 = vld [vmem:[#allocation2 + $0x120] sm:$0xff]
    %v123 = vld [vmem:[#allocation2 + $0x128] sm:$0xff]
    %v124 = vld [vmem:[#allocation2 + $0x130] sm:$0xff]
    %v125 = vld [vmem:[#allocation2 + $0x138] sm:$0xff]
    %v126 = vld [vmem:[#allocation2 + $0x140] sm:$0xff]
    %v127 = vld [vmem:[#allocation2 + $0x148] sm:$0xff]
    %v128 = vld [vmem:[#allocation2 + $0x150] sm:$0xf]
    %v129 = vld [vmem:[#allocation2 + $0x154] sm:$0xff]
    %v130 = vld [vmem:[#allocation2 + $0x15c] sm:$0xff]
    %v131 = vld [vmem:[#allocation2 + $0x164] sm:$0xff]
    %v132 = vld [vmem:[#allocation2 + $0x16c] sm:$0xff]
    %v133 = vld [vmem:[#allocation2 + $0x174] sm:$0xff]
    %v134 = vld [vmem:[#allocation2 + $0x17c] sm:$0xff]
    %v135 = vld [vmem:[#allocation2 + $0x184] sm:$0xff]
    %v136 = vld [vmem:[#allocation2 + $0x18c] sm:$0xff]
    %v137 = vld [vmem:[#allocation2 + $0x194] sm:$0xf]
    %v138 = vld [vmem:[#allocation2 + $0x198] sm:$0xff]
    %v139 = vld [vmem:[#allocation2 + $0x1a0] sm:$0xff]
    %v140 = vld [vmem:[#allocation2 + $0x1a8] sm:$0xff]
    %v141 = vld [vmem:[#allocation2 + $0x1b0] sm:$0xff]
    %v142 = vld [vmem:[#allocation2 + $0x1b8] sm:$0xff]
    %v143 = vld [vmem:[#allocation2 + $0x1c0] sm:$0xff]
    %v144 = vld [vmem:[#allocation2 + $0x1c8] sm:$0xff]
    %v145 = vld [vmem:[#allocation2 + $0x1d0] sm:$0xff]
    %v146 = vld [vmem:[#allocation2 + $0x1d8] sm:$0xf]
    %v147 = vld [vmem:[#allocation2 + $0x1dc] sm:$0xff]
    %v148 = vld [vmem:[#allocation2 + $0x1e4] sm:$0xff]
    %v149 = vld [vmem:[#allocation2 + $0x1ec] sm:$0xff]
    %v150 = vld [vmem:[#allocation2 + $0x1f4] sm:$0xff]
    %v151 = vld [vmem:[#allocation2 + $0x1fc] sm:$0xff]
    %v152 = vld [vmem:[#allocation2 + $0x204] sm:$0xff]
    %v153 = vld [vmem:[#allocation2 + $0x20c] sm:$0xff]
    %v154 = vld [vmem:[#allocation2 + $0x214] sm:$0xff]
    %v155 = vld [vmem:[#allocation2 + $0x21c] sm:$0xf]
    %v156 = vld [vmem:[#allocation2 + $0x220] sm:$0xff]
    %v157 = vld [vmem:[#allocation2 + $0x228] sm:$0xff]
    %v158 = vld [vmem:[#allocation2 + $0x230] sm:$0xff]
    %v159 = vld [vmem:[#allocation2 + $0x238] sm:$0xff]
    %v160 = vld [vmem:[#allocation2 + $0x240] sm:$0xff]
    %v161 = vld [vmem:[#allocation2 + $0x248] sm:$0xff]
    %v162 = vld [vmem:[#allocation2 + $0x250] sm:$0xff]
    %v163 = vld [vmem:[#allocation2 + $0x258] sm:$0xff]
    %v164 = vld [vmem:[#allocation2 + $0x260] sm:$0xf]
    %v165 = vld [vmem:[#allocation2 + $0x264] sm:$0xff]
    %v166 = vld [vmem:[#allocation2 + $0x26c] sm:$0xff]
    %v167 = vld [vmem:[#allocation2 + $0x274] sm:$0xff]
    %v168 = vld [vmem:[#allocation2 + $0x27c] sm:$0xff]
    %v169 = vld [vmem:[#allocation2 + $0x284] sm:$0xff]
    %v170 = vld [vmem:[#allocation2 + $0x28c] sm:$0xff]
    %v171 = vld [vmem:[#allocation2 + $0x294] sm:$0xff]
    %v172 = vld [vmem:[#allocation2 + $0x29c] sm:$0xff]
    %v173 = vld [vmem:[#allocation2 + $0x2a4] sm:$0xf]
    %v174 = vld [vmem:[#allocation2 + $0x2a8] sm:$0xff]
    %v175 = vld [vmem:[#allocation2 + $0x2b0] sm:$0xff]
    %v176 = vld [vmem:[#allocation2 + $0x2b8] sm:$0xff]
    %v177 = vld [vmem:[#allocation2 + $0x2c0] sm:$0xff]
    %v178 = vld [vmem:[#allocation2 + $0x2c8] sm:$0xff]
    %v179 = vld [vmem:[#allocation2 + $0x2d0] sm:$0xff]
    %v180 = vld [vmem:[#allocation2 + $0x2d8] sm:$0xff]
    %v181 = vld [vmem:[#allocation2 + $0x2e0] sm:$0xff]
    %v182 = vld [vmem:[#allocation2 + $0x2e8] sm:$0xf]
    %v183 = vld [vmem:[#allocation2 + $0x2ec] sm:$0xff]
    %v184 = vld [vmem:[#allocation2 + $0x2f4] sm:$0xff]
    %v185 = vld [vmem:[#allocation2 + $0x2fc] sm:$0xff]
    %v186 = vld [vmem:[#allocation2 + $0x304] sm:$0xff]
    %v187 = vld [vmem:[#allocation2 + $0x30c] sm:$0xff]
    %v188 = vld [vmem:[#allocation2 + $0x314] sm:$0xff]
    %v189 = vld [vmem:[#allocation2 + $0x31c] sm:$0xff]
    %v190 = vld [vmem:[#allocation2 + $0x324] sm:$0xff]
    %v191 = vld [vmem:[#allocation2 + $0x32c] sm:$0xf]
    %v192 = vld [vmem:[#allocation2 + $0x330] sm:$0xff]
    %v193 = vld [vmem:[#allocation2 + $0x338] sm:$0xff]
    %v194 = vld [vmem:[#allocation2 + $0x340] sm:$0xff]
    %v195 = vld [vmem:[#allocation2 + $0x348] sm:$0xff]
    %v196 = vld [vmem:[#allocation2 + $0x350] sm:$0xff]
    %v197 = vld [vmem:[#allocation2 + $0x358] sm:$0xff]
    %v198 = vld [vmem:[#allocation2 + $0x360] sm:$0xff]
    %v199 = vld [vmem:[#allocation2 + $0x368] sm:$0xff]
    %v200 = vld [vmem:[#allocation2 + $0x370] sm:$0xf]
    %v201 = vld [vmem:[#allocation2 + $0x374] sm:$0xff]
    %v202 = vld [vmem:[#allocation2 + $0x37c] sm:$0xff]
    %v203 = vld [vmem:[#allocation2 + $0x384] sm:$0xff]
    %v204 = vld [vmem:[#allocation2 + $0x38c] sm:$0xff]
    %v205 = vld [vmem:[#allocation2 + $0x394] sm:$0xff]
    %v206 = vld [vmem:[#allocation2 + $0x39c] sm:$0xff]
    %v207 = vld [vmem:[#allocation2 + $0x3a4] sm:$0xff]
    %v208 = vld [vmem:[#allocation2 + $0x3ac] sm:$0xff]
    %v209 = vld [vmem:[#allocation2 + $0x3b4] sm:$0xf]
    %v210 = vld [vmem:[#allocation2 + $0x3b8] sm:$0xff]
    %v211 = vld [vmem:[#allocation2 + $0x3c0] sm:$0xff]
    %v212 = vld [vmem:[#allocation2 + $0x3c8] sm:$0xff]
    %v213 = vld [vmem:[#allocation2 + $0x3d0] sm:$0xff]
    %v214 = vld [vmem:[#allocation2 + $0x3d8] sm:$0xff]
    %v215 = vld [vmem:[#allocation2 + $0x3e0] sm:$0xff]
    %v216 = vld [vmem:[#allocation2 + $0x3e8] sm:$0xff]
    %v217 = vld [vmem:[#allocation2 + $0x3f0] sm:$0xff]
    %v218 = vld [vmem:[#allocation2 + $0x3f8] sm:$0xf]
    %v219 = vld [vmem:[#allocation2 + $0x3fc] sm:$0xff]
    %v220 = vld [vmem:[#allocation2 + $0x404] sm:$0xff]
    %v221 = vld [vmem:[#allocation2 + $0x40c] sm:$0xff]
    %v222 = vld [vmem:[#allocation2 + $0x414] sm:$0xff]
    %v223 = vld [vmem:[#allocation2 + $0x41c] sm:$0xff]
    %v224 = vld [vmem:[#allocation2 + $0x424] sm:$0xff]
    %v225 = vld [vmem:[#allocation2 + $0x42c] sm:$0xff]
    %v226 = vld [vmem:[#allocation2 + $0x434] sm:$0xff]
    %v227 = vld [vmem:[#allocation2 + $0x43c] sm:$0xf]
    %v372 = vunpack.c.l.b16 %v84
    %v373 = vunpack.c.h.b16 %v84
    %v374 = vunpack.c.l.b16 %v85
    %v375 = vunpack.c.h.b16 %v85
    %v376 = vunpack.c.l.b16 %v86
    %v377 = vunpack.c.h.b16 %v86
    %v378 = vunpack.c.l.b16 %v87
    %v379 = vunpack.c.h.b16 %v87
    %v380 = vunpack.c.l.b16 %v88
    %v381 = vunpack.c.h.b16 %v88
    %v382 = vunpack.c.l.b16 %v89
    %v383 = vunpack.c.h.b16 %v89
    %v384 = vunpack.c.l.b16 %v90
    %v385 = vunpack.c.h.b16 %v90
    %v386 = vunpack.c.l.b16 %v91
    %v387 = vunpack.c.h.b16 %v91
    %v388 = vunpack.c.l.b16 %v92
    %v389 = vunpack.c.l.b16 %v93
    %v390 = vunpack.c.h.b16 %v93
    %v391 = vunpack.c.l.b16 %v94
    %v392 = vunpack.c.h.b16 %v94
    %v393 = vunpack.c.l.b16 %v95
    %v394 = vunpack.c.h.b16 %v95
    %v395 = vunpack.c.l.b16 %v96
    %v396 = vunpack.c.h.b16 %v96
    %v397 = vunpack.c.l.b16 %v97
    %v398 = vunpack.c.h.b16 %v97
    %v399 = vunpack.c.l.b16 %v98
    %v400 = vunpack.c.h.b16 %v98
    %v401 = vunpack.c.l.b16 %v99
    %v402 = vunpack.c.h.b16 %v99
    %v403 = vunpack.c.l.b16 %v100
    %v404 = vunpack.c.h.b16 %v100
    %v405 = vunpack.c.l.b16 %v101
    %v406 = vunpack.c.l.b16 %v102
    %v407 = vunpack.c.h.b16 %v102
    %v408 = vunpack.c.l.b16 %v103
    %v409 = vunpack.c.h.b16 %v103
    %v410 = vunpack.c.l.b16 %v104
    %v411 = vunpack.c.h.b16 %v104
    %v412 = vunpack.c.l.b16 %v105
    %v413 = vunpack.c.h.b16 %v105
    %v414 = vunpack.c.l.b16 %v106
    %v415 = vunpack.c.h.b16 %v106
    %v416 = vunpack.c.l.b16 %v107
    %v417 = vunpack.c.h.b16 %v107
    %v418 = vunpack.c.l.b16 %v108
    %v419 = vunpack.c.h.b16 %v108
    %v420 = vunpack.c.l.b16 %v109
    %v421 = vunpack.c.h.b16 %v109
    %v422 = vunpack.c.l.b16 %v110
    %v423 = vunpack.c.l.b16 %v111
    %v424 = vunpack.c.h.b16 %v111
    %v425 = vunpack.c.l.b16 %v112
    %v426 = vunpack.c.h.b16 %v112
    %v427 = vunpack.c.l.b16 %v113
    %v428 = vunpack.c.h.b16 %v113
    %v429 = vunpack.c.l.b16 %v114
    %v430 = vunpack.c.h.b16 %v114
    %v431 = vunpack.c.l.b16 %v115
    %v432 = vunpack.c.h.b16 %v115
    %v433 = vunpack.c.l.b16 %v116
    %v434 = vunpack.c.h.b16 %v116
    %v435 = vunpack.c.l.b16 %v117
    %v436 = vunpack.c.h.b16 %v117
    %v437 = vunpack.c.l.b16 %v118
    %v438 = vunpack.c.h.b16 %v118
    %v439 = vunpack.c.l.b16 %v119
    %v440 = vunpack.c.l.b16 %v120
    %v441 = vunpack.c.h.b16 %v120
    %v442 = vunpack.c.l.b16 %v121
    %v443 = vunpack.c.h.b16 %v121
    %v444 = vunpack.c.l.b16 %v122
    %v445 = vunpack.c.h.b16 %v122
    %v446 = vunpack.c.l.b16 %v123
    %v447 = vunpack.c.h.b16 %v123
    %v448 = vunpack.c.l.b16 %v124
    %v449 = vunpack.c.h.b16 %v124
    %v450 = vunpack.c.l.b16 %v125
    %v451 = vunpack.c.h.b16 %v125
    %v452 = vunpack.c.l.b16 %v126
    %v453 = vunpack.c.h.b16 %v126
    %v454 = vunpack.c.l.b16 %v127
    %v455 = vunpack.c.h.b16 %v127
    %v456 = vunpack.c.l.b16 %v128
    %v457 = vunpack.c.l.b16 %v129
    %v458 = vunpack.c.h.b16 %v129
    %v459 = vunpack.c.l.b16 %v130
    %v460 = vunpack.c.h.b16 %v130
    %v461 = vunpack.c.l.b16 %v131
    %v462 = vunpack.c.h.b16 %v131
    %v463 = vunpack.c.l.b16 %v132
    %v464 = vunpack.c.h.b16 %v132
    %v465 = vunpack.c.l.b16 %v133
    %v466 = vunpack.c.h.b16 %v133
    %v467 = vunpack.c.l.b16 %v134
    %v468 = vunpack.c.h.b16 %v134
    %v469 = vunpack.c.l.b16 %v135
    %v470 = vunpack.c.h.b16 %v135
    %v471 = vunpack.c.l.b16 %v136
    %v472 = vunpack.c.h.b16 %v136
    %v473 = vunpack.c.l.b16 %v137
    %v474 = vunpack.c.l.b16 %v138
    %v475 = vunpack.c.h.b16 %v138
    %v476 = vunpack.c.l.b16 %v139
    %v477 = vunpack.c.h.b16 %v139
    %v478 = vunpack.c.l.b16 %v140
    %v479 = vunpack.c.h.b16 %v140
    %v480 = vunpack.c.l.b16 %v141
    %v481 = vunpack.c.h.b16 %v141
    %v482 = vunpack.c.l.b16 %v142
    %v483 = vunpack.c.h.b16 %v142
    %v484 = vunpack.c.l.b16 %v143
    %v485 = vunpack.c.h.b16 %v143
    %v486 = vunpack.c.l.b16 %v144
    %v487 = vunpack.c.h.b16 %v144
    %v488 = vunpack.c.l.b16 %v145
    %v489 = vunpack.c.h.b16 %v145
    %v490 = vunpack.c.l.b16 %v146
    %v491 = vunpack.c.l.b16 %v147
    %v492 = vunpack.c.h.b16 %v147
    %v493 = vunpack.c.l.b16 %v148
    %v494 = vunpack.c.h.b16 %v148
    %v495 = vunpack.c.l.b16 %v149
    %v496 = vunpack.c.h.b16 %v149
    %v497 = vunpack.c.l.b16 %v150
    %v498 = vunpack.c.h.b16 %v150
    %v499 = vunpack.c.l.b16 %v151
    %v500 = vunpack.c.h.b16 %v151
    %v501 = vunpack.c.l.b16 %v152
    %v502 = vunpack.c.h.b16 %v152
    %v503 = vunpack.c.l.b16 %v153
    %v504 = vunpack.c.h.b16 %v153
    %v505 = vunpack.c.l.b16 %v154
    %v506 = vunpack.c.h.b16 %v154
    %v507 = vunpack.c.l.b16 %v155
    %v508 = vunpack.c.l.b16 %v156
    %v509 = vunpack.c.h.b16 %v156
    %v510 = vunpack.c.l.b16 %v157
    %v511 = vunpack.c.h.b16 %v157
    %v512 = vunpack.c.l.b16 %v158
    %v513 = vunpack.c.h.b16 %v158
    %v514 = vunpack.c.l.b16 %v159
    %v515 = vunpack.c.h.b16 %v159
    %v516 = vunpack.c.l.b16 %v160
    %v517 = vunpack.c.h.b16 %v160
    %v518 = vunpack.c.l.b16 %v161
    %v519 = vunpack.c.h.b16 %v161
    %v520 = vunpack.c.l.b16 %v162
    %v521 = vunpack.c.h.b16 %v162
    %v522 = vunpack.c.l.b16 %v163
    %v523 = vunpack.c.h.b16 %v163
    %v524 = vunpack.c.l.b16 %v164
    %v525 = vunpack.c.l.b16 %v165
    %v526 = vunpack.c.h.b16 %v165
    %v527 = vunpack.c.l.b16 %v166
    %v528 = vunpack.c.h.b16 %v166
    %v529 = vunpack.c.l.b16 %v167
    %v530 = vunpack.c.h.b16 %v167
    %v531 = vunpack.c.l.b16 %v168
    %v532 = vunpack.c.h.b16 %v168
    %v533 = vunpack.c.l.b16 %v169
    %v534 = vunpack.c.h.b16 %v169
    %v535 = vunpack.c.l.b16 %v170
    %v536 = vunpack.c.h.b16 %v170
    %v537 = vunpack.c.l.b16 %v171
    %v538 = vunpack.c.h.b16 %v171
    %v539 = vunpack.c.l.b16 %v172
    %v540 = vunpack.c.h.b16 %v172
    %v541 = vunpack.c.l.b16 %v173
    %v542 = vunpack.c.l.b16 %v174
    %v543 = vunpack.c.h.b16 %v174
    %v544 = vunpack.c.l.b16 %v175
    %v545 = vunpack.c.h.b16 %v175
    %v546 = vunpack.c.l.b16 %v176
    %v547 = vunpack.c.h.b16 %v176
    %v548 = vunpack.c.l.b16 %v177
    %v549 = vunpack.c.h.b16 %v177
    %v550 = vunpack.c.l.b16 %v178
    %v551 = vunpack.c.h.b16 %v178
    %v552 = vunpack.c.l.b16 %v179
    %v553 = vunpack.c.h.b16 %v179
    %v554 = vunpack.c.l.b16 %v180
    %v555 = vunpack.c.h.b16 %v180
    %v556 = vunpack.c.l.b16 %v181
    %v557 = vunpack.c.h.b16 %v181
    %v558 = vunpack.c.l.b16 %v182
    %v559 = vunpack.c.l.b16 %v183
    %v560 = vunpack.c.h.b16 %v183
    %v561 = vunpack.c.l.b16 %v184
    %v562 = vunpack.c.h.b16 %v184
    %v563 = vunpack.c.l.b16 %v185
    %v564 = vunpack.c.h.b16 %v185
    %v565 = vunpack.c.l.b16 %v186
    %v566 = vunpack.c.h.b16 %v186
    %v567 = vunpack.c.l.b16 %v187
    %v568 = vunpack.c.h.b16 %v187
    %v569 = vunpack.c.l.b16 %v188
    %v570 = vunpack.c.h.b16 %v188
    %v571 = vunpack.c.l.b16 %v189
    %v572 = vunpack.c.h.b16 %v189
    %v573 = vunpack.c.l.b16 %v190
    %v574 = vunpack.c.h.b16 %v190
    %v575 = vunpack.c.l.b16 %v191
    %v576 = vunpack.c.l.b16 %v192
    %v577 = vunpack.c.h.b16 %v192
    %v578 = vunpack.c.l.b16 %v193
    %v579 = vunpack.c.h.b16 %v193
    %v580 = vunpack.c.l.b16 %v194
    %v581 = vunpack.c.h.b16 %v194
    %v582 = vunpack.c.l.b16 %v195
    %v583 = vunpack.c.h.b16 %v195
    %v584 = vunpack.c.l.b16 %v196
    %v585 = vunpack.c.h.b16 %v196
    %v586 = vunpack.c.l.b16 %v197
    %v587 = vunpack.c.h.b16 %v197
    %v588 = vunpack.c.l.b16 %v198
    %v589 = vunpack.c.h.b16 %v198
    %v590 = vunpack.c.l.b16 %v199
    %v591 = vunpack.c.h.b16 %v199
    %v592 = vunpack.c.l.b16 %v200
    %v593 = vunpack.c.l.b16 %v201
    %v594 = vunpack.c.h.b16 %v201
    %v595 = vunpack.c.l.b16 %v202
    %v596 = vunpack.c.h.b16 %v202
    %v597 = vunpack.c.l.b16 %v203
    %v598 = vunpack.c.h.b16 %v203
    %v599 = vunpack.c.l.b16 %v204
    %v600 = vunpack.c.h.b16 %v204
    %v601 = vunpack.c.l.b16 %v205
    %v602 = vunpack.c.h.b16 %v205
    %v603 = vunpack.c.l.b16 %v206
    %v604 = vunpack.c.h.b16 %v206
    %v605 = vunpack.c.l.b16 %v207
    %v606 = vunpack.c.h.b16 %v207
    %v607 = vunpack.c.l.b16 %v208
    %v608 = vunpack.c.h.b16 %v208
    %v609 = vunpack.c.l.b16 %v209
    %v610 = vunpack.c.l.b16 %v210
    %v611 = vunpack.c.h.b16 %v210
    %v612 = vunpack.c.l.b16 %v211
    %v613 = vunpack.c.h.b16 %v211
    %v614 = vunpack.c.l.b16 %v212
    %v615 = vunpack.c.h.b16 %v212
    %v616 = vunpack.c.l.b16 %v213
    %v617 = vunpack.c.h.b16 %v213
    %v618 = vunpack.c.l.b16 %v214
    %v619 = vunpack.c.h.b16 %v214
    %v620 = vunpack.c.l.b16 %v215
    %v621 = vunpack.c.h.b16 %v215
    %v622 = vunpack.c.l.b16 %v216
    %v623 = vunpack.c.h.b16 %v216
    %v624 = vunpack.c.l.b16 %v217
    %v625 = vunpack.c.h.b16 %v217
    %v626 = vunpack.c.l.b16 %v218
    %v627 = vunpack.c.l.b16 %v219
    %v628 = vunpack.c.h.b16 %v219
    %v629 = vunpack.c.l.b16 %v220
    %v630 = vunpack.c.h.b16 %v220
    %v631 = vunpack.c.l.b16 %v221
    %v632 = vunpack.c.h.b16 %v221
    %v633 = vunpack.c.l.b16 %v222
    %v634 = vunpack.c.h.b16 %v222
    %v635 = vunpack.c.l.b16 %v223
    %v636 = vunpack.c.h.b16 %v223
    %v637 = vunpack.c.l.b16 %v224
    %v638 = vunpack.c.h.b16 %v224
    %v639 = vunpack.c.l.b16 %v225
    %v640 = vunpack.c.h.b16 %v225
    %v641 = vunpack.c.l.b16 %v226
    %v642 = vunpack.c.h.b16 %v226
    %v643 = vunpack.c.l.b16 %v227
    %v644 = vpack.c.b16 %v389, %v372
    %v645 = vpack.c.b16 %v390, %v373
    %v646 = vpack.c.b16 %v391, %v374
    %v647 = vpack.c.b16 %v392, %v375
    %v648 = vpack.c.b16 %v393, %v376
    %v649 = vpack.c.b16 %v394, %v377
    %v650 = vpack.c.b16 %v395, %v378
    %v651 = vpack.c.b16 %v396, %v379
    %v652 = vpack.c.b16 %v397, %v380
    %v653 = vpack.c.b16 %v398, %v381
    %v654 = vpack.c.b16 %v399, %v382
    %v655 = vpack.c.b16 %v400, %v383
    %v656 = vpack.c.b16 %v401, %v384
    %v657 = vpack.c.b16 %v402, %v385
    %v658 = vpack.c.b16 %v403, %v386
    %v659 = vpack.c.b16 %v404, %v387
    %v660 = vpack.c.b16 %v405, %v388
    %v661 = vpack.c.b16 %v423, %v406
    %v662 = vpack.c.b16 %v424, %v407
    %v663 = vpack.c.b16 %v425, %v408
    %v664 = vpack.c.b16 %v426, %v409
    %v665 = vpack.c.b16 %v427, %v410
    %v666 = vpack.c.b16 %v428, %v411
    %v667 = vpack.c.b16 %v429, %v412
    %v668 = vpack.c.b16 %v430, %v413
    %v669 = vpack.c.b16 %v431, %v414
    %v670 = vpack.c.b16 %v432, %v415
    %v671 = vpack.c.b16 %v433, %v416
    %v672 = vpack.c.b16 %v434, %v417
    %v673 = vpack.c.b16 %v435, %v418
    %v674 = vpack.c.b16 %v436, %v419
    %v675 = vpack.c.b16 %v437, %v420
    %v676 = vpack.c.b16 %v438, %v421
    %v677 = vpack.c.b16 %v439, %v422
    %v678 = vpack.c.b16 %v457, %v440
    %v679 = vpack.c.b16 %v458, %v441
    %v680 = vpack.c.b16 %v459, %v442
    %v681 = vpack.c.b16 %v460, %v443
    %v682 = vpack.c.b16 %v461, %v444
    %v683 = vpack.c.b16 %v462, %v445
    %v684 = vpack.c.b16 %v463, %v446
    %v685 = vpack.c.b16 %v464, %v447
    %v686 = vpack.c.b16 %v465, %v448
    %v687 = vpack.c.b16 %v466, %v449
    %v688 = vpack.c.b16 %v467, %v450
    %v689 = vpack.c.b16 %v468, %v451
    %v690 = vpack.c.b16 %v469, %v452
    %v691 = vpack.c.b16 %v470, %v453
    %v692 = vpack.c.b16 %v471, %v454
    %v693 = vpack.c.b16 %v472, %v455
    %v694 = vpack.c.b16 %v473, %v456
    %v695 = vpack.c.b16 %v491, %v474
    %v696 = vpack.c.b16 %v492, %v475
    %v697 = vpack.c.b16 %v493, %v476
    %v698 = vpack.c.b16 %v494, %v477
    %v699 = vpack.c.b16 %v495, %v478
    %v700 = vpack.c.b16 %v496, %v479
    %v701 = vpack.c.b16 %v497, %v480
    %v702 = vpack.c.b16 %v498, %v481
    %v703 = vpack.c.b16 %v499, %v482
    %v704 = vpack.c.b16 %v500, %v483
    %v705 = vpack.c.b16 %v501, %v484
    %v706 = vpack.c.b16 %v502, %v485
    %v707 = vpack.c.b16 %v503, %v486
    %v708 = vpack.c.b16 %v504, %v487
    %v709 = vpack.c.b16 %v505, %v488
    %v710 = vpack.c.b16 %v506, %v489
    %v711 = vpack.c.b16 %v507, %v490
    %v712 = vpack.c.b16 %v525, %v508
    %v713 = vpack.c.b16 %v526, %v509
    %v714 = vpack.c.b16 %v527, %v510
    %v715 = vpack.c.b16 %v528, %v511
    %v716 = vpack.c.b16 %v529, %v512
    %v717 = vpack.c.b16 %v530, %v513
    %v718 = vpack.c.b16 %v531, %v514
    %v719 = vpack.c.b16 %v532, %v515
    %v720 = vpack.c.b16 %v533, %v516
    %v721 = vpack.c.b16 %v534, %v517
    %v722 = vpack.c.b16 %v535, %v518
    %v723 = vpack.c.b16 %v536, %v519
    %v724 = vpack.c.b16 %v537, %v520
    %v725 = vpack.c.b16 %v538, %v521
    %v726 = vpack.c.b16 %v539, %v522
    %v727 = vpack.c.b16 %v540, %v523
    %v728 = vpack.c.b16 %v541, %v524
    %v729 = vpack.c.b16 %v559, %v542
    %v730 = vpack.c.b16 %v560, %v543
    %v731 = vpack.c.b16 %v561, %v544
    %v732 = vpack.c.b16 %v562, %v545
    %v733 = vpack.c.b16 %v563, %v546
    %v734 = vpack.c.b16 %v564, %v547
    %v735 = vpack.c.b16 %v565, %v548
    %v736 = vpack.c.b16 %v566, %v549
    %v737 = vpack.c.b16 %v567, %v550
    %v738 = vpack.c.b16 %v568, %v551
    %v739 = vpack.c.b16 %v569, %v552
    %v740 = vpack.c.b16 %v570, %v553
    %v741 = vpack.c.b16 %v571, %v554
    %v742 = vpack.c.b16 %v572, %v555
    %v743 = vpack.c.b16 %v573, %v556
    %v744 = vpack.c.b16 %v574, %v557
    %v745 = vpack.c.b16 %v575, %v558
    %v746 = vpack.c.b16 %v593, %v576
    %v747 = vpack.c.b16 %v594, %v577
    %v748 = vpack.c.b16 %v595, %v578
    %v749 = vpack.c.b16 %v596, %v579
    %v750 = vpack.c.b16 %v597, %v580
    %v751 = vpack.c.b16 %v598, %v581
    %v752 = vpack.c.b16 %v599, %v582
    %v753 = vpack.c.b16 %v600, %v583
    %v754 = vpack.c.b16 %v601, %v584
    %v755 = vpack.c.b16 %v602, %v585
    %v756 = vpack.c.b16 %v603, %v586
    %v757 = vpack.c.b16 %v604, %v587
    %v758 = vpack.c.b16 %v605, %v588
    %v759 = vpack.c.b16 %v606, %v589
    %v760 = vpack.c.b16 %v607, %v590
    %v761 = vpack.c.b16 %v608, %v591
    %v762 = vpack.c.b16 %v609, %v592
    %v763 = vpack.c.b16 %v627, %v610
    %v764 = vpack.c.b16 %v628, %v611
    %v765 = vpack.c.b16 %v629, %v612
    %v766 = vpack.c.b16 %v630, %v613
    %v767 = vpack.c.b16 %v631, %v614
    %v768 = vpack.c.b16 %v632, %v615
    %v769 = vpack.c.b16 %v633, %v616
    %v770 = vpack.c.b16 %v634, %v617
    %v771 = vpack.c.b16 %v635, %v618
    %v772 = vpack.c.b16 %v636, %v619
    %v773 = vpack.c.b16 %v637, %v620
    %v774 = vpack.c.b16 %v638, %v621
    %v775 = vpack.c.b16 %v639, %v622
    %v776 = vpack.c.b16 %v640, %v623
    %v777 = vpack.c.b16 %v641, %v624
    %v778 = vpack.c.b16 %v642, %v625
    %v779 = vpack.c.b16 %v643, %v626
    %916 = vmatprep.subr.bf16.mxu0 %v645
    %917 = vmatpush1.bf16.msra.mxu0 %v644
    %918 = vmatprep.subr.bf16.mxu0 %v662
    %919 = vmatpush1.bf16.msra.mxu0 %v661
    %920 = vmatprep.subr.bf16.mxu0 %v679
    %921 = vmatpush1.bf16.msra.mxu0 %v678
    %922 = vmatprep.subr.bf16.mxu0 %v696
    %923 = vmatpush1.bf16.msra.mxu0 %v695
    %924 = vmatprep.subr.bf16.mxu0 %v713
    %925 = vmatpush1.bf16.msra.mxu0 %v712
    %926 = vmatprep.subr.bf16.mxu0 %v730
    %927 = vmatpush1.bf16.msra.mxu0 %v729
    %928 = vmatprep.subr.bf16.mxu0 %v747
    %929 = vmatpush1.bf16.msra.mxu0 %v746
    %930 = vmatprep.subr.bf16.mxu0 %v764
    %931 = vmatpush1.bf16.msra.mxu0 %v763
    %932 = vmatprep.subr.bf16.mxu0 0
    %933 = vmatpush1.bf16.msra.mxu0 0
    %934 = vmatprep.subr.bf16.mxu0 0
    %935 = vmatpush1.bf16.msra.mxu0 0
    %936 = vmatprep.subr.bf16.mxu0 0
    %937 = vmatpush1.bf16.msra.mxu0 0
    %938 = vmatprep.subr.bf16.mxu0 0
    %939 = vmatpush1.bf16.msra.mxu0 0
    %940 = vmatprep.subr.bf16.mxu0 0
    %941 = vmatpush1.bf16.msra.mxu0 0
    %942 = vmatprep.subr.bf16.mxu0 0
    %943 = vmatpush1.bf16.msra.mxu0 0
    %944 = vmatprep.subr.bf16.mxu0 0
    %945 = vmatpush1.bf16.msra.mxu0 0
    %946 = vmatprep.subr.bf16.mxu0 0
    %947 = vmatpush1.bf16.msra.mxu0 0
    %948 = vmatprep.mubr.bf16.mxu0 0
    %949 = vmatmul.mubr.bf16.gmra.mrb[0].mxu0 %v78
    %v950 = vpop.f32.mrb[0].mxu0
    %v951 = vadd.f32 0.0, %v950
    %v952 = vpop.f32.mrb[0].mxu0
    %v953 = vadd.f32 0.0, %v952
    %v954 = vpop.f32.mrb[0].mxu0
    %v955 = vadd.f32 0.0, %v954
    %v956 = vpop.f32.mrb[0].mxu0
    %v957 = vadd.f32 0.0, %v956
    %958 = vdwg.mxu0
    %959 = vmatprep.subr.bf16.mxu0 %v647
    %960 = vmatpush1.bf16.msra.mxu0 %v646
    %961 = vmatprep.subr.bf16.mxu0 %v664
    %962 = vmatpush1.bf16.msra.mxu0 %v663
    %963 = vmatprep.subr.bf16.mxu0 %v681
    %964 = vmatpush1.bf16.msra.mxu0 %v680
    %965 = vmatprep.subr.bf16.mxu0 %v698
    %966 = vmatpush1.bf16.msra.mxu0 %v697
    %967 = vmatprep.subr.bf16.mxu0 %v715
    %968 = vmatpush1.bf16.msra.mxu0 %v714
    %969 = vmatprep.subr.bf16.mxu0 %v732
    %970 = vmatpush1.bf16.msra.mxu0 %v731
    %971 = vmatprep.subr.bf16.mxu0 %v749
    %972 = vmatpush1.bf16.msra.mxu0 %v748
    %973 = vmatprep.subr.bf16.mxu0 %v766
    %974 = vmatpush1.bf16.msra.mxu0 %v765
    %975 = vmatprep.subr.bf16.mxu0 0
    %976 = vmatpush1.bf16.msra.mxu0 0
    %977 = vmatprep.subr.bf16.mxu0 0
    %978 = vmatpush1.bf16.msra.mxu0 0
    %979 = vmatprep.subr.bf16.mxu0 0
    %980 = vmatpush1.bf16.msra.mxu0 0
    %981 = vmatprep.subr.bf16.mxu0 0
    %982 = vmatpush1.bf16.msra.mxu0 0
    %983 = vmatprep.subr.bf16.mxu0 0
    %984 = vmatpush1.bf16.msra.mxu0 0
    %985 = vmatprep.subr.bf16.mxu0 0
    %986 = vmatpush1.bf16.msra.mxu0 0
    %987 = vmatprep.subr.bf16.mxu0 0
    %988 = vmatpush1.bf16.msra.mxu0 0
    %989 = vmatprep.subr.bf16.mxu0 0
    %990 = vmatpush1.bf16.msra.mxu0 0
    %991 = vmatprep.mubr.bf16.mxu0 0
    %992 = vmatmul.mubr.bf16.gmra.mrb[0].mxu0 %v78
    %v993 = vpop.f32.mrb[0].mxu0
    %v994 = vadd.f32 0.0, %v993
    %v995 = vpop.f32.mrb[0].mxu0
    %v996 = vadd.f32 0.0, %v995
    %v997 = vpop.f32.mrb[0].mxu0
    %v998 = vadd.f32 0.0, %v997
    %v999 = vpop.f32.mrb[0].mxu0
    %v1000 = vadd.f32 0.0, %v999
    %1001 = vdwg.mxu0
    %1002 = vmatprep.subr.bf16.mxu0 %v649
    %1003 = vmatpush1.bf16.msra.mxu0 %v648
    %1004 = vmatprep.subr.bf16.mxu0 %v666
    %1005 = vmatpush1.bf16.msra.mxu0 %v665
    %1006 = vmatprep.subr.bf16.mxu0 %v683
    %1007 = vmatpush1.bf16.msra.mxu0 %v682
    %1008 = vmatprep.subr.bf16.mxu0 %v700
    %1009 = vmatpush1.bf16.msra.mxu0 %v699
    %1010 = vmatprep.subr.bf16.mxu0 %v717
    %1011 = vmatpush1.bf16.msra.mxu0 %v716
    %1012 = vmatprep.subr.bf16.mxu0 %v734
    %1013 = vmatpush1.bf16.msra.mxu0 %v733
    %1014 = vmatprep.subr.bf16.mxu0 %v751
    %1015 = vmatpush1.bf16.msra.mxu0 %v750
    %1016 = vmatprep.subr.bf16.mxu0 %v768
    %1017 = vmatpush1.bf16.msra.mxu0 %v767
    %1018 = vmatprep.subr.bf16.mxu0 0
    %1019 = vmatpush1.bf16.msra.mxu0 0
    %1020 = vmatprep.subr.bf16.mxu0 0
    %1021 = vmatpush1.bf16.msra.mxu0 0
    %1022 = vmatprep.subr.bf16.mxu0 0
    %1023 = vmatpush1.bf16.msra.mxu0 0
    %1024 = vmatprep.subr.bf16.mxu0 0
    %1025 = vmatpush1.bf16.msra.mxu0 0
    %1026 = vmatprep.subr.bf16.mxu0 0
    %1027 = vmatpush1.bf16.msra.mxu0 0
    %1028 = vmatprep.subr.bf16.mxu0 0
    %1029 = vmatpush1.bf16.msra.mxu0 0
    %1030 = vmatprep.subr.bf16.mxu0 0
    %1031 = vmatpush1.bf16.msra.mxu0 0
    %1032 = vmatprep.subr.bf16.mxu0 0
    %1033 = vmatpush1.bf16.msra.mxu0 0
    %1034 = vmatprep.mubr.bf16.mxu0 0
    %1035 = vmatmul.mubr.bf16.gmra.mrb[0].mxu0 %v78
    %v1036 = vpop.f32.mrb[0].mxu0
    %v1037 = vadd.f32 0.0, %v1036
    %v1038 = vpop.f32.mrb[0].mxu0
    %v1039 = vadd.f32 0.0, %v1038
    %v1040 = vpop.f32.mrb[0].mxu0
    %v1041 = vadd.f32 0.0, %v1040
    %v1042 = vpop.f32.mrb[0].mxu0
    %v1043 = vadd.f32 0.0, %v1042
    %1044 = vdwg.mxu0
    %1045 = vmatprep.subr.bf16.mxu0 %v651
    %1046 = vmatpush1.bf16.msra.mxu0 %v650
    %1047 = vmatprep.subr.bf16.mxu0 %v668
    %1048 = vmatpush1.bf16.msra.mxu0 %v667
    %1049 = vmatprep.subr.bf16.mxu0 %v685
    %1050 = vmatpush1.bf16.msra.mxu0 %v684
    %1051 = vmatprep.subr.bf16.mxu0 %v702
    %1052 = vmatpush1.bf16.msra.mxu0 %v701
    %1053 = vmatprep.subr.bf16.mxu0 %v719
    %1054 = vmatpush1.bf16.msra.mxu0 %v718
    %1055 = vmatprep.subr.bf16.mxu0 %v736
    %1056 = vmatpush1.bf16.msra.mxu0 %v735
    %1057 = vmatprep.subr.bf16.mxu0 %v753
    %1058 = vmatpush1.bf16.msra.mxu0 %v752
    %1059 = vmatprep.subr.bf16.mxu0 %v770
    %1060 = vmatpush1.bf16.msra.mxu0 %v769
    %1061 = vmatprep.subr.bf16.mxu0 0
    %1062 = vmatpush1.bf16.msra.mxu0 0
    %1063 = vmatprep.subr.bf16.mxu0 0
    %1064 = vmatpush1.bf16.msra.mxu0 0
    %1065 = vmatprep.subr.bf16.mxu0 0
    %1066 = vmatpush1.bf16.msra.mxu0 0
    %1067 = vmatprep.subr.bf16.mxu0 0
    %1068 = vmatpush1.bf16.msra.mxu0 0
    %1069 = vmatprep.subr.bf16.mxu0 0
    %1070 = vmatpush1.bf16.msra.mxu0 0
    %1071 = vmatprep.subr.bf16.mxu0 0
    %1072 = vmatpush1.bf16.msra.mxu0 0
    %1073 = vmatprep.subr.bf16.mxu0 0
    %1074 = vmatpush1.bf16.msra.mxu0 0
    %1075 = vmatprep.subr.bf16.mxu0 0
    %1076 = vmatpush1.bf16.msra.mxu0 0
    %1077 = vmatprep.mubr.bf16.mxu0 0
    %1078 = vmatmul.mubr.bf16.gmra.mrb[0].mxu0 %v78
    %v1079 = vpop.f32.mrb[0].mxu0
    %v1080 = vadd.f32 0.0, %v1079
    %v1081 = vpop.f32.mrb[0].mxu0
    %v1082 = vadd.f32 0.0, %v1081
    %v1083 = vpop.f32.mrb[0].mxu0
    %v1084 = vadd.f32 0.0, %v1083
    %v1085 = vpop.f32.mrb[0].mxu0
    %v1086 = vadd.f32 0.0, %v1085
    %1087 = vdwg.mxu0
    %1088 = vmatprep.subr.bf16.mxu0 %v653
    %1089 = vmatpush1.bf16.msra.mxu0 %v652
    %1090 = vmatprep.subr.bf16.mxu0 %v670
    %1091 = vmatpush1.bf16.msra.mxu0 %v669
    %1092 = vmatprep.subr.bf16.mxu0 %v687
    %1093 = vmatpush1.bf16.msra.mxu0 %v686
    %1094 = vmatprep.subr.bf16.mxu0 %v704
    %1095 = vmatpush1.bf16.msra.mxu0 %v703
    %1096 = vmatprep.subr.bf16.mxu0 %v721
    %1097 = vmatpush1.bf16.msra.mxu0 %v720
    %1098 = vmatprep.subr.bf16.mxu0 %v738
    %1099 = vmatpush1.bf16.msra.mxu0 %v737
    %1100 = vmatprep.subr.bf16.mxu0 %v755
    %1101 = vmatpush1.bf16.msra.mxu0 %v754
    %1102 = vmatprep.subr.bf16.mxu0 %v772
    %1103 = vmatpush1.bf16.msra.mxu0 %v771
    %1104 = vmatprep.subr.bf16.mxu0 0
    %1105 = vmatpush1.bf16.msra.mxu0 0
    %1106 = vmatprep.subr.bf16.mxu0 0
    %1107 = vmatpush1.bf16.msra.mxu0 0
    %1108 = vmatprep.subr.bf16.mxu0 0
    %1109 = vmatpush1.bf16.msra.mxu0 0
    %1110 = vmatprep.subr.bf16.mxu0 0
    %1111 = vmatpush1.bf16.msra.mxu0 0
    %1112 = vmatprep.subr.bf16.mxu0 0
    %1113 = vmatpush1.bf16.msra.mxu0 0
    %1114 = vmatprep.subr.bf16.mxu0 0
    %1115 = vmatpush1.bf16.msra.mxu0 0
    %1116 = vmatprep.subr.bf16.mxu0 0
    %1117 = vmatpush1.bf16.msra.mxu0 0
    %1118 = vmatprep.subr.bf16.mxu0 0
    %1119 = vmatpush1.bf16.msra.mxu0 0
    %1120 = vmatprep.mubr.bf16.mxu0 0
    %1121 = vmatmul.mubr.bf16.gmra.mrb[0].mxu0 %v78
    %v1122 = vpop.f32.mrb[0].mxu0
    %v1123 = vadd.f32 0.0, %v1122
    %v1124 = vpop.f32.mrb[0].mxu0
    %v1125 = vadd.f32 0.0, %v1124
    %v1126 = vpop.f32.mrb[0].mxu0
    %v1127 = vadd.f32 0.0, %v1126
    %v1128 = vpop.f32.mrb[0].mxu0
    %v1129 = vadd.f32 0.0, %v1128
    %1130 = vdwg.mxu0
    %1131 = vmatprep.subr.bf16.mxu0 %v655
    %1132 = vmatpush1.bf16.msra.mxu0 %v654
    %1133 = vmatprep.subr.bf16.mxu0 %v672
    %1134 = vmatpush1.bf16.msra.mxu0 %v671
    %1135 = vmatprep.subr.bf16.mxu0 %v689
    %1136 = vmatpush1.bf16.msra.mxu0 %v688
    %1137 = vmatprep.subr.bf16.mxu0 %v706
    %1138 = vmatpush1.bf16.msra.mxu0 %v705
    %1139 = vmatprep.subr.bf16.mxu0 %v723
    %1140 = vmatpush1.bf16.msra.mxu0 %v722
    %1141 = vmatprep.subr.bf16.mxu0 %v740
    %1142 = vmatpush1.bf16.msra.mxu0 %v739
    %1143 = vmatprep.subr.bf16.mxu0 %v757
    %1144 = vmatpush1.bf16.msra.mxu0 %v756
    %1145 = vmatprep.subr.bf16.mxu0 %v774
    %1146 = vmatpush1.bf16.msra.mxu0 %v773
    %1147 = vmatprep.subr.bf16.mxu0 0
    %1148 = vmatpush1.bf16.msra.mxu0 0
    %1149 = vmatprep.subr.bf16.mxu0 0
    %1150 = vmatpush1.bf16.msra.mxu0 0
    %1151 = vmatprep.subr.bf16.mxu0 0
    %1152 = vmatpush1.bf16.msra.mxu0 0
    %1153 = vmatprep.subr.bf16.mxu0 0
    %1154 = vmatpush1.bf16.msra.mxu0 0
    %1155 = vmatprep.subr.bf16.mxu0 0
    %1156 = vmatpush1.bf16.msra.mxu0 0
    %1157 = vmatprep.subr.bf16.mxu0 0
    %1158 = vmatpush1.bf16.msra.mxu0 0
    %1159 = vmatprep.subr.bf16.mxu0 0
    %1160 = vmatpush1.bf16.msra.mxu0 0
    %1161 = vmatprep.subr.bf16.mxu0 0
    %1162 = vmatpush1.bf16.msra.mxu0 0
    %1163 = vmatprep.mubr.bf16.mxu0 0
    %1164 = vmatmul.mubr.bf16.gmra.mrb[0].mxu0 %v78
    %v1165 = vpop.f32.mrb[0].mxu0
    %v1166 = vadd.f32 0.0, %v1165
    %v1167 = vpop.f32.mrb[0].mxu0
    %v1168 = vadd.f32 0.0, %v1167
    %v1169 = vpop.f32.mrb[0].mxu0
    %v1170 = vadd.f32 0.0, %v1169
    %v1171 = vpop.f32.mrb[0].mxu0
    %v1172 = vadd.f32 0.0, %v1171
    %1173 = vdwg.mxu0
    %1174 = vmatprep.subr.bf16.mxu0 %v657
    %1175 = vmatpush1.bf16.msra.mxu0 %v656
    %1176 = vmatprep.subr.bf16.mxu0 %v674
    %1177 = vmatpush1.bf16.msra.mxu0 %v673
    %1178 = vmatprep.subr.bf16.mxu0 %v691
    %1179 = vmatpush1.bf16.msra.mxu0 %v690
    %1180 = vmatprep.subr.bf16.mxu0 %v708
    %1181 = vmatpush1.bf16.msra.mxu0 %v707
    %1182 = vmatprep.subr.bf16.mxu0 %v725
    %1183 = vmatpush1.bf16.msra.mxu0 %v724
    %1184 = vmatprep.subr.bf16.mxu0 %v742
    %1185 = vmatpush1.bf16.msra.mxu0 %v741
    %1186 = vmatprep.subr.bf16.mxu0 %v759
    %1187 = vmatpush1.bf16.msra.mxu0 %v758
    %1188 = vmatprep.subr.bf16.mxu0 %v776
    %1189 = vmatpush1.bf16.msra.mxu0 %v775
    %1190 = vmatprep.subr.bf16.mxu0 0
    %1191 = vmatpush1.bf16.msra.mxu0 0
    %1192 = vmatprep.subr.bf16.mxu0 0
    %1193 = vmatpush1.bf16.msra.mxu0 0
    %1194 = vmatprep.subr.bf16.mxu0 0
    %1195 = vmatpush1.bf16.msra.mxu0 0
    %1196 = vmatprep.subr.bf16.mxu0 0
    %1197 = vmatpush1.bf16.msra.mxu0 0
    %1198 = vmatprep.subr.bf16.mxu0 0
    %1199 = vmatpush1.bf16.msra.mxu0 0
    %1200 = vmatprep.subr.bf16.mxu0 0
    %1201 = vmatpush1.bf16.msra.mxu0 0
    %1202 = vmatprep.subr.bf16.mxu0 0
    %1203 = vmatpush1.bf16.msra.mxu0 0
    %1204 = vmatprep.subr.bf16.mxu0 0
    %1205 = vmatpush1.bf16.msra.mxu0 0
    %1206 = vmatprep.mubr.bf16.mxu0 0
    %1207 = vmatmul.mubr.bf16.gmra.mrb[0].mxu0 %v78
    %v1208 = vpop.f32.mrb[0].mxu0
    %v1209 = vadd.f32 0.0, %v1208
    %v1210 = vpop.f32.mrb[0].mxu0
    %v1211 = vadd.f32 0.0, %v1210
    %v1212 = vpop.f32.mrb[0].mxu0
    %v1213 = vadd.f32 0.0, %v1212
    %v1214 = vpop.f32.mrb[0].mxu0
    %v1215 = vadd.f32 0.0, %v1214
    %1216 = vdwg.mxu0
    %1217 = vmatprep.subr.bf16.mxu0 %v659
    %1218 = vmatpush1.bf16.msra.mxu0 %v658
    %1219 = vmatprep.subr.bf16.mxu0 %v676
    %1220 = vmatpush1.bf16.msra.mxu0 %v675
    %1221 = vmatprep.subr.bf16.mxu0 %v693
    %1222 = vmatpush1.bf16.msra.mxu0 %v692
    %1223 = vmatprep.subr.bf16.mxu0 %v710
    %1224 = vmatpush1.bf16.msra.mxu0 %v709
    %1225 = vmatprep.subr.bf16.mxu0 %v727
    %1226 = vmatpush1.bf16.msra.mxu0 %v726
    %1227 = vmatprep.subr.bf16.mxu0 %v744
    %1228 = vmatpush1.bf16.msra.mxu0 %v743
    %1229 = vmatprep.subr.bf16.mxu0 %v761
    %1230 = vmatpush1.bf16.msra.mxu0 %v760
    %1231 = vmatprep.subr.bf16.mxu0 %v778
    %1232 = vmatpush1.bf16.msra.mxu0 %v777
    %1233 = vmatprep.subr.bf16.mxu0 0
    %1234 = vmatpush1.bf16.msra.mxu0 0
    %1235 = vmatprep.subr.bf16.mxu0 0
    %1236 = vmatpush1.bf16.msra.mxu0 0
    %1237 = vmatprep.subr.bf16.mxu0 0
    %1238 = vmatpush1.bf16.msra.mxu0 0
    %1239 = vmatprep.subr.bf16.mxu0 0
    %1240 = vmatpush1.bf16.msra.mxu0 0
    %1241 = vmatprep.subr.bf16.mxu0 0
    %1242 = vmatpush1.bf16.msra.mxu0 0
    %1243 = vmatprep.subr.bf16.mxu0 0
    %1244 = vmatpush1.bf16.msra.mxu0 0
    %1245 = vmatprep.subr.bf16.mxu0 0
    %1246 = vmatpush1.bf16.msra.mxu0 0
    %1247 = vmatprep.subr.bf16.mxu0 0
    %1248 = vmatpush1.bf16.msra.mxu0 0
    %1249 = vmatprep.mubr.bf16.mxu0 0
    %1250 = vmatmul.mubr.bf16.gmra.mrb[0].mxu0 %v78
    %v1251 = vpop.f32.mrb[0].mxu0
    %v1252 = vadd.f32 0.0, %v1251
    %v1253 = vpop.f32.mrb[0].mxu0
    %v1254 = vadd.f32 0.0, %v1253
    %v1255 = vpop.f32.mrb[0].mxu0
    %v1256 = vadd.f32 0.0, %v1255
    %v1257 = vpop.f32.mrb[0].mxu0
    %v1258 = vadd.f32 0.0, %v1257
    %1259 = vdwg.mxu0
    %1260 = vmatprep.subr.bf16.mxu0 0
    %1261 = vmatpush1.bf16.msra.mxu0 %v660
    %1262 = vmatprep.subr.bf16.mxu0 0
    %1263 = vmatpush1.bf16.msra.mxu0 %v677
    %1264 = vmatprep.subr.bf16.mxu0 0
    %1265 = vmatpush1.bf16.msra.mxu0 %v694
    %1266 = vmatprep.subr.bf16.mxu0 0
    %1267 = vmatpush1.bf16.msra.mxu0 %v711
    %1268 = vmatprep.subr.bf16.mxu0 0
    %1269 = vmatpush1.bf16.msra.mxu0 %v728
    %1270 = vmatprep.subr.bf16.mxu0 0
    %1271 = vmatpush1.bf16.msra.mxu0 %v745
    %1272 = vmatprep.subr.bf16.mxu0 0
    %1273 = vmatpush1.bf16.msra.mxu0 %v762
    %1274 = vmatprep.subr.bf16.mxu0 0
    %1275 = vmatpush1.bf16.msra.mxu0 %v779
    %1276 = vmatprep.subr.bf16.mxu0 0
    %1277 = vmatpush1.bf16.msra.mxu0 0
    %1278 = vmatprep.subr.bf16.mxu0 0
    %1279 = vmatpush1.bf16.msra.mxu0 0
    %1280 = vmatprep.subr.bf16.mxu0 0
    %1281 = vmatpush1.bf16.msra.mxu0 0
    %1282 = vmatprep.subr.bf16.mxu0 0
    %1283 = vmatpush1.bf16.msra.mxu0 0
    %1284 = vmatprep.subr.bf16.mxu0 0
    %1285 = vmatpush1.bf16.msra.mxu0 0
    %1286 = vmatprep.subr.bf16.mxu0 0
    %1287 = vmatpush1.bf16.msra.mxu0 0
    %1288 = vmatprep.subr.bf16.mxu0 0
    %1289 = vmatpush1.bf16.msra.mxu0 0
    %1290 = vmatprep.subr.bf16.mxu0 0
    %1291 = vmatpush1.bf16.msra.mxu0 0
    %1292 = vmatprep.mubr.bf16.mxu0 0
    %1293 = vmatmul.mubr.bf16.gmra.mrb[0].mxu0 %v78
    %v1294 = vpop.f32.mrb[0].mxu0
    %v1295 = vadd.f32 0.0, %v1294
    %v1296 = vpop.f32.mrb[0].mxu0
    %v1297 = vpop.f32.mrb[0].mxu0
    %v1298 = vadd.f32 0.0, %v1297
    %v1299 = vpop.f32.mrb[0].mxu0
    %1300 = vdwg.mxu0
    %1301 = vmatprep.subr.bf16.mxu0 %v645
    %1302 = vmatpush1.bf16.msra.mxu0 %v644
    %1303 = vmatprep.subr.bf16.mxu0 %v662
    %1304 = vmatpush1.bf16.msra.mxu0 %v661
    %1305 = vmatprep.subr.bf16.mxu0 %v679
    %1306 = vmatpush1.bf16.msra.mxu0 %v678
    %1307 = vmatprep.subr.bf16.mxu0 %v696
    %1308 = vmatpush1.bf16.msra.mxu0 %v695
    %1309 = vmatprep.subr.bf16.mxu0 %v713
    %1310 = vmatpush1.bf16.msra.mxu0 %v712
    %1311 = vmatprep.subr.bf16.mxu0 %v730
    %1312 = vmatpush1.bf16.msra.mxu0 %v729
    %1313 = vmatprep.subr.bf16.mxu0 %v747
    %1314 = vmatpush1.bf16.msra.mxu0 %v746
    %1315 = vmatprep.subr.bf16.mxu0 %v764
    %1316 = vmatpush1.bf16.msra.mxu0 %v763
    %1317 = vmatprep.subr.bf16.mxu0 0
    %1318 = vmatpush1.bf16.msra.mxu0 0
    %1319 = vmatprep.subr.bf16.mxu0 0
    %1320 = vmatpush1.bf16.msra.mxu0 0
    %1321 = vmatprep.subr.bf16.mxu0 0
    %1322 = vmatpush1.bf16.msra.mxu0 0
    %1323 = vmatprep.subr.bf16.mxu0 0
    %1324 = vmatpush1.bf16.msra.mxu0 0
    %1325 = vmatprep.subr.bf16.mxu0 0
    %1326 = vmatpush1.bf16.msra.mxu0 0
    %1327 = vmatprep.subr.bf16.mxu0 0
    %1328 = vmatpush1.bf16.msra.mxu0 0
    %1329 = vmatprep.subr.bf16.mxu0 0
    %1330 = vmatpush1.bf16.msra.mxu0 0
    %1331 = vmatprep.subr.bf16.mxu0 0
    %1332 = vmatpush1.bf16.msra.mxu0 0
    %1333 = vmatprep.mubr.bf16.mxu0 0
    %1334 = vmatmul.mubr.bf16.gmra.mrb[0].mxu0 %v73
    %v1335 = vpop.f32.mrb[0].mxu0
    %v1336 = vadd.f32 %v951, %v1335
    %v1337 = vpop.f32.mrb[0].mxu0
    %v1338 = vadd.f32 %v953, %v1337
    %v1339 = vpop.f32.mrb[0].mxu0
    %v1340 = vadd.f32 %v955, %v1339
    %v1341 = vpop.f32.mrb[0].mxu0
    %v1342 = vadd.f32 %v957, %v1341
    %1343 = vdwg.mxu0
    %1344 = vmatprep.subr.bf16.mxu0 %v647
    %1345 = vmatpush1.bf16.msra.mxu0 %v646
    %1346 = vmatprep.subr.bf16.mxu0 %v664
    %1347 = vmatpush1.bf16.msra.mxu0 %v663
    %1348 = vmatprep.subr.bf16.mxu0 %v681
    %1349 = vmatpush1.bf16.msra.mxu0 %v680
    %1350 = vmatprep.subr.bf16.mxu0 %v698
    %1351 = vmatpush1.bf16.msra.mxu0 %v697
    %1352 = vmatprep.subr.bf16.mxu0 %v715
    %1353 = vmatpush1.bf16.msra.mxu0 %v714
    %1354 = vmatprep.subr.bf16.mxu0 %v732
    %1355 = vmatpush1.bf16.msra.mxu0 %v731
    %1356 = vmatprep.subr.bf16.mxu0 %v749
    %1357 = vmatpush1.bf16.msra.mxu0 %v748
    %1358 = vmatprep.subr.bf16.mxu0 %v766
    %1359 = vmatpush1.bf16.msra.mxu0 %v765
    %1360 = vmatprep.subr.bf16.mxu0 0
    %1361 = vmatpush1.bf16.msra.mxu0 0
    %1362 = vmatprep.subr.bf16.mxu0 0
    %1363 = vmatpush1.bf16.msra.mxu0 0
    %1364 = vmatprep.subr.bf16.mxu0 0
    %1365 = vmatpush1.bf16.msra.mxu0 0
    %1366 = vmatprep.subr.bf16.mxu0 0
    %1367 = vmatpush1.bf16.msra.mxu0 0
    %1368 = vmatprep.subr.bf16.mxu0 0
    %1369 = vmatpush1.bf16.msra.mxu0 0
    %1370 = vmatprep.subr.bf16.mxu0 0
    %1371 = vmatpush1.bf16.msra.mxu0 0
    %1372 = vmatprep.subr.bf16.mxu0 0
    %1373 = vmatpush1.bf16.msra.mxu0 0
    %1374 = vmatprep.subr.bf16.mxu0 0
    %1375 = vmatpush1.bf16.msra.mxu0 0
    %1376 = vmatprep.mubr.bf16.mxu0 0
    %1377 = vmatmul.mubr.bf16.gmra.mrb[0].mxu0 %v73
    %v1378 = vpop.f32.mrb[0].mxu0
    %v1379 = vadd.f32 %v994, %v1378
    %v1380 = vpop.f32.mrb[0].mxu0
    %v1381 = vadd.f32 %v996, %v1380
    %v1382 = vpop.f32.mrb[0].mxu0
    %v1383 = vadd.f32 %v998, %v1382
    %v1384 = vpop.f32.mrb[0].mxu0
    %v1385 = vadd.f32 %v1000, %v1384
    %1386 = vdwg.mxu0
    %1387 = vmatprep.subr.bf16.mxu0 %v649
    %1388 = vmatpush1.bf16.msra.mxu0 %v648
    %1389 = vmatprep.subr.bf16.mxu0 %v666
    %1390 = vmatpush1.bf16.msra.mxu0 %v665
    %1391 = vmatprep.subr.bf16.mxu0 %v683
    %1392 = vmatpush1.bf16.msra.mxu0 %v682
    %1393 = vmatprep.subr.bf16.mxu0 %v700
    %1394 = vmatpush1.bf16.msra.mxu0 %v699
    %1395 = vmatprep.subr.bf16.mxu0 %v717
    %1396 = vmatpush1.bf16.msra.mxu0 %v716
    %1397 = vmatprep.subr.bf16.mxu0 %v734
    %1398 = vmatpush1.bf16.msra.mxu0 %v733
    %1399 = vmatprep.subr.bf16.mxu0 %v751
    %1400 = vmatpush1.bf16.msra.mxu0 %v750
    %1401 = vmatprep.subr.bf16.mxu0 %v768
    %1402 = vmatpush1.bf16.msra.mxu0 %v767
    %1403 = vmatprep.subr.bf16.mxu0 0
    %1404 = vmatpush1.bf16.msra.mxu0 0
    %1405 = vmatprep.subr.bf16.mxu0 0
    %1406 = vmatpush1.bf16.msra.mxu0 0
    %1407 = vmatprep.subr.bf16.mxu0 0
    %1408 = vmatpush1.bf16.msra.mxu0 0
    %1409 = vmatprep.subr.bf16.mxu0 0
    %1410 = vmatpush1.bf16.msra.mxu0 0
    %1411 = vmatprep.subr.bf16.mxu0 0
    %1412 = vmatpush1.bf16.msra.mxu0 0
    %1413 = vmatprep.subr.bf16.mxu0 0
    %1414 = vmatpush1.bf16.msra.mxu0 0
    %1415 = vmatprep.subr.bf16.mxu0 0
    %1416 = vmatpush1.bf16.msra.mxu0 0
    %1417 = vmatprep.subr.bf16.mxu0 0
    %1418 = vmatpush1.bf16.msra.mxu0 0
    %1419 = vmatprep.mubr.bf16.mxu0 0
    %1420 = vmatmul.mubr.bf16.gmra.mrb[0].mxu0 %v73
    %v1421 = vpop.f32.mrb[0].mxu0
    %v1422 = vadd.f32 %v1037, %v1421
    %v1423 = vpop.f32.mrb[0].mxu0
    %v1424 = vadd.f32 %v1039, %v1423
    %v1425 = vpop.f32.mrb[0].mxu0
    %v1426 = vadd.f32 %v1041, %v1425
    %v1427 = vpop.f32.mrb[0].mxu0
    %v1428 = vadd.f32 %v1043, %v1427
    %1429 = vdwg.mxu0
    %1430 = vmatprep.subr.bf16.mxu0 %v651
    %1431 = vmatpush1.bf16.msra.mxu0 %v650
    %1432 = vmatprep.subr.bf16.mxu0 %v668
    %1433 = vmatpush1.bf16.msra.mxu0 %v667
    %1434 = vmatprep.subr.bf16.mxu0 %v685
    %1435 = vmatpush1.bf16.msra.mxu0 %v684
    %1436 = vmatprep.subr.bf16.mxu0 %v702
    %1437 = vmatpush1.bf16.msra.mxu0 %v701
    %1438 = vmatprep.subr.bf16.mxu0 %v719
    %1439 = vmatpush1.bf16.msra.mxu0 %v718
    %1440 = vmatprep.subr.bf16.mxu0 %v736
    %1441 = vmatpush1.bf16.msra.mxu0 %v735
    %1442 = vmatprep.subr.bf16.mxu0 %v753
    %1443 = vmatpush1.bf16.msra.mxu0 %v752
    %1444 = vmatprep.subr.bf16.mxu0 %v770
    %1445 = vmatpush1.bf16.msra.mxu0 %v769
    %1446 = vmatprep.subr.bf16.mxu0 0
    %1447 = vmatpush1.bf16.msra.mxu0 0
    %1448 = vmatprep.subr.bf16.mxu0 0
    %1449 = vmatpush1.bf16.msra.mxu0 0
    %1450 = vmatprep.subr.bf16.mxu0 0
    %1451 = vmatpush1.bf16.msra.mxu0 0
    %1452 = vmatprep.subr.bf16.mxu0 0
    %1453 = vmatpush1.bf16.msra.mxu0 0
    %1454 = vmatprep.subr.bf16.mxu0 0
    %1455 = vmatpush1.bf16.msra.mxu0 0
    %1456 = vmatprep.subr.bf16.mxu0 0
    %1457 = vmatpush1.bf16.msra.mxu0 0
    %1458 = vmatprep.subr.bf16.mxu0 0
    %1459 = vmatpush1.bf16.msra.mxu0 0
    %1460 = vmatprep.subr.bf16.mxu0 0
    %1461 = vmatpush1.bf16.msra.mxu0 0
    %1462 = vmatprep.mubr.bf16.mxu0 0
    %1463 = vmatmul.mubr.bf16.gmra.mrb[0].mxu0 %v73
    %v1464 = vpop.f32.mrb[0].mxu0
    %v1465 = vadd.f32 %v1080, %v1464
    %v1466 = vpop.f32.mrb[0].mxu0
    %v1467 = vadd.f32 %v1082, %v1466
    %v1468 = vpop.f32.mrb[0].mxu0
    %v1469 = vadd.f32 %v1084, %v1468
    %v1470 = vpop.f32.mrb[0].mxu0
    %v1471 = vadd.f32 %v1086, %v1470
    %1472 = vdwg.mxu0
    %1473 = vmatprep.subr.bf16.mxu0 %v653
    %1474 = vmatpush1.bf16.msra.mxu0 %v652
    %1475 = vmatprep.subr.bf16.mxu0 %v670
    %1476 = vmatpush1.bf16.msra.mxu0 %v669
    %1477 = vmatprep.subr.bf16.mxu0 %v687
    %1478 = vmatpush1.bf16.msra.mxu0 %v686
    %1479 = vmatprep.subr.bf16.mxu0 %v704
    %1480 = vmatpush1.bf16.msra.mxu0 %v703
    %1481 = vmatprep.subr.bf16.mxu0 %v721
    %1482 = vmatpush1.bf16.msra.mxu0 %v720
    %1483 = vmatprep.subr.bf16.mxu0 %v738
    %1484 = vmatpush1.bf16.msra.mxu0 %v737
    %1485 = vmatprep.subr.bf16.mxu0 %v755
    %1486 = vmatpush1.bf16.msra.mxu0 %v754
    %1487 = vmatprep.subr.bf16.mxu0 %v772
    %1488 = vmatpush1.bf16.msra.mxu0 %v771
    %1489 = vmatprep.subr.bf16.mxu0 0
    %1490 = vmatpush1.bf16.msra.mxu0 0
    %1491 = vmatprep.subr.bf16.mxu0 0
    %1492 = vmatpush1.bf16.msra.mxu0 0
    %1493 = vmatprep.subr.bf16.mxu0 0
    %1494 = vmatpush1.bf16.msra.mxu0 0
    %1495 = vmatprep.subr.bf16.mxu0 0
    %1496 = vmatpush1.bf16.msra.mxu0 0
    %1497 = vmatprep.subr.bf16.mxu0 0
    %1498 = vmatpush1.bf16.msra.mxu0 0
    %1499 = vmatprep.subr.bf16.mxu0 0
    %1500 = vmatpush1.bf16.msra.mxu0 0
    %1501 = vmatprep.subr.bf16.mxu0 0
    %1502 = vmatpush1.bf16.msra.mxu0 0
    %1503 = vmatprep.subr.bf16.mxu0 0
    %1504 = vmatpush1.bf16.msra.mxu0 0
    %1505 = vmatprep.mubr.bf16.mxu0 0
    %1506 = vmatmul.mubr.bf16.gmra.mrb[0].mxu0 %v73
    %v1507 = vpop.f32.mrb[0].mxu0
    %v1508 = vadd.f32 %v1123, %v1507
    %v1509 = vpop.f32.mrb[0].mxu0
    %v1510 = vadd.f32 %v1125, %v1509
    %v1511 = vpop.f32.mrb[0].mxu0
    %v1512 = vadd.f32 %v1127, %v1511
    %v1513 = vpop.f32.mrb[0].mxu0
    %v1514 = vadd.f32 %v1129, %v1513
    %1515 = vdwg.mxu0
    %1516 = vmatprep.subr.bf16.mxu0 %v655
    %1517 = vmatpush1.bf16.msra.mxu0 %v654
    %1518 = vmatprep.subr.bf16.mxu0 %v672
    %1519 = vmatpush1.bf16.msra.mxu0 %v671
    %1520 = vmatprep.subr.bf16.mxu0 %v689
    %1521 = vmatpush1.bf16.msra.mxu0 %v688
    %1522 = vmatprep.subr.bf16.mxu0 %v706
    %1523 = vmatpush1.bf16.msra.mxu0 %v705
    %1524 = vmatprep.subr.bf16.mxu0 %v723
    %1525 = vmatpush1.bf16.msra.mxu0 %v722
    %1526 = vmatprep.subr.bf16.mxu0 %v740
    %1527 = vmatpush1.bf16.msra.mxu0 %v739
    %1528 = vmatprep.subr.bf16.mxu0 %v757
    %1529 = vmatpush1.bf16.msra.mxu0 %v756
    %1530 = vmatprep.subr.bf16.mxu0 %v774
    %1531 = vmatpush1.bf16.msra.mxu0 %v773
    %1532 = vmatprep.subr.bf16.mxu0 0
    %1533 = vmatpush1.bf16.msra.mxu0 0
    %1534 = vmatprep.subr.bf16.mxu0 0
    %1535 = vmatpush1.bf16.msra.mxu0 0
    %1536 = vmatprep.subr.bf16.mxu0 0
    %1537 = vmatpush1.bf16.msra.mxu0 0
    %1538 = vmatprep.subr.bf16.mxu0 0
    %1539 = vmatpush1.bf16.msra.mxu0 0
    %1540 = vmatprep.subr.bf16.mxu0 0
    %1541 = vmatpush1.bf16.msra.mxu0 0
    %1542 = vmatprep.subr.bf16.mxu0 0
    %1543 = vmatpush1.bf16.msra.mxu0 0
    %1544 = vmatprep.subr.bf16.mxu0 0
    %1545 = vmatpush1.bf16.msra.mxu0 0
    %1546 = vmatprep.subr.bf16.mxu0 0
    %1547 = vmatpush1.bf16.msra.mxu0 0
    %1548 = vmatprep.mubr.bf16.mxu0 0
    %1549 = vmatmul.mubr.bf16.gmra.mrb[0].mxu0 %v73
    %v1550 = vpop.f32.mrb[0].mxu0
    %v1551 = vadd.f32 %v1166, %v1550
    %v1552 = vpop.f32.mrb[0].mxu0
    %v1553 = vadd.f32 %v1168, %v1552
    %v1554 = vpop.f32.mrb[0].mxu0
    %v1555 = vadd.f32 %v1170, %v1554
    %v1556 = vpop.f32.mrb[0].mxu0
    %v1557 = vadd.f32 %v1172, %v1556
    %1558 = vdwg.mxu0
    %1559 = vmatprep.subr.bf16.mxu0 %v657
    %1560 = vmatpush1.bf16.msra.mxu0 %v656
    %1561 = vmatprep.subr.bf16.mxu0 %v674
    %1562 = vmatpush1.bf16.msra.mxu0 %v673
    %1563 = vmatprep.subr.bf16.mxu0 %v691
    %1564 = vmatpush1.bf16.msra.mxu0 %v690
    %1565 = vmatprep.subr.bf16.mxu0 %v708
    %1566 = vmatpush1.bf16.msra.mxu0 %v707
    %1567 = vmatprep.subr.bf16.mxu0 %v725
    %1568 = vmatpush1.bf16.msra.mxu0 %v724
    %1569 = vmatprep.subr.bf16.mxu0 %v742
    %1570 = vmatpush1.bf16.msra.mxu0 %v741
    %1571 = vmatprep.subr.bf16.mxu0 %v759
    %1572 = vmatpush1.bf16.msra.mxu0 %v758
    %1573 = vmatprep.subr.bf16.mxu0 %v776
    %1574 = vmatpush1.bf16.msra.mxu0 %v775
    %1575 = vmatprep.subr.bf16.mxu0 0
    %1576 = vmatpush1.bf16.msra.mxu0 0
    %1577 = vmatprep.subr.bf16.mxu0 0
    %1578 = vmatpush1.bf16.msra.mxu0 0
    %1579 = vmatprep.subr.bf16.mxu0 0
    %1580 = vmatpush1.bf16.msra.mxu0 0
    %1581 = vmatprep.subr.bf16.mxu0 0
    %1582 = vmatpush1.bf16.msra.mxu0 0
    %1583 = vmatprep.subr.bf16.mxu0 0
    %1584 = vmatpush1.bf16.msra.mxu0 0
    %1585 = vmatprep.subr.bf16.mxu0 0
    %1586 = vmatpush1.bf16.msra.mxu0 0
    %1587 = vmatprep.subr.bf16.mxu0 0
    %1588 = vmatpush1.bf16.msra.mxu0 0
    %1589 = vmatprep.subr.bf16.mxu0 0
    %1590 = vmatpush1.bf16.msra.mxu0 0
    %1591 = vmatprep.mubr.bf16.mxu0 0
    %1592 = vmatmul.mubr.bf16.gmra.mrb[0].mxu0 %v73
    %v1593 = vpop.f32.mrb[0].mxu0
    %v1594 = vadd.f32 %v1209, %v1593
    %v1595 = vpop.f32.mrb[0].mxu0
    %v1596 = vadd.f32 %v1211, %v1595
    %v1597 = vpop.f32.mrb[0].mxu0
    %v1598 = vadd.f32 %v1213, %v1597
    %v1599 = vpop.f32.mrb[0].mxu0
    %v1600 = vadd.f32 %v1215, %v1599
    %1601 = vdwg.mxu0
    %1602 = vmatprep.subr.bf16.mxu0 %v659
    %1603 = vmatpush1.bf16.msra.mxu0 %v658
    %1604 = vmatprep.subr.bf16.mxu0 %v676
    %1605 = vmatpush1.bf16.msra.mxu0 %v675
    %1606 = vmatprep.subr.bf16.mxu0 %v693
    %1607 = vmatpush1.bf16.msra.mxu0 %v692
    %1608 = vmatprep.subr.bf16.mxu0 %v710
    %1609 = vmatpush1.bf16.msra.mxu0 %v709
    %1610 = vmatprep.subr.bf16.mxu0 %v727
    %1611 = vmatpush1.bf16.msra.mxu0 %v726
    %1612 = vmatprep.subr.bf16.mxu0 %v744
    %1613 = vmatpush1.bf16.msra.mxu0 %v743
    %1614 = vmatprep.subr.bf16.mxu0 %v761
    %1615 = vmatpush1.bf16.msra.mxu0 %v760
    %1616 = vmatprep.subr.bf16.mxu0 %v778
    %1617 = vmatpush1.bf16.msra.mxu0 %v777
    %1618 = vmatprep.subr.bf16.mxu0 0
    %1619 = vmatpush1.bf16.msra.mxu0 0
    %1620 = vmatprep.subr.bf16.mxu0 0
    %1621 = vmatpush1.bf16.msra.mxu0 0
    %1622 = vmatprep.subr.bf16.mxu0 0
    %1623 = vmatpush1.bf16.msra.mxu0 0
    %1624 = vmatprep.subr.bf16.mxu0 0
    %1625 = vmatpush1.bf16.msra.mxu0 0
    %1626 = vmatprep.subr.bf16.mxu0 0
    %1627 = vmatpush1.bf16.msra.mxu0 0
    %1628 = vmatprep.subr.bf16.mxu0 0
    %1629 = vmatpush1.bf16.msra.mxu0 0
    %1630 = vmatprep.subr.bf16.mxu0 0
    %1631 = vmatpush1.bf16.msra.mxu0 0
    %1632 = vmatprep.subr.bf16.mxu0 0
    %1633 = vmatpush1.bf16.msra.mxu0 0
    %1634 = vmatprep.mubr.bf16.mxu0 0
    %1635 = vmatmul.mubr.bf16.gmra.mrb[0].mxu0 %v73
    %v1636 = vpop.f32.mrb[0].mxu0
    %v1637 = vadd.f32 %v1252, %v1636
    %v1638 = vpop.f32.mrb[0].mxu0
    %v1639 = vadd.f32 %v1254, %v1638
    %v1640 = vpop.f32.mrb[0].mxu0
    %v1641 = vadd.f32 %v1256, %v1640
    %v1642 = vpop.f32.mrb[0].mxu0
    %v1643 = vadd.f32 %v1258, %v1642
    %1644 = vdwg.mxu0
    %1645 = vmatprep.subr.bf16.mxu0 0
    %1646 = vmatpush1.bf16.msra.mxu0 %v660
    %1647 = vmatprep.subr.bf16.mxu0 0
    %1648 = vmatpush1.bf16.msra.mxu0 %v677
    %1649 = vmatprep.subr.bf16.mxu0 0
    %1650 = vmatpush1.bf16.msra.mxu0 %v694
    %1651 = vmatprep.subr.bf16.mxu0 0
    %1652 = vmatpush1.bf16.msra.mxu0 %v711
    %1653 = vmatprep.subr.bf16.mxu0 0
    %1654 = vmatpush1.bf16.msra.mxu0 %v728
    %1655 = vmatprep.subr.bf16.mxu0 0
    %1656 = vmatpush1.bf16.msra.mxu0 %v745
    %1657 = vmatprep.subr.bf16.mxu0 0
    %1658 = vmatpush1.bf16.msra.mxu0 %v762
    %1659 = vmatprep.subr.bf16.mxu0 0
    %1660 = vmatpush1.bf16.msra.mxu0 %v779
    %1661 = vmatprep.subr.bf16.mxu0 0
    %1662 = vmatpush1.bf16.msra.mxu0 0
    %1663 = vmatprep.subr.bf16.mxu0 0
    %1664 = vmatpush1.bf16.msra.mxu0 0
    %1665 = vmatprep.subr.bf16.mxu0 0
    %1666 = vmatpush1.bf16.msra.mxu0 0
    %1667 = vmatprep.subr.bf16.mxu0 0
    %1668 = vmatpush1.bf16.msra.mxu0 0
    %1669 = vmatprep.subr.bf16.mxu0 0
    %1670 = vmatpush1.bf16.msra.mxu0 0
    %1671 = vmatprep.subr.bf16.mxu0 0
    %1672 = vmatpush1.bf16.msra.mxu0 0
    %1673 = vmatprep.subr.bf16.mxu0 0
    %1674 = vmatpush1.bf16.msra.mxu0 0
    %1675 = vmatprep.subr.bf16.mxu0 0
    %1676 = vmatpush1.bf16.msra.mxu0 0
    %1677 = vmatprep.mubr.bf16.mxu0 0
    %1678 = vmatmul.mubr.bf16.gmra.mrb[0].mxu0 %v73
    %v1679 = vpop.f32.mrb[0].mxu0
    %v1680 = vadd.f32 %v1295, %v1679
    %v1681 = vpop.f32.mrb[0].mxu0
    %v1682 = vpop.f32.mrb[0].mxu0
    %v1683 = vadd.f32 %v1298, %v1682
    %v1684 = vpop.f32.mrb[0].mxu0
    %1685 = vdwg.mxu0
    %1686 = vmatprep.subr.bf16.mxu0 %v645
    %1687 = vmatpush1.bf16.msra.mxu0 %v644
    %1688 = vmatprep.subr.bf16.mxu0 %v662
    %1689 = vmatpush1.bf16.msra.mxu0 %v661
    %1690 = vmatprep.subr.bf16.mxu0 %v679
    %1691 = vmatpush1.bf16.msra.mxu0 %v678
    %1692 = vmatprep.subr.bf16.mxu0 %v696
    %1693 = vmatpush1.bf16.msra.mxu0 %v695
    %1694 = vmatprep.subr.bf16.mxu0 %v713
    %1695 = vmatpush1.bf16.msra.mxu0 %v712
    %1696 = vmatprep.subr.bf16.mxu0 %v730
    %1697 = vmatpush1.bf16.msra.mxu0 %v729
    %1698 = vmatprep.subr.bf16.mxu0 %v747
    %1699 = vmatpush1.bf16.msra.mxu0 %v746
    %1700 = vmatprep.subr.bf16.mxu0 %v764
    %1701 = vmatpush1.bf16.msra.mxu0 %v763
    %1702 = vmatprep.subr.bf16.mxu0 0
    %1703 = vmatpush1.bf16.msra.mxu0 0
    %1704 = vmatprep.subr.bf16.mxu0 0
    %1705 = vmatpush1.bf16.msra.mxu0 0
    %1706 = vmatprep.subr.bf16.mxu0 0
    %1707 = vmatpush1.bf16.msra.mxu0 0
    %1708 = vmatprep.subr.bf16.mxu0 0
    %1709 = vmatpush1.bf16.msra.mxu0 0
    %1710 = vmatprep.subr.bf16.mxu0 0
    %1711 = vmatpush1.bf16.msra.mxu0 0
    %1712 = vmatprep.subr.bf16.mxu0 0
    %1713 = vmatpush1.bf16.msra.mxu0 0
    %1714 = vmatprep.subr.bf16.mxu0 0
    %1715 = vmatpush1.bf16.msra.mxu0 0
    %1716 = vmatprep.subr.bf16.mxu0 0
    %1717 = vmatpush1.bf16.msra.mxu0 0
    %1718 = vmatprep.mubr.bf16.mxu0 0
    %1719 = vmatmul.mubr.bf16.gmra.mrb[0].mxu0 %v83
    %v1720 = vpop.f32.mrb[0].mxu0
    %v1721 = vadd.f32 0.0, %v1720
    %v1722 = vpop.f32.mrb[0].mxu0
    %v1723 = vadd.f32 0.0, %v1722
    %v1724 = vpop.f32.mrb[0].mxu0
    %v1725 = vadd.f32 0.0, %v1724
    %v1726 = vpop.f32.mrb[0].mxu0
    %v1727 = vadd.f32 0.0, %v1726
    %1728 = vdwg.mxu0
    %1729 = vmatprep.subr.bf16.mxu0 %v647
    %1730 = vmatpush1.bf16.msra.mxu0 %v646
    %1731 = vmatprep.subr.bf16.mxu0 %v664
    %1732 = vmatpush1.bf16.msra.mxu0 %v663
    %1733 = vmatprep.subr.bf16.mxu0 %v681
    %1734 = vmatpush1.bf16.msra.mxu0 %v680
    %1735 = vmatprep.subr.bf16.mxu0 %v698
    %1736 = vmatpush1.bf16.msra.mxu0 %v697
    %1737 = vmatprep.subr.bf16.mxu0 %v715
    %1738 = vmatpush1.bf16.msra.mxu0 %v714
    %1739 = vmatprep.subr.bf16.mxu0 %v732
    %1740 = vmatpush1.bf16.msra.mxu0 %v731
    %1741 = vmatprep.subr.bf16.mxu0 %v749
    %1742 = vmatpush1.bf16.msra.mxu0 %v748
    %1743 = vmatprep.subr.bf16.mxu0 %v766
    %1744 = vmatpush1.bf16.msra.mxu0 %v765
    %1745 = vmatprep.subr.bf16.mxu0 0
    %1746 = vmatpush1.bf16.msra.mxu0 0
    %1747 = vmatprep.subr.bf16.mxu0 0
    %1748 = vmatpush1.bf16.msra.mxu0 0
    %1749 = vmatprep.subr.bf16.mxu0 0
    %1750 = vmatpush1.bf16.msra.mxu0 0
    %1751 = vmatprep.subr.bf16.mxu0 0
    %1752 = vmatpush1.bf16.msra.mxu0 0
    %1753 = vmatprep.subr.bf16.mxu0 0
    %1754 = vmatpush1.bf16.msra.mxu0 0
    %1755 = vmatprep.subr.bf16.mxu0 0
    %1756 = vmatpush1.bf16.msra.mxu0 0
    %1757 = vmatprep.subr.bf16.mxu0 0
    %1758 = vmatpush1.bf16.msra.mxu0 0
    %1759 = vmatprep.subr.bf16.mxu0 0
    %1760 = vmatpush1.bf16.msra.mxu0 0
    %1761 = vmatprep.mubr.bf16.mxu0 0
    %1762 = vmatmul.mubr.bf16.gmra.mrb[0].mxu0 %v83
    %v1763 = vpop.f32.mrb[0].mxu0
    %v1764 = vadd.f32 0.0, %v1763
    %v1765 = vpop.f32.mrb[0].mxu0
    %v1766 = vadd.f32 0.0, %v1765
    %v1767 = vpop.f32.mrb[0].mxu0
    %v1768 = vadd.f32 0.0, %v1767
    %v1769 = vpop.f32.mrb[0].mxu0
    %v1770 = vadd.f32 0.0, %v1769
    %1771 = vdwg.mxu0
    %1772 = vmatprep.subr.bf16.mxu0 %v649
    %1773 = vmatpush1.bf16.msra.mxu0 %v648
    %1774 = vmatprep.subr.bf16.mxu0 %v666
    %1775 = vmatpush1.bf16.msra.mxu0 %v665
    %1776 = vmatprep.subr.bf16.mxu0 %v683
    %1777 = vmatpush1.bf16.msra.mxu0 %v682
    %1778 = vmatprep.subr.bf16.mxu0 %v700
    %1779 = vmatpush1.bf16.msra.mxu0 %v699
    %1780 = vmatprep.subr.bf16.mxu0 %v717
    %1781 = vmatpush1.bf16.msra.mxu0 %v716
    %1782 = vmatprep.subr.bf16.mxu0 %v734
    %1783 = vmatpush1.bf16.msra.mxu0 %v733
    %1784 = vmatprep.subr.bf16.mxu0 %v751
    %1785 = vmatpush1.bf16.msra.mxu0 %v750
    %1786 = vmatprep.subr.bf16.mxu0 %v768
    %1787 = vmatpush1.bf16.msra.mxu0 %v767
    %1788 = vmatprep.subr.bf16.mxu0 0
    %1789 = vmatpush1.bf16.msra.mxu0 0
    %1790 = vmatprep.subr.bf16.mxu0 0
    %1791 = vmatpush1.bf16.msra.mxu0 0
    %1792 = vmatprep.subr.bf16.mxu0 0
    %1793 = vmatpush1.bf16.msra.mxu0 0
    %1794 = vmatprep.subr.bf16.mxu0 0
    %1795 = vmatpush1.bf16.msra.mxu0 0
    %1796 = vmatprep.subr.bf16.mxu0 0
    %1797 = vmatpush1.bf16.msra.mxu0 0
    %1798 = vmatprep.subr.bf16.mxu0 0
    %1799 = vmatpush1.bf16.msra.mxu0 0
    %1800 = vmatprep.subr.bf16.mxu0 0
    %1801 = vmatpush1.bf16.msra.mxu0 0
    %1802 = vmatprep.subr.bf16.mxu0 0
    %1803 = vmatpush1.bf16.msra.mxu0 0
    %1804 = vmatprep.mubr.bf16.mxu0 0
    %1805 = vmatmul.mubr.bf16.gmra.mrb[0].mxu0 %v83
    %v1806 = vpop.f32.mrb[0].mxu0
    %v1807 = vadd.f32 0.0, %v1806
    %v1808 = vpop.f32.mrb[0].mxu0
    %v1809 = vadd.f32 0.0, %v1808
    %v1810 = vpop.f32.mrb[0].mxu0
    %v1811 = vadd.f32 0.0, %v1810
    %v1812 = vpop.f32.mrb[0].mxu0
    %v1813 = vadd.f32 0.0, %v1812
    %1814 = vdwg.mxu0
    %1815 = vmatprep.subr.bf16.mxu0 %v651
    %1816 = vmatpush1.bf16.msra.mxu0 %v650
    %1817 = vmatprep.subr.bf16.mxu0 %v668
    %1818 = vmatpush1.bf16.msra.mxu0 %v667
    %1819 = vmatprep.subr.bf16.mxu0 %v685
    %1820 = vmatpush1.bf16.msra.mxu0 %v684
    %1821 = vmatprep.subr.bf16.mxu0 %v702
    %1822 = vmatpush1.bf16.msra.mxu0 %v701
    %1823 = vmatprep.subr.bf16.mxu0 %v719
    %1824 = vmatpush1.bf16.msra.mxu0 %v718
    %1825 = vmatprep.subr.bf16.mxu0 %v736
    %1826 = vmatpush1.bf16.msra.mxu0 %v735
    %1827 = vmatprep.subr.bf16.mxu0 %v753
    %1828 = vmatpush1.bf16.msra.mxu0 %v752
    %1829 = vmatprep.subr.bf16.mxu0 %v770
    %1830 = vmatpush1.bf16.msra.mxu0 %v769
    %1831 = vmatprep.subr.bf16.mxu0 0
    %1832 = vmatpush1.bf16.msra.mxu0 0
    %1833 = vmatprep.subr.bf16.mxu0 0
    %1834 = vmatpush1.bf16.msra.mxu0 0
    %1835 = vmatprep.subr.bf16.mxu0 0
    %1836 = vmatpush1.bf16.msra.mxu0 0
    %1837 = vmatprep.subr.bf16.mxu0 0
    %1838 = vmatpush1.bf16.msra.mxu0 0
    %1839 = vmatprep.subr.bf16.mxu0 0
    %1840 = vmatpush1.bf16.msra.mxu0 0
    %1841 = vmatprep.subr.bf16.mxu0 0
    %1842 = vmatpush1.bf16.msra.mxu0 0
    %1843 = vmatprep.subr.bf16.mxu0 0
    %1844 = vmatpush1.bf16.msra.mxu0 0
    %1845 = vmatprep.subr.bf16.mxu0 0
    %1846 = vmatpush1.bf16.msra.mxu0 0
    %1847 = vmatprep.mubr.bf16.mxu0 0
    %1848 = vmatmul.mubr.bf16.gmra.mrb[0].mxu0 %v83
    %v1849 = vpop.f32.mrb[0].mxu0
    %v1850 = vadd.f32 0.0, %v1849
    %v1851 = vpop.f32.mrb[0].mxu0
    %v1852 = vadd.f32 0.0, %v1851
    %v1853 = vpop.f32.mrb[0].mxu0
    %v1854 = vadd.f32 0.0, %v1853
    %v1855 = vpop.f32.mrb[0].mxu0
    %v1856 = vadd.f32 0.0, %v1855
    %1857 = vdwg.mxu0
    %1858 = vmatprep.subr.bf16.mxu0 %v653
    %1859 = vmatpush1.bf16.msra.mxu0 %v652
    %1860 = vmatprep.subr.bf16.mxu0 %v670
    %1861 = vmatpush1.bf16.msra.mxu0 %v669
    %1862 = vmatprep.subr.bf16.mxu0 %v687
    %1863 = vmatpush1.bf16.msra.mxu0 %v686
    %1864 = vmatprep.subr.bf16.mxu0 %v704
    %1865 = vmatpush1.bf16.msra.mxu0 %v703
    %1866 = vmatprep.subr.bf16.mxu0 %v721
    %1867 = vmatpush1.bf16.msra.mxu0 %v720
    %1868 = vmatprep.subr.bf16.mxu0 %v738
    %1869 = vmatpush1.bf16.msra.mxu0 %v737
    %1870 = vmatprep.subr.bf16.mxu0 %v755
    %1871 = vmatpush1.bf16.msra.mxu0 %v754
    %1872 = vmatprep.subr.bf16.mxu0 %v772
    %1873 = vmatpush1.bf16.msra.mxu0 %v771
    %1874 = vmatprep.subr.bf16.mxu0 0
    %1875 = vmatpush1.bf16.msra.mxu0 0
    %1876 = vmatprep.subr.bf16.mxu0 0
    %1877 = vmatpush1.bf16.msra.mxu0 0
    %1878 = vmatprep.subr.bf16.mxu0 0
    %1879 = vmatpush1.bf16.msra.mxu0 0
    %1880 = vmatprep.subr.bf16.mxu0 0
    %1881 = vmatpush1.bf16.msra.mxu0 0
    %1882 = vmatprep.subr.bf16.mxu0 0
    %1883 = vmatpush1.bf16.msra.mxu0 0
    %1884 = vmatprep.subr.bf16.mxu0 0
    %1885 = vmatpush1.bf16.msra.mxu0 0
    %1886 = vmatprep.subr.bf16.mxu0 0
    %1887 = vmatpush1.bf16.msra.mxu0 0
    %1888 = vmatprep.subr.bf16.mxu0 0
    %1889 = vmatpush1.bf16.msra.mxu0 0
    %1890 = vmatprep.mubr.bf16.mxu0 0
    %1891 = vmatmul.mubr.bf16.gmra.mrb[0].mxu0 %v83
    %v1892 = vpop.f32.mrb[0].mxu0
    %v1893 = vadd.f32 0.0, %v1892
    %v1894 = vpop.f32.mrb[0].mxu0
    %v1895 = vadd.f32 0.0, %v1894
    %v1896 = vpop.f32.mrb[0].mxu0
    %v1897 = vadd.f32 0.0, %v1896
    %v1898 = vpop.f32.mrb[0].mxu0
    %v1899 = vadd.f32 0.0, %v1898
    %1900 = vdwg.mxu0
    %1901 = vmatprep.subr.bf16.mxu0 %v655
    %1902 = vmatpush1.bf16.msra.mxu0 %v654
    %1903 = vmatprep.subr.bf16.mxu0 %v672
    %1904 = vmatpush1.bf16.msra.mxu0 %v671
    %1905 = vmatprep.subr.bf16.mxu0 %v689
    %1906 = vmatpush1.bf16.msra.mxu0 %v688
    %1907 = vmatprep.subr.bf16.mxu0 %v706
    %1908 = vmatpush1.bf16.msra.mxu0 %v705
    %1909 = vmatprep.subr.bf16.mxu0 %v723
    %1910 = vmatpush1.bf16.msra.mxu0 %v722
    %1911 = vmatprep.subr.bf16.mxu0 %v740
    %1912 = vmatpush1.bf16.msra.mxu0 %v739
    %1913 = vmatprep.subr.bf16.mxu0 %v757
    %1914 = vmatpush1.bf16.msra.mxu0 %v756
    %1915 = vmatprep.subr.bf16.mxu0 %v774
    %1916 = vmatpush1.bf16.msra.mxu0 %v773
    %1917 = vmatprep.subr.bf16.mxu0 0
    %1918 = vmatpush1.bf16.msra.mxu0 0
    %1919 = vmatprep.subr.bf16.mxu0 0
    %1920 = vmatpush1.bf16.msra.mxu0 0
    %1921 = vmatprep.subr.bf16.mxu0 0
    %1922 = vmatpush1.bf16.msra.mxu0 0
    %1923 = vmatprep.subr.bf16.mxu0 0
    %1924 = vmatpush1.bf16.msra.mxu0 0
    %1925 = vmatprep.subr.bf16.mxu0 0
    %1926 = vmatpush1.bf16.msra.mxu0 0
    %1927 = vmatprep.subr.bf16.mxu0 0
    %1928 = vmatpush1.bf16.msra.mxu0 0
    %1929 = vmatprep.subr.bf16.mxu0 0
    %1930 = vmatpush1.bf16.msra.mxu0 0
    %1931 = vmatprep.subr.bf16.mxu0 0
    %1932 = vmatpush1.bf16.msra.mxu0 0
    %1933 = vmatprep.mubr.bf16.mxu0 0
    %1934 = vmatmul.mubr.bf16.gmra.mrb[0].mxu0 %v83
    %v1935 = vpop.f32.mrb[0].mxu0
    %v1936 = vadd.f32 0.0, %v1935
    %v1937 = vpop.f32.mrb[0].mxu0
    %v1938 = vadd.f32 0.0, %v1937
    %v1939 = vpop.f32.mrb[0].mxu0
    %v1940 = vadd.f32 0.0, %v1939
    %v1941 = vpop.f32.mrb[0].mxu0
    %v1942 = vadd.f32 0.0, %v1941
    %1943 = vdwg.mxu0
    %1944 = vmatprep.subr.bf16.mxu0 %v657
    %1945 = vmatpush1.bf16.msra.mxu0 %v656
    %1946 = vmatprep.subr.bf16.mxu0 %v674
    %1947 = vmatpush1.bf16.msra.mxu0 %v673
    %1948 = vmatprep.subr.bf16.mxu0 %v691
    %1949 = vmatpush1.bf16.msra.mxu0 %v690
    %1950 = vmatprep.subr.bf16.mxu0 %v708
    %1951 = vmatpush1.bf16.msra.mxu0 %v707
    %1952 = vmatprep.subr.bf16.mxu0 %v725
    %1953 = vmatpush1.bf16.msra.mxu0 %v724
    %1954 = vmatprep.subr.bf16.mxu0 %v742
    %1955 = vmatpush1.bf16.msra.mxu0 %v741
    %1956 = vmatprep.subr.bf16.mxu0 %v759
    %1957 = vmatpush1.bf16.msra.mxu0 %v758
    %1958 = vmatprep.subr.bf16.mxu0 %v776
    %1959 = vmatpush1.bf16.msra.mxu0 %v775
    %1960 = vmatprep.subr.bf16.mxu0 0
    %1961 = vmatpush1.bf16.msra.mxu0 0
    %1962 = vmatprep.subr.bf16.mxu0 0
    %1963 = vmatpush1.bf16.msra.mxu0 0
    %1964 = vmatprep.subr.bf16.mxu0 0
    %1965 = vmatpush1.bf16.msra.mxu0 0
    %1966 = vmatprep.subr.bf16.mxu0 0
    %1967 = vmatpush1.bf16.msra.mxu0 0
    %1968 = vmatprep.subr.bf16.mxu0 0
    %1969 = vmatpush1.bf16.msra.mxu0 0
    %1970 = vmatprep.subr.bf16.mxu0 0
    %1971 = vmatpush1.bf16.msra.mxu0 0
    %1972 = vmatprep.subr.bf16.mxu0 0
    %1973 = vmatpush1.bf16.msra.mxu0 0
    %1974 = vmatprep.subr.bf16.mxu0 0
    %1975 = vmatpush1.bf16.msra.mxu0 0
    %1976 = vmatprep.mubr.bf16.mxu0 0
    %1977 = vmatmul.mubr.bf16.gmra.mrb[0].mxu0 %v83
    %v1978 = vpop.f32.mrb[0].mxu0
    %v1979 = vadd.f32 0.0, %v1978
    %v1980 = vpop.f32.mrb[0].mxu0
    %v1981 = vadd.f32 0.0, %v1980
    %v1982 = vpop.f32.mrb[0].mxu0
    %v1983 = vadd.f32 0.0, %v1982
    %v1984 = vpop.f32.mrb[0].mxu0
    %v1985 = vadd.f32 0.0, %v1984
    %1986 = vdwg.mxu0
    %1987 = vmatprep.subr.bf16.mxu0 %v659
    %1988 = vmatpush1.bf16.msra.mxu0 %v658
    %1989 = vmatprep.subr.bf16.mxu0 %v676
    %1990 = vmatpush1.bf16.msra.mxu0 %v675
    %1991 = vmatprep.subr.bf16.mxu0 %v693
    %1992 = vmatpush1.bf16.msra.mxu0 %v692
    %1993 = vmatprep.subr.bf16.mxu0 %v710
    %1994 = vmatpush1.bf16.msra.mxu0 %v709
    %1995 = vmatprep.subr.bf16.mxu0 %v727
    %1996 = vmatpush1.bf16.msra.mxu0 %v726
    %1997 = vmatprep.subr.bf16.mxu0 %v744
    %1998 = vmatpush1.bf16.msra.mxu0 %v743
    %1999 = vmatprep.subr.bf16.mxu0 %v761
    %2000 = vmatpush1.bf16.msra.mxu0 %v760
    %2001 = vmatprep.subr.bf16.mxu0 %v778
    %2002 = vmatpush1.bf16.msra.mxu0 %v777
    %2003 = vmatprep.subr.bf16.mxu0 0
    %2004 = vmatpush1.bf16.msra.mxu0 0
    %2005 = vmatprep.subr.bf16.mxu0 0
    %2006 = vmatpush1.bf16.msra.mxu0 0
    %2007 = vmatprep.subr.bf16.mxu0 0
    %2008 = vmatpush1.bf16.msra.mxu0 0
    %2009 = vmatprep.subr.bf16.mxu0 0
    %2010 = vmatpush1.bf16.msra.mxu0 0
    %2011 = vmatprep.subr.bf16.mxu0 0
    %2012 = vmatpush1.bf16.msra.mxu0 0
    %2013 = vmatprep.subr.bf16.mxu0 0
    %2014 = vmatpush1.bf16.msra.mxu0 0
    %2015 = vmatprep.subr.bf16.mxu0 0
    %2016 = vmatpush1.bf16.msra.mxu0 0
    %2017 = vmatprep.subr.bf16.mxu0 0
    %2018 = vmatpush1.bf16.msra.mxu0 0
    %2019 = vmatprep.mubr.bf16.mxu0 0
    %2020 = vmatmul.mubr.bf16.gmra.mrb[0].mxu0 %v83
    %v2021 = vpop.f32.mrb[0].mxu0
    %v2022 = vadd.f32 0.0, %v2021
    %v2023 = vpop.f32.mrb[0].mxu0
    %v2024 = vadd.f32 0.0, %v2023
    %v2025 = vpop.f32.mrb[0].mxu0
    %v2026 = vadd.f32 0.0, %v2025
    %v2027 = vpop.f32.mrb[0].mxu0
    %v2028 = vadd.f32 0.0, %v2027
    %2029 = vdwg.mxu0
    %2030 = vmatprep.subr.bf16.mxu0 0
    %2031 = vmatpush1.bf16.msra.mxu0 %v660
    %2032 = vmatprep.subr.bf16.mxu0 0
    %2033 = vmatpush1.bf16.msra.mxu0 %v677
    %2034 = vmatprep.subr.bf16.mxu0 0
    %2035 = vmatpush1.bf16.msra.mxu0 %v694
    %2036 = vmatprep.subr.bf16.mxu0 0
    %2037 = vmatpush1.bf16.msra.mxu0 %v711
    %2038 = vmatprep.subr.bf16.mxu0 0
    %2039 = vmatpush1.bf16.msra.mxu0 %v728
    %2040 = vmatprep.subr.bf16.mxu0 0
    %2041 = vmatpush1.bf16.msra.mxu0 %v745
    %2042 = vmatprep.subr.bf16.mxu0 0
    %2043 = vmatpush1.bf16.msra.mxu0 %v762
    %2044 = vmatprep.subr.bf16.mxu0 0
    %2045 = vmatpush1.bf16.msra.mxu0 %v779
    %2046 = vmatprep.subr.bf16.mxu0 0
    %2047 = vmatpush1.bf16.msra.mxu0 0
    %2048 = vmatprep.subr.bf16.mxu0 0
    %2049 = vmatpush1.bf16.msra.mxu0 0
    %2050 = vmatprep.subr.bf16.mxu0 0
    %2051 = vmatpush1.bf16.msra.mxu0 0
    %2052 = vmatprep.subr.bf16.mxu0 0
    %2053 = vmatpush1.bf16.msra.mxu0 0
    %2054 = vmatprep.subr.bf16.mxu0 0
    %2055 = vmatpush1.bf16.msra.mxu0 0
    %2056 = vmatprep.subr.bf16.mxu0 0
    %2057 = vmatpush1.bf16.msra.mxu0 0
    %2058 = vmatprep.subr.bf16.mxu0 0
    %2059 = vmatpush1.bf16.msra.mxu0 0
    %2060 = vmatprep.subr.bf16.mxu0 0
    %2061 = vmatpush1.bf16.msra.mxu0 0
    %2062 = vmatprep.mubr.bf16.mxu0 0
    %2063 = vmatmul.mubr.bf16.gmra.mrb[0].mxu0 %v83
    %v2064 = vpop.f32.mrb[0].mxu0
    %v2065 = vadd.f32 0.0, %v2064
    %v2066 = vpop.f32.mrb[0].mxu0
    %v2067 = vpop.f32.mrb[0].mxu0
    %v2068 = vadd.f32 0.0, %v2067
    %v2069 = vpop.f32.mrb[0].mxu0
    %2070 = vdwg.mxu0
    %v2071 = vadd.f32 %v1336, %v1721
    %v2072 = vadd.f32 %v1338, %v1723
    %v2073 = vadd.f32 %v1379, %v1764
    %v2074 = vadd.f32 %v1381, %v1766
    %v2075 = vadd.f32 %v1422, %v1807
    %v2076 = vadd.f32 %v1424, %v1809
    %v2077 = vadd.f32 %v1465, %v1850
    %v2078 = vadd.f32 %v1467, %v1852
    %v2079 = vadd.f32 %v1508, %v1893
    %v2080 = vadd.f32 %v1510, %v1895
    %v2081 = vadd.f32 %v1551, %v1936
    %v2082 = vadd.f32 %v1553, %v1938
    %v2083 = vadd.f32 %v1594, %v1979
    %v2084 = vadd.f32 %v1596, %v1981
    %v2085 = vadd.f32 %v1637, %v2022
    %v2086 = vadd.f32 %v1639, %v2024
    %v2087 = vadd.f32 %v1680, %v2065
    %v2088 = vadd.f32 %v1340, %v1725
    %v2089 = vadd.f32 %v1342, %v1727
    %v2090 = vadd.f32 %v1383, %v1768
    %v2091 = vadd.f32 %v1385, %v1770
    %v2092 = vadd.f32 %v1426, %v1811
    %v2093 = vadd.f32 %v1428, %v1813
    %v2094 = vadd.f32 %v1469, %v1854
    %v2095 = vadd.f32 %v1471, %v1856
    %v2096 = vadd.f32 %v1512, %v1897
    %v2097 = vadd.f32 %v1514, %v1899
    %v2098 = vadd.f32 %v1555, %v1940
    %v2099 = vadd.f32 %v1557, %v1942
    %v2100 = vadd.f32 %v1598, %v1983
    %v2101 = vadd.f32 %v1600, %v1985
    %v2102 = vadd.f32 %v1641, %v2026
    %v2103 = vadd.f32 %v1643, %v2028
    %v2104 = vadd.f32 %v1683, %v2068
    %v2105 = vld [vmem:[#allocation5] sm:$0xff]
    %v2106 = vld [vmem:[#allocation5 + $0x8] sm:$0xff]
    %v2107 = vld [vmem:[#allocation5 + $0x10] sm:$0x1]
    %v2111 = vlaneseq
    %v2112 = vshrl.u32 %v2111, 7
    %v2113 = vsub.s32 0, %v2112
    %v2114 = vrot.slane %v2105, %v2113
    %v2115 = vlaneseq
    %v2116 = vshrl.u32 %v2115, 7
    %v2117 = vsub.s32 1, %v2116
    %v2118 = vrot.slane %v2105, %v2117
    %v2119 = vlaneseq
    %v2120 = vshrl.u32 %v2119, 7
    %v2121 = vsub.s32 2, %v2120
    %v2122 = vrot.slane %v2105, %v2121
    %v2123 = vlaneseq
    %v2124 = vshrl.u32 %v2123, 7
    %v2125 = vsub.s32 3, %v2124
    %v2126 = vrot.slane %v2105, %v2125
    %v2127 = vlaneseq
    %v2128 = vshrl.u32 %v2127, 7
    %v2129 = vsub.s32 4, %v2128
    %v2130 = vrot.slane %v2105, %v2129
    %v2131 = vlaneseq
    %v2132 = vshrl.u32 %v2131, 7
    %v2133 = vsub.s32 5, %v2132
    %v2134 = vrot.slane %v2105, %v2133
    %v2135 = vlaneseq
    %v2136 = vshrl.u32 %v2135, 7
    %v2137 = vsub.s32 6, %v2136
    %v2138 = vrot.slane %v2105, %v2137
    %v2139 = vlaneseq
    %v2140 = vshrl.u32 %v2139, 7
    %v2141 = vsub.s32 7, %v2140
    %v2142 = vrot.slane %v2105, %v2141
    %v2143 = vlaneseq
    %v2144 = vshrl.u32 %v2143, 7
    %v2145 = vsub.s32 0, %v2144
    %v2146 = vrot.slane %v2106, %v2145
    %v2147 = vlaneseq
    %v2148 = vshrl.u32 %v2147, 7
    %v2149 = vsub.s32 1, %v2148
    %v2150 = vrot.slane %v2106, %v2149
    %v2151 = vlaneseq
    %v2152 = vshrl.u32 %v2151, 7
    %v2153 = vsub.s32 2, %v2152
    %v2154 = vrot.slane %v2106, %v2153
    %v2155 = vlaneseq
    %v2156 = vshrl.u32 %v2155, 7
    %v2157 = vsub.s32 3, %v2156
    %v2158 = vrot.slane %v2106, %v2157
    %v2159 = vlaneseq
    %v2160 = vshrl.u32 %v2159, 7
    %v2161 = vsub.s32 4, %v2160
    %v2162 = vrot.slane %v2106, %v2161
    %v2163 = vlaneseq
    %v2164 = vshrl.u32 %v2163, 7
    %v2165 = vsub.s32 5, %v2164
    %v2166 = vrot.slane %v2106, %v2165
    %v2167 = vlaneseq
    %v2168 = vshrl.u32 %v2167, 7
    %v2169 = vsub.s32 6, %v2168
    %v2170 = vrot.slane %v2106, %v2169
    %v2171 = vlaneseq
    %v2172 = vshrl.u32 %v2171, 7
    %v2173 = vsub.s32 7, %v2172
    %v2174 = vrot.slane %v2106, %v2173
    %v2175 = vlaneseq
    %v2176 = vshrl.u32 %v2175, 7
    %v2177 = vsub.s32 0, %v2176
    %v2178 = vrot.slane %v2107, %v2177
    %v2196 = vmul.f32 %v2071, %v2114
    %v2197 = vmul.f32 %v2072, %v2118
    %v2198 = vmul.f32 %v2073, %v2122
    %v2199 = vmul.f32 %v2074, %v2126
    %v2200 = vmul.f32 %v2075, %v2130
    %v2201 = vmul.f32 %v2076, %v2134
    %v2202 = vmul.f32 %v2077, %v2138
    %v2203 = vmul.f32 %v2078, %v2142
    %v2204 = vmul.f32 %v2079, %v2146
    %v2205 = vmul.f32 %v2080, %v2150
    %v2206 = vmul.f32 %v2081, %v2154
    %v2207 = vmul.f32 %v2082, %v2158
    %v2208 = vmul.f32 %v2083, %v2162
    %v2209 = vmul.f32 %v2084, %v2166
    %v2210 = vmul.f32 %v2085, %v2170
    %v2211 = vmul.f32 %v2086, %v2174
    %v2212 = vmul.f32 %v2087, %v2178
    %v2213 = vmul.f32 %v2088, %v2114
    %v2214 = vmul.f32 %v2089, %v2118
    %v2215 = vmul.f32 %v2090, %v2122
    %v2216 = vmul.f32 %v2091, %v2126
    %v2217 = vmul.f32 %v2092, %v2130
    %v2218 = vmul.f32 %v2093, %v2134
    %v2219 = vmul.f32 %v2094, %v2138
    %v2220 = vmul.f32 %v2095, %v2142
    %v2221 = vmul.f32 %v2096, %v2146
    %v2222 = vmul.f32 %v2097, %v2150
    %v2223 = vmul.f32 %v2098, %v2154
    %v2224 = vmul.f32 %v2099, %v2158
    %v2225 = vmul.f32 %v2100, %v2162
    %v2226 = vmul.f32 %v2101, %v2166
    %v2227 = vmul.f32 %v2102, %v2170
    %v2228 = vmul.f32 %v2103, %v2174
    %v2229 = vmul.f32 %v2104, %v2178
    %v2230 = vld [vmem:[#allocation7] sm:$0xff]
    %v2231 = vld [vmem:[#allocation7 + $0x8] sm:$0xff]
    %v2232 = vld [vmem:[#allocation7 + $0x10] sm:$0x1]
    %v2236 = vlaneseq
    %v2237 = vshrl.u32 %v2236, 7
    %v2238 = vsub.s32 0, %v2237
    %v2239 = vrot.slane %v2230, %v2238
    %v2240 = vlaneseq
    %v2241 = vshrl.u32 %v2240, 7
    %v2242 = vsub.s32 1, %v2241
    %v2243 = vrot.slane %v2230, %v2242
    %v2244 = vlaneseq
    %v2245 = vshrl.u32 %v2244, 7
    %v2246 = vsub.s32 2, %v2245
    %v2247 = vrot.slane %v2230, %v2246
    %v2248 = vlaneseq
    %v2249 = vshrl.u32 %v2248, 7
    %v2250 = vsub.s32 3, %v2249
    %v2251 = vrot.slane %v2230, %v2250
    %v2252 = vlaneseq
    %v2253 = vshrl.u32 %v2252, 7
    %v2254 = vsub.s32 4, %v2253
    %v2255 = vrot.slane %v2230, %v2254
    %v2256 = vlaneseq
    %v2257 = vshrl.u32 %v2256, 7
    %v2258 = vsub.s32 5, %v2257
    %v2259 = vrot.slane %v2230, %v2258
    %v2260 = vlaneseq
    %v2261 = vshrl.u32 %v2260, 7
    %v2262 = vsub.s32 6, %v2261
    %v2263 = vrot.slane %v2230, %v2262
    %v2264 = vlaneseq
    %v2265 = vshrl.u32 %v2264, 7
    %v2266 = vsub.s32 7, %v2265
    %v2267 = vrot.slane %v2230, %v2266
    %v2268 = vlaneseq
    %v2269 = vshrl.u32 %v2268, 7
    %v2270 = vsub.s32 0, %v2269
    %v2271 = vrot.slane %v2231, %v2270
    %v2272 = vlaneseq
    %v2273 = vshrl.u32 %v2272, 7
    %v2274 = vsub.s32 1, %v2273
    %v2275 = vrot.slane %v2231, %v2274
    %v2276 = vlaneseq
    %v2277 = vshrl.u32 %v2276, 7
    %v2278 = vsub.s32 2, %v2277
    %v2279 = vrot.slane %v2231, %v2278
    %v2280 = vlaneseq
    %v2281 = vshrl.u32 %v2280, 7
    %v2282 = vsub.s32 3, %v2281
    %v2283 = vrot.slane %v2231, %v2282
    %v2284 = vlaneseq
    %v2285 = vshrl.u32 %v2284, 7
    %v2286 = vsub.s32 4, %v2285
    %v2287 = vrot.slane %v2231, %v2286
    %v2288 = vlaneseq
    %v2289 = vshrl.u32 %v2288, 7
    %v2290 = vsub.s32 5, %v2289
    %v2291 = vrot.slane %v2231, %v2290
    %v2292 = vlaneseq
    %v2293 = vshrl.u32 %v2292, 7
    %v2294 = vsub.s32 6, %v2293
    %v2295 = vrot.slane %v2231, %v2294
    %v2296 = vlaneseq
    %v2297 = vshrl.u32 %v2296, 7
    %v2298 = vsub.s32 7, %v2297
    %v2299 = vrot.slane %v2231, %v2298
    %v2300 = vlaneseq
    %v2301 = vshrl.u32 %v2300, 7
    %v2302 = vsub.s32 0, %v2301
    %v2303 = vrot.slane %v2232, %v2302
    %v2321 = vadd.f32 %v2196, %v2239
    %v2322 = vadd.f32 %v2197, %v2243
    %v2323 = vadd.f32 %v2198, %v2247
    %v2324 = vadd.f32 %v2199, %v2251
    %v2325 = vadd.f32 %v2200, %v2255
    %v2326 = vadd.f32 %v2201, %v2259
    %v2327 = vadd.f32 %v2202, %v2263
    %v2328 = vadd.f32 %v2203, %v2267
    %v2329 = vadd.f32 %v2204, %v2271
    %v2330 = vadd.f32 %v2205, %v2275
    %v2331 = vadd.f32 %v2206, %v2279
    %v2332 = vadd.f32 %v2207, %v2283
    %v2333 = vadd.f32 %v2208, %v2287
    %v2334 = vadd.f32 %v2209, %v2291
    %v2335 = vadd.f32 %v2210, %v2295
    %v2336 = vadd.f32 %v2211, %v2299
    %v2337 = vadd.f32 %v2212, %v2303
    %v2338 = vadd.f32 %v2213, %v2239
    %v2339 = vadd.f32 %v2214, %v2243
    %v2340 = vadd.f32 %v2215, %v2247
    %v2341 = vadd.f32 %v2216, %v2251
    %v2342 = vadd.f32 %v2217, %v2255
    %v2343 = vadd.f32 %v2218, %v2259
    %v2344 = vadd.f32 %v2219, %v2263
    %v2345 = vadd.f32 %v2220, %v2267
    %v2346 = vadd.f32 %v2221, %v2271
    %v2347 = vadd.f32 %v2222, %v2275
    %v2348 = vadd.f32 %v2223, %v2279
    %v2349 = vadd.f32 %v2224, %v2283
    %v2350 = vadd.f32 %v2225, %v2287
    %v2351 = vadd.f32 %v2226, %v2291
    %v2352 = vadd.f32 %v2227, %v2295
    %v2353 = vadd.f32 %v2228, %v2299
    %v2354 = vadd.f32 %v2229, %v2303
    %v2355 = vand.u32 2147483647, %v2321
    %vm2356 = vcmp.le.f32.partialorder %v2355, 0.7853982
    %vm2357 = vcmp.lt.s32.totalorder %v2321, 0
    %v2358 = vand.u32 %v2321, 2139095040
    %v2359 = vshrl.u32 %v2358, 23
    %v2360 = vsub.s32 %v2359, 127
    %v2361 = vand.u32 2147483647, %v2321
    %v2362 = vand.u32 %v2361, 8388607
    %v2363 = vor.u32 %v2362, 8388608
    %v2364 = vsub.s32 0, %v2363
    %v2365 = vadd.s32 %v2360, 1
    %vm2366 = vcmp.gt.s32.totalorder %v2365, 0
    %v2367 = vsel %vm2366, %v2365, 0
    %v2368 = vshrl.u32 %v2367, 5
    %v2369 = vand.u32 %v2367, 31
    %v2370 = vsub.s32 32, %v2369
    %v2371 = vshrl.u32 683565275, %v2370
    %v2372 = vshll.u32 683565275, %v2369
    %v2373 = vshrl.u32 2475754826, %v2370
    %v2374 = vor.u32 %v2372, %v2373
    %v2375 = vshll.u32 2475754826, %v2369
    %v2376 = vshrl.u32 2131351028, %v2370
    %v2377 = vor.u32 %v2375, %v2376
    %v2378 = vshll.u32 2131351028, %v2369
    %v2379 = vshrl.u32 2102212464, %v2370
    %v2380 = vor.u32 %v2378, %v2379
    %v2381 = vshll.u32 2102212464, %v2369
    %v2382 = vshrl.u32 920167782, %v2370
    %v2383 = vor.u32 %v2381, %v2382
    %v2384 = vshll.u32 920167782, %v2369
    %v2385 = vshrl.u32 1326507024, %v2370
    %v2386 = vor.u32 %v2384, %v2385
    %vm2387 = vcmp.lt.s32.totalorder %v2368, 1
    %vm2388 = vcmp.lt.s32.totalorder %v2368, 2
    %vm2389 = vcmp.lt.s32.totalorder %v2368, 3
    %vm2390 = vcmp.lt.s32.totalorder %v2368, 4
    %v2391 = vsel %vm2387, %v2371, %v2374
    %v2392 = vsel %vm2390, %v2380, 2102212464
    %v2393 = vsel %vm2389, %v2377, %v2392
    %v2394 = vsel %vm2388, %v2391, %v2393
    %v2395 = vsel %vm2387, %v2374, %v2377
    %v2396 = vsel %vm2390, %v2383, 920167782
    %v2397 = vsel %vm2389, %v2380, %v2396
    %v2398 = vsel %vm2388, %v2395, %v2397
    %v2399 = vsel %vm2387, %v2377, %v2380
    %v2400 = vsel %vm2390, %v2386, 1326507024
    %v2401 = vsel %vm2389, %v2383, %v2400
    %v2402 = vsel %vm2388, %v2399, %v2401
    %v2403 = vshll.u32 %v2363, 8
    %v2404 = vmul.u32.u64.compose %v2403, %v2402
    %v2405 = vextract.low.u32 %v2404
    %v2406 = vextract.high.u32 %v2404
    %v2407 = vmul.u32.u64.compose %v2403, %v2398
    %v2408 = vextract.low.u32 %v2407
    %v2409 = vextract.high.u32 %v2407
    %v2410 = vmul.u32 %v2403, %v2394
    %v2411 = vadd.s32 %v2406, %v2408
    %vm2412 = vc.u32 %v2406, %v2408
    %v2413 = vadd.s32 %v2409, 1
    %v2414 = vsel %vm2412, %v2413, %v2409
    %v2415 = vadd.s32 %v2410, %v2414
    %v2416 = vadd.s32 %v2415, 536870912
    %v2417 = vshrl.u32 %v2416, 30
    %v2418 = vshll.u32 %v2417, 30
    %v2419 = vsub.s32 %v2415, %v2418
    %vm2420 = vcmp.lt.s32.totalorder %v2419, 0
    %v2421 = vsub.s32 0, %v2419
    %v2422 = vsel %vm2420, %v2421, %v2419
    %v2423 = vclz %v2422
    %v2424 = vsub.s32 %v2423, 2
    %vm2425 = vcmp.gt.s32.totalorder 0, %v2424
    %v2426 = vsel %vm2425, 0, %v2424
    %v2427 = vsub.s32 32, %v2426
    %v2428 = vshll.u32 %v2419, %v2426
    %v2429 = vshrl.u32 %v2411, %v2427
    %v2430 = vor.u32 %v2428, %v2429
    %v2431 = vsub.s32 4294967266, %v2426
    %v2432 = vadd.s32 %v2431, 127
    %v2433 = vshll.u32 %v2432, 23
    %v2434 = vor.u32 4788187, %v2433
    %v2435 = vand.u32 2147483647, %v2434
    %v2437 = vcvt.s32.f32 %v2430
    %v2438 = vmul.f32 %v2437, %v2435
    %v2439 = vxor.u32 %v2438, 2147483648
    %v2440 = vsel %vm2357, %v2439, %v2438
    %v2441 = vsub.s32 4, %v2417
    %v2442 = vsel %vm2357, %v2441, %v2417
    %v2443 = vsel %vm2356, %v2321, %v2440
    %v2444 = vsel %vm2356, 0, %v2442
    %v2445 = vcosq.f32.pop %v2443
    %v2446 = vsinq.f32.pop %v2443
    %vm2447 = vweird.f32 %v2321
    %v2448 = vadd.s32 %v2444, 3
    %v2449 = vand.u32 %v2448, 3
    %vm2450 = vcmp.lt.s32.totalorder %v2449, 2
    %vm2451 = vcmp.eq.s32.totalorder %v2449, 0
    %v2452 = vxor.u32 %v2446, 2147483648
    %v2453 = vsel %vm2451, %v2445, %v2452
    %vm2454 = vcmp.eq.s32.totalorder %v2449, 2
    %v2455 = vxor.u32 %v2445, 2147483648
    %v2456 = vsel %vm2454, %v2455, %v2446
    %v2457 = vsel %vm2450, %v2453, %v2456
    %v2458 = vsel %vm2447, nan, %v2457
    %v2459 = vand.u32 2147483647, %v2322
    %vm2460 = vcmp.le.f32.partialorder %v2459, 0.7853982
    %vm2461 = vcmp.lt.s32.totalorder %v2322, 0
    %v2462 = vand.u32 %v2322, 2139095040
    %v2463 = vshrl.u32 %v2462, 23
    %v2464 = vsub.s32 %v2463, 127
    %v2465 = vand.u32 2147483647, %v2322
    %v2466 = vand.u32 %v2465, 8388607
    %v2467 = vor.u32 %v2466, 8388608
    %v2468 = vsub.s32 0, %v2467
    %v2469 = vadd.s32 %v2464, 1
    %vm2470 = vcmp.gt.s32.totalorder %v2469, 0
    %v2471 = vsel %vm2470, %v2469, 0
    %v2472 = vshrl.u32 %v2471, 5
    %v2473 = vand.u32 %v2471, 31
    %v2474 = vsub.s32 32, %v2473
    %v2475 = vshrl.u32 683565275, %v2474
    %v2476 = vshll.u32 683565275, %v2473
    %v2477 = vshrl.u32 2475754826, %v2474
    %v2478 = vor.u32 %v2476, %v2477
    %v2479 = vshll.u32 2475754826, %v2473
    %v2480 = vshrl.u32 2131351028, %v2474
    %v2481 = vor.u32 %v2479, %v2480
    %v2482 = vshll.u32 2131351028, %v2473
    %v2483 = vshrl.u32 2102212464, %v2474
    %v2484 = vor.u32 %v2482, %v2483
    %v2485 = vshll.u32 2102212464, %v2473
    %v2486 = vshrl.u32 920167782, %v2474
    %v2487 = vor.u32 %v2485, %v2486
    %v2488 = vshll.u32 920167782, %v2473
    %v2489 = vshrl.u32 1326507024, %v2474
    %v2490 = vor.u32 %v2488, %v2489
    %vm2491 = vcmp.lt.s32.totalorder %v2472, 1
    %vm2492 = vcmp.lt.s32.totalorder %v2472, 2
    %vm2493 = vcmp.lt.s32.totalorder %v2472, 3
    %vm2494 = vcmp.lt.s32.totalorder %v2472, 4
    %v2495 = vsel %vm2491, %v2475, %v2478
    %v2496 = vsel %vm2494, %v2484, 2102212464
    %v2497 = vsel %vm2493, %v2481, %v2496
    %v2498 = vsel %vm2492, %v2495, %v2497
    %v2499 = vsel %vm2491, %v2478, %v2481
    %v2500 = vsel %vm2494, %v2487, 920167782
    %v2501 = vsel %vm2493, %v2484, %v2500
    %v2502 = vsel %vm2492, %v2499, %v2501
    %v2503 = vsel %vm2491, %v2481, %v2484
    %v2504 = vsel %vm2494, %v2490, 1326507024
    %v2505 = vsel %vm2493, %v2487, %v2504
    %v2506 = vsel %vm2492, %v2503, %v2505
    %v2507 = vshll.u32 %v2467, 8
    %v2508 = vmul.u32.u64.compose %v2507, %v2506
    %v2509 = vextract.low.u32 %v2508
    %v2510 = vextract.high.u32 %v2508
    %v2511 = vmul.u32.u64.compose %v2507, %v2502
    %v2512 = vextract.low.u32 %v2511
    %v2513 = vextract.high.u32 %v2511
    %v2514 = vmul.u32 %v2507, %v2498
    %v2515 = vadd.s32 %v2510, %v2512
    %vm2516 = vc.u32 %v2510, %v2512
    %v2517 = vadd.s32 %v2513, 1
    %v2518 = vsel %vm2516, %v2517, %v2513
    %v2519 = vadd.s32 %v2514, %v2518
    %v2520 = vadd.s32 %v2519, 536870912
    %v2521 = vshrl.u32 %v2520, 30
    %v2522 = vshll.u32 %v2521, 30
    %v2523 = vsub.s32 %v2519, %v2522
    %vm2524 = vcmp.lt.s32.totalorder %v2523, 0
    %v2525 = vsub.s32 0, %v2523
    %v2526 = vsel %vm2524, %v2525, %v2523
    %v2527 = vclz %v2526
    %v2528 = vsub.s32 %v2527, 2
    %vm2529 = vcmp.gt.s32.totalorder 0, %v2528
    %v2530 = vsel %vm2529, 0, %v2528
    %v2531 = vsub.s32 32, %v2530
    %v2532 = vshll.u32 %v2523, %v2530
    %v2533 = vshrl.u32 %v2515, %v2531
    %v2534 = vor.u32 %v2532, %v2533
    %v2535 = vsub.s32 4294967266, %v2530
    %v2536 = vadd.s32 %v2535, 127
    %v2537 = vshll.u32 %v2536, 23
    %v2538 = vor.u32 4788187, %v2537
    %v2539 = vand.u32 2147483647, %v2538
    %v2541 = vcvt.s32.f32 %v2534
    %v2542 = vmul.f32 %v2541, %v2539
    %v2543 = vxor.u32 %v2542, 2147483648
    %v2544 = vsel %vm2461, %v2543, %v2542
    %v2545 = vsub.s32 4, %v2521
    %v2546 = vsel %vm2461, %v2545, %v2521
    %v2547 = vsel %vm2460, %v2322, %v2544
    %v2548 = vsel %vm2460, 0, %v2546
    %v2549 = vcosq.f32.pop %v2547
    %v2550 = vsinq.f32.pop %v2547
    %vm2551 = vweird.f32 %v2322
    %v2552 = vadd.s32 %v2548, 3
    %v2553 = vand.u32 %v2552, 3
    %vm2554 = vcmp.lt.s32.totalorder %v2553, 2
    %vm2555 = vcmp.eq.s32.totalorder %v2553, 0
    %v2556 = vxor.u32 %v2550, 2147483648
    %v2557 = vsel %vm2555, %v2549, %v2556
    %vm2558 = vcmp.eq.s32.totalorder %v2553, 2
    %v2559 = vxor.u32 %v2549, 2147483648
    %v2560 = vsel %vm2558, %v2559, %v2550
    %v2561 = vsel %vm2554, %v2557, %v2560
    %v2562 = vsel %vm2551, nan, %v2561
    %v2563 = vand.u32 2147483647, %v2323
    %vm2564 = vcmp.le.f32.partialorder %v2563, 0.7853982
    %vm2565 = vcmp.lt.s32.totalorder %v2323, 0
    %v2566 = vand.u32 %v2323, 2139095040
    %v2567 = vshrl.u32 %v2566, 23
    %v2568 = vsub.s32 %v2567, 127
    %v2569 = vand.u32 2147483647, %v2323
    %v2570 = vand.u32 %v2569, 8388607
    %v2571 = vor.u32 %v2570, 8388608
    %v2572 = vsub.s32 0, %v2571
    %v2573 = vadd.s32 %v2568, 1
    %vm2574 = vcmp.gt.s32.totalorder %v2573, 0
    %v2575 = vsel %vm2574, %v2573, 0
    %v2576 = vshrl.u32 %v2575, 5
    %v2577 = vand.u32 %v2575, 31
    %v2578 = vsub.s32 32, %v2577
    %v2579 = vshrl.u32 683565275, %v2578
    %v2580 = vshll.u32 683565275, %v2577
    %v2581 = vshrl.u32 2475754826, %v2578
    %v2582 = vor.u32 %v2580, %v2581
    %v2583 = vshll.u32 2475754826, %v2577
    %v2584 = vshrl.u32 2131351028, %v2578
    %v2585 = vor.u32 %v2583, %v2584
    %v2586 = vshll.u32 2131351028, %v2577
    %v2587 = vshrl.u32 2102212464, %v2578
    %v2588 = vor.u32 %v2586, %v2587
    %v2589 = vshll.u32 2102212464, %v2577
    %v2590 = vshrl.u32 920167782, %v2578
    %v2591 = vor.u32 %v2589, %v2590
    %v2592 = vshll.u32 920167782, %v2577
    %v2593 = vshrl.u32 1326507024, %v2578
    %v2594 = vor.u32 %v2592, %v2593
    %vm2595 = vcmp.lt.s32.totalorder %v2576, 1
    %vm2596 = vcmp.lt.s32.totalorder %v2576, 2
    %vm2597 = vcmp.lt.s32.totalorder %v2576, 3
    %vm2598 = vcmp.lt.s32.totalorder %v2576, 4
    %v2599 = vsel %vm2595, %v2579, %v2582
    %v2600 = vsel %vm2598, %v2588, 2102212464
    %v2601 = vsel %vm2597, %v2585, %v2600
    %v2602 = vsel %vm2596, %v2599, %v2601
    %v2603 = vsel %vm2595, %v2582, %v2585
    %v2604 = vsel %vm2598, %v2591, 920167782
    %v2605 = vsel %vm2597, %v2588, %v2604
    %v2606 = vsel %vm2596, %v2603, %v2605
    %v2607 = vsel %vm2595, %v2585, %v2588
    %v2608 = vsel %vm2598, %v2594, 1326507024
    %v2609 = vsel %vm2597, %v2591, %v2608
    %v2610 = vsel %vm2596, %v2607, %v2609
    %v2611 = vshll.u32 %v2571, 8
    %v2612 = vmul.u32.u64.compose %v2611, %v2610
    %v2613 = vextract.low.u32 %v2612
    %v2614 = vextract.high.u32 %v2612
    %v2615 = vmul.u32.u64.compose %v2611, %v2606
    %v2616 = vextract.low.u32 %v2615
    %v2617 = vextract.high.u32 %v2615
    %v2618 = vmul.u32 %v2611, %v2602
    %v2619 = vadd.s32 %v2614, %v2616
    %vm2620 = vc.u32 %v2614, %v2616
    %v2621 = vadd.s32 %v2617, 1
    %v2622 = vsel %vm2620, %v2621, %v2617
    %v2623 = vadd.s32 %v2618, %v2622
    %v2624 = vadd.s32 %v2623, 536870912
    %v2625 = vshrl.u32 %v2624, 30
    %v2626 = vshll.u32 %v2625, 30
    %v2627 = vsub.s32 %v2623, %v2626
    %vm2628 = vcmp.lt.s32.totalorder %v2627, 0
    %v2629 = vsub.s32 0, %v2627
    %v2630 = vsel %vm2628, %v2629, %v2627
    %v2631 = vclz %v2630
    %v2632 = vsub.s32 %v2631, 2
    %vm2633 = vcmp.gt.s32.totalorder 0, %v2632
    %v2634 = vsel %vm2633, 0, %v2632
    %v2635 = vsub.s32 32, %v2634
    %v2636 = vshll.u32 %v2627, %v2634
    %v2637 = vshrl.u32 %v2619, %v2635
    %v2638 = vor.u32 %v2636, %v2637
    %v2639 = vsub.s32 4294967266, %v2634
    %v2640 = vadd.s32 %v2639, 127
    %v2641 = vshll.u32 %v2640, 23
    %v2642 = vor.u32 4788187, %v2641
    %v2643 = vand.u32 2147483647, %v2642
    %v2645 = vcvt.s32.f32 %v2638
    %v2646 = vmul.f32 %v2645, %v2643
    %v2647 = vxor.u32 %v2646, 2147483648
    %v2648 = vsel %vm2565, %v2647, %v2646
    %v2649 = vsub.s32 4, %v2625
    %v2650 = vsel %vm2565, %v2649, %v2625
    %v2651 = vsel %vm2564, %v2323, %v2648
    %v2652 = vsel %vm2564, 0, %v2650
    %v2653 = vcosq.f32.pop %v2651
    %v2654 = vsinq.f32.pop %v2651
    %vm2655 = vweird.f32 %v2323
    %v2656 = vadd.s32 %v2652, 3
    %v2657 = vand.u32 %v2656, 3
    %vm2658 = vcmp.lt.s32.totalorder %v2657, 2
    %vm2659 = vcmp.eq.s32.totalorder %v2657, 0
    %v2660 = vxor.u32 %v2654, 2147483648
    %v2661 = vsel %vm2659, %v2653, %v2660
    %vm2662 = vcmp.eq.s32.totalorder %v2657, 2
    %v2663 = vxor.u32 %v2653, 2147483648
    %v2664 = vsel %vm2662, %v2663, %v2654
    %v2665 = vsel %vm2658, %v2661, %v2664
    %v2666 = vsel %vm2655, nan, %v2665
    %v2667 = vand.u32 2147483647, %v2324
    %vm2668 = vcmp.le.f32.partialorder %v2667, 0.7853982
    %vm2669 = vcmp.lt.s32.totalorder %v2324, 0
    %v2670 = vand.u32 %v2324, 2139095040
    %v2671 = vshrl.u32 %v2670, 23
    %v2672 = vsub.s32 %v2671, 127
    %v2673 = vand.u32 2147483647, %v2324
    %v2674 = vand.u32 %v2673, 8388607
    %v2675 = vor.u32 %v2674, 8388608
    %v2676 = vsub.s32 0, %v2675
    %v2677 = vadd.s32 %v2672, 1
    %vm2678 = vcmp.gt.s32.totalorder %v2677, 0
    %v2679 = vsel %vm2678, %v2677, 0
    %v2680 = vshrl.u32 %v2679, 5
    %v2681 = vand.u32 %v2679, 31
    %v2682 = vsub.s32 32, %v2681
    %v2683 = vshrl.u32 683565275, %v2682
    %v2684 = vshll.u32 683565275, %v2681
    %v2685 = vshrl.u32 2475754826, %v2682
    %v2686 = vor.u32 %v2684, %v2685
    %v2687 = vshll.u32 2475754826, %v2681
    %v2688 = vshrl.u32 2131351028, %v2682
    %v2689 = vor.u32 %v2687, %v2688
    %v2690 = vshll.u32 2131351028, %v2681
    %v2691 = vshrl.u32 2102212464, %v2682
    %v2692 = vor.u32 %v2690, %v2691
    %v2693 = vshll.u32 2102212464, %v2681
    %v2694 = vshrl.u32 920167782, %v2682
    %v2695 = vor.u32 %v2693, %v2694
    %v2696 = vshll.u32 920167782, %v2681
    %v2697 = vshrl.u32 1326507024, %v2682
    %v2698 = vor.u32 %v2696, %v2697
    %vm2699 = vcmp.lt.s32.totalorder %v2680, 1
    %vm2700 = vcmp.lt.s32.totalorder %v2680, 2
    %vm2701 = vcmp.lt.s32.totalorder %v2680, 3
    %vm2702 = vcmp.lt.s32.totalorder %v2680, 4
    %v2703 = vsel %vm2699, %v2683, %v2686
    %v2704 = vsel %vm2702, %v2692, 2102212464
    %v2705 = vsel %vm2701, %v2689, %v2704
    %v2706 = vsel %vm2700, %v2703, %v2705
    %v2707 = vsel %vm2699, %v2686, %v2689
    %v2708 = vsel %vm2702, %v2695, 920167782
    %v2709 = vsel %vm2701, %v2692, %v2708
    %v2710 = vsel %vm2700, %v2707, %v2709
    %v2711 = vsel %vm2699, %v2689, %v2692
    %v2712 = vsel %vm2702, %v2698, 1326507024
    %v2713 = vsel %vm2701, %v2695, %v2712
    %v2714 = vsel %vm2700, %v2711, %v2713
    %v2715 = vshll.u32 %v2675, 8
    %v2716 = vmul.u32.u64.compose %v2715, %v2714
    %v2717 = vextract.low.u32 %v2716
    %v2718 = vextract.high.u32 %v2716
    %v2719 = vmul.u32.u64.compose %v2715, %v2710
    %v2720 = vextract.low.u32 %v2719
    %v2721 = vextract.high.u32 %v2719
    %v2722 = vmul.u32 %v2715, %v2706
    %v2723 = vadd.s32 %v2718, %v2720
    %vm2724 = vc.u32 %v2718, %v2720
    %v2725 = vadd.s32 %v2721, 1
    %v2726 = vsel %vm2724, %v2725, %v2721
    %v2727 = vadd.s32 %v2722, %v2726
    %v2728 = vadd.s32 %v2727, 536870912
    %v2729 = vshrl.u32 %v2728, 30
    %v2730 = vshll.u32 %v2729, 30
    %v2731 = vsub.s32 %v2727, %v2730
    %vm2732 = vcmp.lt.s32.totalorder %v2731, 0
    %v2733 = vsub.s32 0, %v2731
    %v2734 = vsel %vm2732, %v2733, %v2731
    %v2735 = vclz %v2734
    %v2736 = vsub.s32 %v2735, 2
    %vm2737 = vcmp.gt.s32.totalorder 0, %v2736
    %v2738 = vsel %vm2737, 0, %v2736
    %v2739 = vsub.s32 32, %v2738
    %v2740 = vshll.u32 %v2731, %v2738
    %v2741 = vshrl.u32 %v2723, %v2739
    %v2742 = vor.u32 %v2740, %v2741
    %v2743 = vsub.s32 4294967266, %v2738
    %v2744 = vadd.s32 %v2743, 127
    %v2745 = vshll.u32 %v2744, 23
    %v2746 = vor.u32 4788187, %v2745
    %v2747 = vand.u32 2147483647, %v2746
    %v2749 = vcvt.s32.f32 %v2742
    %v2750 = vmul.f32 %v2749, %v2747
    %v2751 = vxor.u32 %v2750, 2147483648
    %v2752 = vsel %vm2669, %v2751, %v2750
    %v2753 = vsub.s32 4, %v2729
    %v2754 = vsel %vm2669, %v2753, %v2729
    %v2755 = vsel %vm2668, %v2324, %v2752
    %v2756 = vsel %vm2668, 0, %v2754
    %v2757 = vcosq.f32.pop %v2755
    %v2758 = vsinq.f32.pop %v2755
    %vm2759 = vweird.f32 %v2324
    %v2760 = vadd.s32 %v2756, 3
    %v2761 = vand.u32 %v2760, 3
    %vm2762 = vcmp.lt.s32.totalorder %v2761, 2
    %vm2763 = vcmp.eq.s32.totalorder %v2761, 0
    %v2764 = vxor.u32 %v2758, 2147483648
    %v2765 = vsel %vm2763, %v2757, %v2764
    %vm2766 = vcmp.eq.s32.totalorder %v2761, 2
    %v2767 = vxor.u32 %v2757, 2147483648
    %v2768 = vsel %vm2766, %v2767, %v2758
    %v2769 = vsel %vm2762, %v2765, %v2768
    %v2770 = vsel %vm2759, nan, %v2769
    %v2771 = vand.u32 2147483647, %v2325
    %vm2772 = vcmp.le.f32.partialorder %v2771, 0.7853982
    %vm2773 = vcmp.lt.s32.totalorder %v2325, 0
    %v2774 = vand.u32 %v2325, 2139095040
    %v2775 = vshrl.u32 %v2774, 23
    %v2776 = vsub.s32 %v2775, 127
    %v2777 = vand.u32 2147483647, %v2325
    %v2778 = vand.u32 %v2777, 8388607
    %v2779 = vor.u32 %v2778, 8388608
    %v2780 = vsub.s32 0, %v2779
    %v2781 = vadd.s32 %v2776, 1
    %vm2782 = vcmp.gt.s32.totalorder %v2781, 0
    %v2783 = vsel %vm2782, %v2781, 0
    %v2784 = vshrl.u32 %v2783, 5
    %v2785 = vand.u32 %v2783, 31
    %v2786 = vsub.s32 32, %v2785
    %v2787 = vshrl.u32 683565275, %v2786
    %v2788 = vshll.u32 683565275, %v2785
    %v2789 = vshrl.u32 2475754826, %v2786
    %v2790 = vor.u32 %v2788, %v2789
    %v2791 = vshll.u32 2475754826, %v2785
    %v2792 = vshrl.u32 2131351028, %v2786
    %v2793 = vor.u32 %v2791, %v2792
    %v2794 = vshll.u32 2131351028, %v2785
    %v2795 = vshrl.u32 2102212464, %v2786
    %v2796 = vor.u32 %v2794, %v2795
    %v2797 = vshll.u32 2102212464, %v2785
    %v2798 = vshrl.u32 920167782, %v2786
    %v2799 = vor.u32 %v2797, %v2798
    %v2800 = vshll.u32 920167782, %v2785
    %v2801 = vshrl.u32 1326507024, %v2786
    %v2802 = vor.u32 %v2800, %v2801
    %vm2803 = vcmp.lt.s32.totalorder %v2784, 1
    %vm2804 = vcmp.lt.s32.totalorder %v2784, 2
    %vm2805 = vcmp.lt.s32.totalorder %v2784, 3
    %vm2806 = vcmp.lt.s32.totalorder %v2784, 4
    %v2807 = vsel %vm2803, %v2787, %v2790
    %v2808 = vsel %vm2806, %v2796, 2102212464
    %v2809 = vsel %vm2805, %v2793, %v2808
    %v2810 = vsel %vm2804, %v2807, %v2809
    %v2811 = vsel %vm2803, %v2790, %v2793
    %v2812 = vsel %vm2806, %v2799, 920167782
    %v2813 = vsel %vm2805, %v2796, %v2812
    %v2814 = vsel %vm2804, %v2811, %v2813
    %v2815 = vsel %vm2803, %v2793, %v2796
    %v2816 = vsel %vm2806, %v2802, 1326507024
    %v2817 = vsel %vm2805, %v2799, %v2816
    %v2818 = vsel %vm2804, %v2815, %v2817
    %v2819 = vshll.u32 %v2779, 8
    %v2820 = vmul.u32.u64.compose %v2819, %v2818
    %v2821 = vextract.low.u32 %v2820
    %v2822 = vextract.high.u32 %v2820
    %v2823 = vmul.u32.u64.compose %v2819, %v2814
    %v2824 = vextract.low.u32 %v2823
    %v2825 = vextract.high.u32 %v2823
    %v2826 = vmul.u32 %v2819, %v2810
    %v2827 = vadd.s32 %v2822, %v2824
    %vm2828 = vc.u32 %v2822, %v2824
    %v2829 = vadd.s32 %v2825, 1
    %v2830 = vsel %vm2828, %v2829, %v2825
    %v2831 = vadd.s32 %v2826, %v2830
    %v2832 = vadd.s32 %v2831, 536870912
    %v2833 = vshrl.u32 %v2832, 30
    %v2834 = vshll.u32 %v2833, 30
    %v2835 = vsub.s32 %v2831, %v2834
    %vm2836 = vcmp.lt.s32.totalorder %v2835, 0
    %v2837 = vsub.s32 0, %v2835
    %v2838 = vsel %vm2836, %v2837, %v2835
    %v2839 = vclz %v2838
    %v2840 = vsub.s32 %v2839, 2
    %vm2841 = vcmp.gt.s32.totalorder 0, %v2840
    %v2842 = vsel %vm2841, 0, %v2840
    %v2843 = vsub.s32 32, %v2842
    %v2844 = vshll.u32 %v2835, %v2842
    %v2845 = vshrl.u32 %v2827, %v2843
    %v2846 = vor.u32 %v2844, %v2845
    %v2847 = vsub.s32 4294967266, %v2842
    %v2848 = vadd.s32 %v2847, 127
    %v2849 = vshll.u32 %v2848, 23
    %v2850 = vor.u32 4788187, %v2849
    %v2851 = vand.u32 2147483647, %v2850
    %v2853 = vcvt.s32.f32 %v2846
    %v2854 = vmul.f32 %v2853, %v2851
    %v2855 = vxor.u32 %v2854, 2147483648
    %v2856 = vsel %vm2773, %v2855, %v2854
    %v2857 = vsub.s32 4, %v2833
    %v2858 = vsel %vm2773, %v2857, %v2833
    %v2859 = vsel %vm2772, %v2325, %v2856
    %v2860 = vsel %vm2772, 0, %v2858
    %v2861 = vcosq.f32.pop %v2859
    %v2862 = vsinq.f32.pop %v2859
    %vm2863 = vweird.f32 %v2325
    %v2864 = vadd.s32 %v2860, 3
    %v2865 = vand.u32 %v2864, 3
    %vm2866 = vcmp.lt.s32.totalorder %v2865, 2
    %vm2867 = vcmp.eq.s32.totalorder %v2865, 0
    %v2868 = vxor.u32 %v2862, 2147483648
    %v2869 = vsel %vm2867, %v2861, %v2868
    %vm2870 = vcmp.eq.s32.totalorder %v2865, 2
    %v2871 = vxor.u32 %v2861, 2147483648
    %v2872 = vsel %vm2870, %v2871, %v2862
    %v2873 = vsel %vm2866, %v2869, %v2872
    %v2874 = vsel %vm2863, nan, %v2873
    %v2875 = vand.u32 2147483647, %v2326
    %vm2876 = vcmp.le.f32.partialorder %v2875, 0.7853982
    %vm2877 = vcmp.lt.s32.totalorder %v2326, 0
    %v2878 = vand.u32 %v2326, 2139095040
    %v2879 = vshrl.u32 %v2878, 23
    %v2880 = vsub.s32 %v2879, 127
    %v2881 = vand.u32 2147483647, %v2326
    %v2882 = vand.u32 %v2881, 8388607
    %v2883 = vor.u32 %v2882, 8388608
    %v2884 = vsub.s32 0, %v2883
    %v2885 = vadd.s32 %v2880, 1
    %vm2886 = vcmp.gt.s32.totalorder %v2885, 0
    %v2887 = vsel %vm2886, %v2885, 0
    %v2888 = vshrl.u32 %v2887, 5
    %v2889 = vand.u32 %v2887, 31
    %v2890 = vsub.s32 32, %v2889
    %v2891 = vshrl.u32 683565275, %v2890
    %v2892 = vshll.u32 683565275, %v2889
    %v2893 = vshrl.u32 2475754826, %v2890
    %v2894 = vor.u32 %v2892, %v2893
    %v2895 = vshll.u32 2475754826, %v2889
    %v2896 = vshrl.u32 2131351028, %v2890
    %v2897 = vor.u32 %v2895, %v2896
    %v2898 = vshll.u32 2131351028, %v2889
    %v2899 = vshrl.u32 2102212464, %v2890
    %v2900 = vor.u32 %v2898, %v2899
    %v2901 = vshll.u32 2102212464, %v2889
    %v2902 = vshrl.u32 920167782, %v2890
    %v2903 = vor.u32 %v2901, %v2902
    %v2904 = vshll.u32 920167782, %v2889
    %v2905 = vshrl.u32 1326507024, %v2890
    %v2906 = vor.u32 %v2904, %v2905
    %vm2907 = vcmp.lt.s32.totalorder %v2888, 1
    %vm2908 = vcmp.lt.s32.totalorder %v2888, 2
    %vm2909 = vcmp.lt.s32.totalorder %v2888, 3
    %vm2910 = vcmp.lt.s32.totalorder %v2888, 4
    %v2911 = vsel %vm2907, %v2891, %v2894
    %v2912 = vsel %vm2910, %v2900, 2102212464
    %v2913 = vsel %vm2909, %v2897, %v2912
    %v2914 = vsel %vm2908, %v2911, %v2913
    %v2915 = vsel %vm2907, %v2894, %v2897
    %v2916 = vsel %vm2910, %v2903, 920167782
    %v2917 = vsel %vm2909, %v2900, %v2916
    %v2918 = vsel %vm2908, %v2915, %v2917
    %v2919 = vsel %vm2907, %v2897, %v2900
    %v2920 = vsel %vm2910, %v2906, 1326507024
    %v2921 = vsel %vm2909, %v2903, %v2920
    %v2922 = vsel %vm2908, %v2919, %v2921
    %v2923 = vshll.u32 %v2883, 8
    %v2924 = vmul.u32.u64.compose %v2923, %v2922
    %v2925 = vextract.low.u32 %v2924
    %v2926 = vextract.high.u32 %v2924
    %v2927 = vmul.u32.u64.compose %v2923, %v2918
    %v2928 = vextract.low.u32 %v2927
    %v2929 = vextract.high.u32 %v2927
    %v2930 = vmul.u32 %v2923, %v2914
    %v2931 = vadd.s32 %v2926, %v2928
    %vm2932 = vc.u32 %v2926, %v2928
    %v2933 = vadd.s32 %v2929, 1
    %v2934 = vsel %vm2932, %v2933, %v2929
    %v2935 = vadd.s32 %v2930, %v2934
    %v2936 = vadd.s32 %v2935, 536870912
    %v2937 = vshrl.u32 %v2936, 30
    %v2938 = vshll.u32 %v2937, 30
    %v2939 = vsub.s32 %v2935, %v2938
    %vm2940 = vcmp.lt.s32.totalorder %v2939, 0
    %v2941 = vsub.s32 0, %v2939
    %v2942 = vsel %vm2940, %v2941, %v2939
    %v2943 = vclz %v2942
    %v2944 = vsub.s32 %v2943, 2
    %vm2945 = vcmp.gt.s32.totalorder 0, %v2944
    %v2946 = vsel %vm2945, 0, %v2944
    %v2947 = vsub.s32 32, %v2946
    %v2948 = vshll.u32 %v2939, %v2946
    %v2949 = vshrl.u32 %v2931, %v2947
    %v2950 = vor.u32 %v2948, %v2949
    %v2951 = vsub.s32 4294967266, %v2946
    %v2952 = vadd.s32 %v2951, 127
    %v2953 = vshll.u32 %v2952, 23
    %v2954 = vor.u32 4788187, %v2953
    %v2955 = vand.u32 2147483647, %v2954
    %v2957 = vcvt.s32.f32 %v2950
    %v2958 = vmul.f32 %v2957, %v2955
    %v2959 = vxor.u32 %v2958, 2147483648
    %v2960 = vsel %vm2877, %v2959, %v2958
    %v2961 = vsub.s32 4, %v2937
    %v2962 = vsel %vm2877, %v2961, %v2937
    %v2963 = vsel %vm2876, %v2326, %v2960
    %v2964 = vsel %vm2876, 0, %v2962
    %v2965 = vcosq.f32.pop %v2963
    %v2966 = vsinq.f32.pop %v2963
    %vm2967 = vweird.f32 %v2326
    %v2968 = vadd.s32 %v2964, 3
    %v2969 = vand.u32 %v2968, 3
    %vm2970 = vcmp.lt.s32.totalorder %v2969, 2
    %vm2971 = vcmp.eq.s32.totalorder %v2969, 0
    %v2972 = vxor.u32 %v2966, 2147483648
    %v2973 = vsel %vm2971, %v2965, %v2972
    %vm2974 = vcmp.eq.s32.totalorder %v2969, 2
    %v2975 = vxor.u32 %v2965, 2147483648
    %v2976 = vsel %vm2974, %v2975, %v2966
    %v2977 = vsel %vm2970, %v2973, %v2976
    %v2978 = vsel %vm2967, nan, %v2977
    %v2979 = vand.u32 2147483647, %v2327
    %vm2980 = vcmp.le.f32.partialorder %v2979, 0.7853982
    %vm2981 = vcmp.lt.s32.totalorder %v2327, 0
    %v2982 = vand.u32 %v2327, 2139095040
    %v2983 = vshrl.u32 %v2982, 23
    %v2984 = vsub.s32 %v2983, 127
    %v2985 = vand.u32 2147483647, %v2327
    %v2986 = vand.u32 %v2985, 8388607
    %v2987 = vor.u32 %v2986, 8388608
    %v2988 = vsub.s32 0, %v2987
    %v2989 = vadd.s32 %v2984, 1
    %vm2990 = vcmp.gt.s32.totalorder %v2989, 0
    %v2991 = vsel %vm2990, %v2989, 0
    %v2992 = vshrl.u32 %v2991, 5
    %v2993 = vand.u32 %v2991, 31
    %v2994 = vsub.s32 32, %v2993
    %v2995 = vshrl.u32 683565275, %v2994
    %v2996 = vshll.u32 683565275, %v2993
    %v2997 = vshrl.u32 2475754826, %v2994
    %v2998 = vor.u32 %v2996, %v2997
    %v2999 = vshll.u32 2475754826, %v2993
    %v3000 = vshrl.u32 2131351028, %v2994
    %v3001 = vor.u32 %v2999, %v3000
    %v3002 = vshll.u32 2131351028, %v2993
    %v3003 = vshrl.u32 2102212464, %v2994
    %v3004 = vor.u32 %v3002, %v3003
    %v3005 = vshll.u32 2102212464, %v2993
    %v3006 = vshrl.u32 920167782, %v2994
    %v3007 = vor.u32 %v3005, %v3006
    %v3008 = vshll.u32 920167782, %v2993
    %v3009 = vshrl.u32 1326507024, %v2994
    %v3010 = vor.u32 %v3008, %v3009
    %vm3011 = vcmp.lt.s32.totalorder %v2992, 1
    %vm3012 = vcmp.lt.s32.totalorder %v2992, 2
    %vm3013 = vcmp.lt.s32.totalorder %v2992, 3
    %vm3014 = vcmp.lt.s32.totalorder %v2992, 4
    %v3015 = vsel %vm3011, %v2995, %v2998
    %v3016 = vsel %vm3014, %v3004, 2102212464
    %v3017 = vsel %vm3013, %v3001, %v3016
    %v3018 = vsel %vm3012, %v3015, %v3017
    %v3019 = vsel %vm3011, %v2998, %v3001
    %v3020 = vsel %vm3014, %v3007, 920167782
    %v3021 = vsel %vm3013, %v3004, %v3020
    %v3022 = vsel %vm3012, %v3019, %v3021
    %v3023 = vsel %vm3011, %v3001, %v3004
    %v3024 = vsel %vm3014, %v3010, 1326507024
    %v3025 = vsel %vm3013, %v3007, %v3024
    %v3026 = vsel %vm3012, %v3023, %v3025
    %v3027 = vshll.u32 %v2987, 8
    %v3028 = vmul.u32.u64.compose %v3027, %v3026
    %v3029 = vextract.low.u32 %v3028
    %v3030 = vextract.high.u32 %v3028
    %v3031 = vmul.u32.u64.compose %v3027, %v3022
    %v3032 = vextract.low.u32 %v3031
    %v3033 = vextract.high.u32 %v3031
    %v3034 = vmul.u32 %v3027, %v3018
    %v3035 = vadd.s32 %v3030, %v3032
    %vm3036 = vc.u32 %v3030, %v3032
    %v3037 = vadd.s32 %v3033, 1
    %v3038 = vsel %vm3036, %v3037, %v3033
    %v3039 = vadd.s32 %v3034, %v3038
    %v3040 = vadd.s32 %v3039, 536870912
    %v3041 = vshrl.u32 %v3040, 30
    %v3042 = vshll.u32 %v3041, 30
    %v3043 = vsub.s32 %v3039, %v3042
    %vm3044 = vcmp.lt.s32.totalorder %v3043, 0
    %v3045 = vsub.s32 0, %v3043
    %v3046 = vsel %vm3044, %v3045, %v3043
    %v3047 = vclz %v3046
    %v3048 = vsub.s32 %v3047, 2
    %vm3049 = vcmp.gt.s32.totalorder 0, %v3048
    %v3050 = vsel %vm3049, 0, %v3048
    %v3051 = vsub.s32 32, %v3050
    %v3052 = vshll.u32 %v3043, %v3050
    %v3053 = vshrl.u32 %v3035, %v3051
    %v3054 = vor.u32 %v3052, %v3053
    %v3055 = vsub.s32 4294967266, %v3050
    %v3056 = vadd.s32 %v3055, 127
    %v3057 = vshll.u32 %v3056, 23
    %v3058 = vor.u32 4788187, %v3057
    %v3059 = vand.u32 2147483647, %v3058
    %v3061 = vcvt.s32.f32 %v3054
    %v3062 = vmul.f32 %v3061, %v3059
    %v3063 = vxor.u32 %v3062, 2147483648
    %v3064 = vsel %vm2981, %v3063, %v3062
    %v3065 = vsub.s32 4, %v3041
    %v3066 = vsel %vm2981, %v3065, %v3041
    %v3067 = vsel %vm2980, %v2327, %v3064
    %v3068 = vsel %vm2980, 0, %v3066
    %v3069 = vcosq.f32.pop %v3067
    %v3070 = vsinq.f32.pop %v3067
    %vm3071 = vweird.f32 %v2327
    %v3072 = vadd.s32 %v3068, 3
    %v3073 = vand.u32 %v3072, 3
    %vm3074 = vcmp.lt.s32.totalorder %v3073, 2
    %vm3075 = vcmp.eq.s32.totalorder %v3073, 0
    %v3076 = vxor.u32 %v3070, 2147483648
    %v3077 = vsel %vm3075, %v3069, %v3076
    %vm3078 = vcmp.eq.s32.totalorder %v3073, 2
    %v3079 = vxor.u32 %v3069, 2147483648
    %v3080 = vsel %vm3078, %v3079, %v3070
    %v3081 = vsel %vm3074, %v3077, %v3080
    %v3082 = vsel %vm3071, nan, %v3081
    %v3083 = vand.u32 2147483647, %v2328
    %vm3084 = vcmp.le.f32.partialorder %v3083, 0.7853982
    %vm3085 = vcmp.lt.s32.totalorder %v2328, 0
    %v3086 = vand.u32 %v2328, 2139095040
    %v3087 = vshrl.u32 %v3086, 23
    %v3088 = vsub.s32 %v3087, 127
    %v3089 = vand.u32 2147483647, %v2328
    %v3090 = vand.u32 %v3089, 8388607
    %v3091 = vor.u32 %v3090, 8388608
    %v3092 = vsub.s32 0, %v3091
    %v3093 = vadd.s32 %v3088, 1
    %vm3094 = vcmp.gt.s32.totalorder %v3093, 0
    %v3095 = vsel %vm3094, %v3093, 0
    %v3096 = vshrl.u32 %v3095, 5
    %v3097 = vand.u32 %v3095, 31
    %v3098 = vsub.s32 32, %v3097
    %v3099 = vshrl.u32 683565275, %v3098
    %v3100 = vshll.u32 683565275, %v3097
    %v3101 = vshrl.u32 2475754826, %v3098
    %v3102 = vor.u32 %v3100, %v3101
    %v3103 = vshll.u32 2475754826, %v3097
    %v3104 = vshrl.u32 2131351028, %v3098
    %v3105 = vor.u32 %v3103, %v3104
    %v3106 = vshll.u32 2131351028, %v3097
    %v3107 = vshrl.u32 2102212464, %v3098
    %v3108 = vor.u32 %v3106, %v3107
    %v3109 = vshll.u32 2102212464, %v3097
    %v3110 = vshrl.u32 920167782, %v3098
    %v3111 = vor.u32 %v3109, %v3110
    %v3112 = vshll.u32 920167782, %v3097
    %v3113 = vshrl.u32 1326507024, %v3098
    %v3114 = vor.u32 %v3112, %v3113
    %vm3115 = vcmp.lt.s32.totalorder %v3096, 1
    %vm3116 = vcmp.lt.s32.totalorder %v3096, 2
    %vm3117 = vcmp.lt.s32.totalorder %v3096, 3
    %vm3118 = vcmp.lt.s32.totalorder %v3096, 4
    %v3119 = vsel %vm3115, %v3099, %v3102
    %v3120 = vsel %vm3118, %v3108, 2102212464
    %v3121 = vsel %vm3117, %v3105, %v3120
    %v3122 = vsel %vm3116, %v3119, %v3121
    %v3123 = vsel %vm3115, %v3102, %v3105
    %v3124 = vsel %vm3118, %v3111, 920167782
    %v3125 = vsel %vm3117, %v3108, %v3124
    %v3126 = vsel %vm3116, %v3123, %v3125
    %v3127 = vsel %vm3115, %v3105, %v3108
    %v3128 = vsel %vm3118, %v3114, 1326507024
    %v3129 = vsel %vm3117, %v3111, %v3128
    %v3130 = vsel %vm3116, %v3127, %v3129
    %v3131 = vshll.u32 %v3091, 8
    %v3132 = vmul.u32.u64.compose %v3131, %v3130
    %v3133 = vextract.low.u32 %v3132
    %v3134 = vextract.high.u32 %v3132
    %v3135 = vmul.u32.u64.compose %v3131, %v3126
    %v3136 = vextract.low.u32 %v3135
    %v3137 = vextract.high.u32 %v3135
    %v3138 = vmul.u32 %v3131, %v3122
    %v3139 = vadd.s32 %v3134, %v3136
    %vm3140 = vc.u32 %v3134, %v3136
    %v3141 = vadd.s32 %v3137, 1
    %v3142 = vsel %vm3140, %v3141, %v3137
    %v3143 = vadd.s32 %v3138, %v3142
    %v3144 = vadd.s32 %v3143, 536870912
    %v3145 = vshrl.u32 %v3144, 30
    %v3146 = vshll.u32 %v3145, 30
    %v3147 = vsub.s32 %v3143, %v3146
    %vm3148 = vcmp.lt.s32.totalorder %v3147, 0
    %v3149 = vsub.s32 0, %v3147
    %v3150 = vsel %vm3148, %v3149, %v3147
    %v3151 = vclz %v3150
    %v3152 = vsub.s32 %v3151, 2
    %vm3153 = vcmp.gt.s32.totalorder 0, %v3152
    %v3154 = vsel %vm3153, 0, %v3152
    %v3155 = vsub.s32 32, %v3154
    %v3156 = vshll.u32 %v3147, %v3154
    %v3157 = vshrl.u32 %v3139, %v3155
    %v3158 = vor.u32 %v3156, %v3157
    %v3159 = vsub.s32 4294967266, %v3154
    %v3160 = vadd.s32 %v3159, 127
    %v3161 = vshll.u32 %v3160, 23
    %v3162 = vor.u32 4788187, %v3161
    %v3163 = vand.u32 2147483647, %v3162
    %v3165 = vcvt.s32.f32 %v3158
    %v3166 = vmul.f32 %v3165, %v3163
    %v3167 = vxor.u32 %v3166, 2147483648
    %v3168 = vsel %vm3085, %v3167, %v3166
    %v3169 = vsub.s32 4, %v3145
    %v3170 = vsel %vm3085, %v3169, %v3145
    %v3171 = vsel %vm3084, %v2328, %v3168
    %v3172 = vsel %vm3084, 0, %v3170
    %v3173 = vcosq.f32.pop %v3171
    %v3174 = vsinq.f32.pop %v3171
    %vm3175 = vweird.f32 %v2328
    %v3176 = vadd.s32 %v3172, 3
    %v3177 = vand.u32 %v3176, 3
    %vm3178 = vcmp.lt.s32.totalorder %v3177, 2
    %vm3179 = vcmp.eq.s32.totalorder %v3177, 0
    %v3180 = vxor.u32 %v3174, 2147483648
    %v3181 = vsel %vm3179, %v3173, %v3180
    %vm3182 = vcmp.eq.s32.totalorder %v3177, 2
    %v3183 = vxor.u32 %v3173, 2147483648
    %v3184 = vsel %vm3182, %v3183, %v3174
    %v3185 = vsel %vm3178, %v3181, %v3184
    %v3186 = vsel %vm3175, nan, %v3185
    %v3187 = vand.u32 2147483647, %v2329
    %vm3188 = vcmp.le.f32.partialorder %v3187, 0.7853982
    %vm3189 = vcmp.lt.s32.totalorder %v2329, 0
    %v3190 = vand.u32 %v2329, 2139095040
    %v3191 = vshrl.u32 %v3190, 23
    %v3192 = vsub.s32 %v3191, 127
    %v3193 = vand.u32 2147483647, %v2329
    %v3194 = vand.u32 %v3193, 8388607
    %v3195 = vor.u32 %v3194, 8388608
    %v3196 = vsub.s32 0, %v3195
    %v3197 = vadd.s32 %v3192, 1
    %vm3198 = vcmp.gt.s32.totalorder %v3197, 0
    %v3199 = vsel %vm3198, %v3197, 0
    %v3200 = vshrl.u32 %v3199, 5
    %v3201 = vand.u32 %v3199, 31
    %v3202 = vsub.s32 32, %v3201
    %v3203 = vshrl.u32 683565275, %v3202
    %v3204 = vshll.u32 683565275, %v3201
    %v3205 = vshrl.u32 2475754826, %v3202
    %v3206 = vor.u32 %v3204, %v3205
    %v3207 = vshll.u32 2475754826, %v3201
    %v3208 = vshrl.u32 2131351028, %v3202
    %v3209 = vor.u32 %v3207, %v3208
    %v3210 = vshll.u32 2131351028, %v3201
    %v3211 = vshrl.u32 2102212464, %v3202
    %v3212 = vor.u32 %v3210, %v3211
    %v3213 = vshll.u32 2102212464, %v3201
    %v3214 = vshrl.u32 920167782, %v3202
    %v3215 = vor.u32 %v3213, %v3214
    %v3216 = vshll.u32 920167782, %v3201
    %v3217 = vshrl.u32 1326507024, %v3202
    %v3218 = vor.u32 %v3216, %v3217
    %vm3219 = vcmp.lt.s32.totalorder %v3200, 1
    %vm3220 = vcmp.lt.s32.totalorder %v3200, 2
    %vm3221 = vcmp.lt.s32.totalorder %v3200, 3
    %vm3222 = vcmp.lt.s32.totalorder %v3200, 4
    %v3223 = vsel %vm3219, %v3203, %v3206
    %v3224 = vsel %vm3222, %v3212, 2102212464
    %v3225 = vsel %vm3221, %v3209, %v3224
    %v3226 = vsel %vm3220, %v3223, %v3225
    %v3227 = vsel %vm3219, %v3206, %v3209
    %v3228 = vsel %vm3222, %v3215, 920167782
    %v3229 = vsel %vm3221, %v3212, %v3228
    %v3230 = vsel %vm3220, %v3227, %v3229
    %v3231 = vsel %vm3219, %v3209, %v3212
    %v3232 = vsel %vm3222, %v3218, 1326507024
    %v3233 = vsel %vm3221, %v3215, %v3232
    %v3234 = vsel %vm3220, %v3231, %v3233
    %v3235 = vshll.u32 %v3195, 8
    %v3236 = vmul.u32.u64.compose %v3235, %v3234
    %v3237 = vextract.low.u32 %v3236
    %v3238 = vextract.high.u32 %v3236
    %v3239 = vmul.u32.u64.compose %v3235, %v3230
    %v3240 = vextract.low.u32 %v3239
    %v3241 = vextract.high.u32 %v3239
    %v3242 = vmul.u32 %v3235, %v3226
    %v3243 = vadd.s32 %v3238, %v3240
    %vm3244 = vc.u32 %v3238, %v3240
    %v3245 = vadd.s32 %v3241, 1
    %v3246 = vsel %vm3244, %v3245, %v3241
    %v3247 = vadd.s32 %v3242, %v3246
    %v3248 = vadd.s32 %v3247, 536870912
    %v3249 = vshrl.u32 %v3248, 30
    %v3250 = vshll.u32 %v3249, 30
    %v3251 = vsub.s32 %v3247, %v3250
    %vm3252 = vcmp.lt.s32.totalorder %v3251, 0
    %v3253 = vsub.s32 0, %v3251
    %v3254 = vsel %vm3252, %v3253, %v3251
    %v3255 = vclz %v3254
    %v3256 = vsub.s32 %v3255, 2
    %vm3257 = vcmp.gt.s32.totalorder 0, %v3256
    %v3258 = vsel %vm3257, 0, %v3256
    %v3259 = vsub.s32 32, %v3258
    %v3260 = vshll.u32 %v3251, %v3258
    %v3261 = vshrl.u32 %v3243, %v3259
    %v3262 = vor.u32 %v3260, %v3261
    %v3263 = vsub.s32 4294967266, %v3258
    %v3264 = vadd.s32 %v3263, 127
    %v3265 = vshll.u32 %v3264, 23
    %v3266 = vor.u32 4788187, %v3265
    %v3267 = vand.u32 2147483647, %v3266
    %v3269 = vcvt.s32.f32 %v3262
    %v3270 = vmul.f32 %v3269, %v3267
    %v3271 = vxor.u32 %v3270, 2147483648
    %v3272 = vsel %vm3189, %v3271, %v3270
    %v3273 = vsub.s32 4, %v3249
    %v3274 = vsel %vm3189, %v3273, %v3249
    %v3275 = vsel %vm3188, %v2329, %v3272
    %v3276 = vsel %vm3188, 0, %v3274
    %v3277 = vcosq.f32.pop %v3275
    %v3278 = vsinq.f32.pop %v3275
    %vm3279 = vweird.f32 %v2329
    %v3280 = vadd.s32 %v3276, 3
    %v3281 = vand.u32 %v3280, 3
    %vm3282 = vcmp.lt.s32.totalorder %v3281, 2
    %vm3283 = vcmp.eq.s32.totalorder %v3281, 0
    %v3284 = vxor.u32 %v3278, 2147483648
    %v3285 = vsel %vm3283, %v3277, %v3284
    %vm3286 = vcmp.eq.s32.totalorder %v3281, 2
    %v3287 = vxor.u32 %v3277, 2147483648
    %v3288 = vsel %vm3286, %v3287, %v3278
    %v3289 = vsel %vm3282, %v3285, %v3288
    %v3290 = vsel %vm3279, nan, %v3289
    %v3291 = vand.u32 2147483647, %v2330
    %vm3292 = vcmp.le.f32.partialorder %v3291, 0.7853982
    %vm3293 = vcmp.lt.s32.totalorder %v2330, 0
    %v3294 = vand.u32 %v2330, 2139095040
    %v3295 = vshrl.u32 %v3294, 23
    %v3296 = vsub.s32 %v3295, 127
    %v3297 = vand.u32 2147483647, %v2330
    %v3298 = vand.u32 %v3297, 8388607
    %v3299 = vor.u32 %v3298, 8388608
    %v3300 = vsub.s32 0, %v3299
    %v3301 = vadd.s32 %v3296, 1
    %vm3302 = vcmp.gt.s32.totalorder %v3301, 0
    %v3303 = vsel %vm3302, %v3301, 0
    %v3304 = vshrl.u32 %v3303, 5
    %v3305 = vand.u32 %v3303, 31
    %v3306 = vsub.s32 32, %v3305
    %v3307 = vshrl.u32 683565275, %v3306
    %v3308 = vshll.u32 683565275, %v3305
    %v3309 = vshrl.u32 2475754826, %v3306
    %v3310 = vor.u32 %v3308, %v3309
    %v3311 = vshll.u32 2475754826, %v3305
    %v3312 = vshrl.u32 2131351028, %v3306
    %v3313 = vor.u32 %v3311, %v3312
    %v3314 = vshll.u32 2131351028, %v3305
    %v3315 = vshrl.u32 2102212464, %v3306
    %v3316 = vor.u32 %v3314, %v3315
    %v3317 = vshll.u32 2102212464, %v3305
    %v3318 = vshrl.u32 920167782, %v3306
    %v3319 = vor.u32 %v3317, %v3318
    %v3320 = vshll.u32 920167782, %v3305
    %v3321 = vshrl.u32 1326507024, %v3306
    %v3322 = vor.u32 %v3320, %v3321
    %vm3323 = vcmp.lt.s32.totalorder %v3304, 1
    %vm3324 = vcmp.lt.s32.totalorder %v3304, 2
    %vm3325 = vcmp.lt.s32.totalorder %v3304, 3
    %vm3326 = vcmp.lt.s32.totalorder %v3304, 4
    %v3327 = vsel %vm3323, %v3307, %v3310
    %v3328 = vsel %vm3326, %v3316, 2102212464
    %v3329 = vsel %vm3325, %v3313, %v3328
    %v3330 = vsel %vm3324, %v3327, %v3329
    %v3331 = vsel %vm3323, %v3310, %v3313
    %v3332 = vsel %vm3326, %v3319, 920167782
    %v3333 = vsel %vm3325, %v3316, %v3332
    %v3334 = vsel %vm3324, %v3331, %v3333
    %v3335 = vsel %vm3323, %v3313, %v3316
    %v3336 = vsel %vm3326, %v3322, 1326507024
    %v3337 = vsel %vm3325, %v3319, %v3336
    %v3338 = vsel %vm3324, %v3335, %v3337
    %v3339 = vshll.u32 %v3299, 8
    %v3340 = vmul.u32.u64.compose %v3339, %v3338
    %v3341 = vextract.low.u32 %v3340
    %v3342 = vextract.high.u32 %v3340
    %v3343 = vmul.u32.u64.compose %v3339, %v3334
    %v3344 = vextract.low.u32 %v3343
    %v3345 = vextract.high.u32 %v3343
    %v3346 = vmul.u32 %v3339, %v3330
    %v3347 = vadd.s32 %v3342, %v3344
    %vm3348 = vc.u32 %v3342, %v3344
    %v3349 = vadd.s32 %v3345, 1
    %v3350 = vsel %vm3348, %v3349, %v3345
    %v3351 = vadd.s32 %v3346, %v3350
    %v3352 = vadd.s32 %v3351, 536870912
    %v3353 = vshrl.u32 %v3352, 30
    %v3354 = vshll.u32 %v3353, 30
    %v3355 = vsub.s32 %v3351, %v3354
    %vm3356 = vcmp.lt.s32.totalorder %v3355, 0
    %v3357 = vsub.s32 0, %v3355
    %v3358 = vsel %vm3356, %v3357, %v3355
    %v3359 = vclz %v3358
    %v3360 = vsub.s32 %v3359, 2
    %vm3361 = vcmp.gt.s32.totalorder 0, %v3360
    %v3362 = vsel %vm3361, 0, %v3360
    %v3363 = vsub.s32 32, %v3362
    %v3364 = vshll.u32 %v3355, %v3362
    %v3365 = vshrl.u32 %v3347, %v3363
    %v3366 = vor.u32 %v3364, %v3365
    %v3367 = vsub.s32 4294967266, %v3362
    %v3368 = vadd.s32 %v3367, 127
    %v3369 = vshll.u32 %v3368, 23
    %v3370 = vor.u32 4788187, %v3369
    %v3371 = vand.u32 2147483647, %v3370
    %v3373 = vcvt.s32.f32 %v3366
    %v3374 = vmul.f32 %v3373, %v3371
    %v3375 = vxor.u32 %v3374, 2147483648
    %v3376 = vsel %vm3293, %v3375, %v3374
    %v3377 = vsub.s32 4, %v3353
    %v3378 = vsel %vm3293, %v3377, %v3353
    %v3379 = vsel %vm3292, %v2330, %v3376
    %v3380 = vsel %vm3292, 0, %v3378
    %v3381 = vcosq.f32.pop %v3379
    %v3382 = vsinq.f32.pop %v3379
    %vm3383 = vweird.f32 %v2330
    %v3384 = vadd.s32 %v3380, 3
    %v3385 = vand.u32 %v3384, 3
    %vm3386 = vcmp.lt.s32.totalorder %v3385, 2
    %vm3387 = vcmp.eq.s32.totalorder %v3385, 0
    %v3388 = vxor.u32 %v3382, 2147483648
    %v3389 = vsel %vm3387, %v3381, %v3388
    %vm3390 = vcmp.eq.s32.totalorder %v3385, 2
    %v3391 = vxor.u32 %v3381, 2147483648
    %v3392 = vsel %vm3390, %v3391, %v3382
    %v3393 = vsel %vm3386, %v3389, %v3392
    %v3394 = vsel %vm3383, nan, %v3393
    %v3395 = vand.u32 2147483647, %v2331
    %vm3396 = vcmp.le.f32.partialorder %v3395, 0.7853982
    %vm3397 = vcmp.lt.s32.totalorder %v2331, 0
    %v3398 = vand.u32 %v2331, 2139095040
    %v3399 = vshrl.u32 %v3398, 23
    %v3400 = vsub.s32 %v3399, 127
    %v3401 = vand.u32 2147483647, %v2331
    %v3402 = vand.u32 %v3401, 8388607
    %v3403 = vor.u32 %v3402, 8388608
    %v3404 = vsub.s32 0, %v3403
    %v3405 = vadd.s32 %v3400, 1
    %vm3406 = vcmp.gt.s32.totalorder %v3405, 0
    %v3407 = vsel %vm3406, %v3405, 0
    %v3408 = vshrl.u32 %v3407, 5
    %v3409 = vand.u32 %v3407, 31
    %v3410 = vsub.s32 32, %v3409
    %v3411 = vshrl.u32 683565275, %v3410
    %v3412 = vshll.u32 683565275, %v3409
    %v3413 = vshrl.u32 2475754826, %v3410
    %v3414 = vor.u32 %v3412, %v3413
    %v3415 = vshll.u32 2475754826, %v3409
    %v3416 = vshrl.u32 2131351028, %v3410
    %v3417 = vor.u32 %v3415, %v3416
    %v3418 = vshll.u32 2131351028, %v3409
    %v3419 = vshrl.u32 2102212464, %v3410
    %v3420 = vor.u32 %v3418, %v3419
    %v3421 = vshll.u32 2102212464, %v3409
    %v3422 = vshrl.u32 920167782, %v3410
    %v3423 = vor.u32 %v3421, %v3422
    %v3424 = vshll.u32 920167782, %v3409
    %v3425 = vshrl.u32 1326507024, %v3410
    %v3426 = vor.u32 %v3424, %v3425
    %vm3427 = vcmp.lt.s32.totalorder %v3408, 1
    %vm3428 = vcmp.lt.s32.totalorder %v3408, 2
    %vm3429 = vcmp.lt.s32.totalorder %v3408, 3
    %vm3430 = vcmp.lt.s32.totalorder %v3408, 4
    %v3431 = vsel %vm3427, %v3411, %v3414
    %v3432 = vsel %vm3430, %v3420, 2102212464
    %v3433 = vsel %vm3429, %v3417, %v3432
    %v3434 = vsel %vm3428, %v3431, %v3433
    %v3435 = vsel %vm3427, %v3414, %v3417
    %v3436 = vsel %vm3430, %v3423, 920167782
    %v3437 = vsel %vm3429, %v3420, %v3436
    %v3438 = vsel %vm3428, %v3435, %v3437
    %v3439 = vsel %vm3427, %v3417, %v3420
    %v3440 = vsel %vm3430, %v3426, 1326507024
    %v3441 = vsel %vm3429, %v3423, %v3440
    %v3442 = vsel %vm3428, %v3439, %v3441
    %v3443 = vshll.u32 %v3403, 8
    %v3444 = vmul.u32.u64.compose %v3443, %v3442
    %v3445 = vextract.low.u32 %v3444
    %v3446 = vextract.high.u32 %v3444
    %v3447 = vmul.u32.u64.compose %v3443, %v3438
    %v3448 = vextract.low.u32 %v3447
    %v3449 = vextract.high.u32 %v3447
    %v3450 = vmul.u32 %v3443, %v3434
    %v3451 = vadd.s32 %v3446, %v3448
    %vm3452 = vc.u32 %v3446, %v3448
    %v3453 = vadd.s32 %v3449, 1
    %v3454 = vsel %vm3452, %v3453, %v3449
    %v3455 = vadd.s32 %v3450, %v3454
    %v3456 = vadd.s32 %v3455, 536870912
    %v3457 = vshrl.u32 %v3456, 30
    %v3458 = vshll.u32 %v3457, 30
    %v3459 = vsub.s32 %v3455, %v3458
    %vm3460 = vcmp.lt.s32.totalorder %v3459, 0
    %v3461 = vsub.s32 0, %v3459
    %v3462 = vsel %vm3460, %v3461, %v3459
    %v3463 = vclz %v3462
    %v3464 = vsub.s32 %v3463, 2
    %vm3465 = vcmp.gt.s32.totalorder 0, %v3464
    %v3466 = vsel %vm3465, 0, %v3464
    %v3467 = vsub.s32 32, %v3466
    %v3468 = vshll.u32 %v3459, %v3466
    %v3469 = vshrl.u32 %v3451, %v3467
    %v3470 = vor.u32 %v3468, %v3469
    %v3471 = vsub.s32 4294967266, %v3466
    %v3472 = vadd.s32 %v3471, 127
    %v3473 = vshll.u32 %v3472, 23
    %v3474 = vor.u32 4788187, %v3473
    %v3475 = vand.u32 2147483647, %v3474
    %v3477 = vcvt.s32.f32 %v3470
    %v3478 = vmul.f32 %v3477, %v3475
    %v3479 = vxor.u32 %v3478, 2147483648
    %v3480 = vsel %vm3397, %v3479, %v3478
    %v3481 = vsub.s32 4, %v3457
    %v3482 = vsel %vm3397, %v3481, %v3457
    %v3483 = vsel %vm3396, %v2331, %v3480
    %v3484 = vsel %vm3396, 0, %v3482
    %v3485 = vcosq.f32.pop %v3483
    %v3486 = vsinq.f32.pop %v3483
    %vm3487 = vweird.f32 %v2331
    %v3488 = vadd.s32 %v3484, 3
    %v3489 = vand.u32 %v3488, 3
    %vm3490 = vcmp.lt.s32.totalorder %v3489, 2
    %vm3491 = vcmp.eq.s32.totalorder %v3489, 0
    %v3492 = vxor.u32 %v3486, 2147483648
    %v3493 = vsel %vm3491, %v3485, %v3492
    %vm3494 = vcmp.eq.s32.totalorder %v3489, 2
    %v3495 = vxor.u32 %v3485, 2147483648
    %v3496 = vsel %vm3494, %v3495, %v3486
    %v3497 = vsel %vm3490, %v3493, %v3496
    %v3498 = vsel %vm3487, nan, %v3497
    %v3499 = vand.u32 2147483647, %v2332
    %vm3500 = vcmp.le.f32.partialorder %v3499, 0.7853982
    %vm3501 = vcmp.lt.s32.totalorder %v2332, 0
    %v3502 = vand.u32 %v2332, 2139095040
    %v3503 = vshrl.u32 %v3502, 23
    %v3504 = vsub.s32 %v3503, 127
    %v3505 = vand.u32 2147483647, %v2332
    %v3506 = vand.u32 %v3505, 8388607
    %v3507 = vor.u32 %v3506, 8388608
    %v3508 = vsub.s32 0, %v3507
    %v3509 = vadd.s32 %v3504, 1
    %vm3510 = vcmp.gt.s32.totalorder %v3509, 0
    %v3511 = vsel %vm3510, %v3509, 0
    %v3512 = vshrl.u32 %v3511, 5
    %v3513 = vand.u32 %v3511, 31
    %v3514 = vsub.s32 32, %v3513
    %v3515 = vshrl.u32 683565275, %v3514
    %v3516 = vshll.u32 683565275, %v3513
    %v3517 = vshrl.u32 2475754826, %v3514
    %v3518 = vor.u32 %v3516, %v3517
    %v3519 = vshll.u32 2475754826, %v3513
    %v3520 = vshrl.u32 2131351028, %v3514
    %v3521 = vor.u32 %v3519, %v3520
    %v3522 = vshll.u32 2131351028, %v3513
    %v3523 = vshrl.u32 2102212464, %v3514
    %v3524 = vor.u32 %v3522, %v3523
    %v3525 = vshll.u32 2102212464, %v3513
    %v3526 = vshrl.u32 920167782, %v3514
    %v3527 = vor.u32 %v3525, %v3526
    %v3528 = vshll.u32 920167782, %v3513
    %v3529 = vshrl.u32 1326507024, %v3514
    %v3530 = vor.u32 %v3528, %v3529
    %vm3531 = vcmp.lt.s32.totalorder %v3512, 1
    %vm3532 = vcmp.lt.s32.totalorder %v3512, 2
    %vm3533 = vcmp.lt.s32.totalorder %v3512, 3
    %vm3534 = vcmp.lt.s32.totalorder %v3512, 4
    %v3535 = vsel %vm3531, %v3515, %v3518
    %v3536 = vsel %vm3534, %v3524, 2102212464
    %v3537 = vsel %vm3533, %v3521, %v3536
    %v3538 = vsel %vm3532, %v3535, %v3537
    %v3539 = vsel %vm3531, %v3518, %v3521
    %v3540 = vsel %vm3534, %v3527, 920167782
    %v3541 = vsel %vm3533, %v3524, %v3540
    %v3542 = vsel %vm3532, %v3539, %v3541
    %v3543 = vsel %vm3531, %v3521, %v3524
    %v3544 = vsel %vm3534, %v3530, 1326507024
    %v3545 = vsel %vm3533, %v3527, %v3544
    %v3546 = vsel %vm3532, %v3543, %v3545
    %v3547 = vshll.u32 %v3507, 8
    %v3548 = vmul.u32.u64.compose %v3547, %v3546
    %v3549 = vextract.low.u32 %v3548
    %v3550 = vextract.high.u32 %v3548
    %v3551 = vmul.u32.u64.compose %v3547, %v3542
    %v3552 = vextract.low.u32 %v3551
    %v3553 = vextract.high.u32 %v3551
    %v3554 = vmul.u32 %v3547, %v3538
    %v3555 = vadd.s32 %v3550, %v3552
    %vm3556 = vc.u32 %v3550, %v3552
    %v3557 = vadd.s32 %v3553, 1
    %v3558 = vsel %vm3556, %v3557, %v3553
    %v3559 = vadd.s32 %v3554, %v3558
    %v3560 = vadd.s32 %v3559, 536870912
    %v3561 = vshrl.u32 %v3560, 30
    %v3562 = vshll.u32 %v3561, 30
    %v3563 = vsub.s32 %v3559, %v3562
    %vm3564 = vcmp.lt.s32.totalorder %v3563, 0
    %v3565 = vsub.s32 0, %v3563
    %v3566 = vsel %vm3564, %v3565, %v3563
    %v3567 = vclz %v3566
    %v3568 = vsub.s32 %v3567, 2
    %vm3569 = vcmp.gt.s32.totalorder 0, %v3568
    %v3570 = vsel %vm3569, 0, %v3568
    %v3571 = vsub.s32 32, %v3570
    %v3572 = vshll.u32 %v3563, %v3570
    %v3573 = vshrl.u32 %v3555, %v3571
    %v3574 = vor.u32 %v3572, %v3573
    %v3575 = vsub.s32 4294967266, %v3570
    %v3576 = vadd.s32 %v3575, 127
    %v3577 = vshll.u32 %v3576, 23
    %v3578 = vor.u32 4788187, %v3577
    %v3579 = vand.u32 2147483647, %v3578
    %v3581 = vcvt.s32.f32 %v3574
    %v3582 = vmul.f32 %v3581, %v3579
    %v3583 = vxor.u32 %v3582, 2147483648
    %v3584 = vsel %vm3501, %v3583, %v3582
    %v3585 = vsub.s32 4, %v3561
    %v3586 = vsel %vm3501, %v3585, %v3561
    %v3587 = vsel %vm3500, %v2332, %v3584
    %v3588 = vsel %vm3500, 0, %v3586
    %v3589 = vcosq.f32.pop %v3587
    %v3590 = vsinq.f32.pop %v3587
    %vm3591 = vweird.f32 %v2332
    %v3592 = vadd.s32 %v3588, 3
    %v3593 = vand.u32 %v3592, 3
    %vm3594 = vcmp.lt.s32.totalorder %v3593, 2
    %vm3595 = vcmp.eq.s32.totalorder %v3593, 0
    %v3596 = vxor.u32 %v3590, 2147483648
    %v3597 = vsel %vm3595, %v3589, %v3596
    %vm3598 = vcmp.eq.s32.totalorder %v3593, 2
    %v3599 = vxor.u32 %v3589, 2147483648
    %v3600 = vsel %vm3598, %v3599, %v3590
    %v3601 = vsel %vm3594, %v3597, %v3600
    %v3602 = vsel %vm3591, nan, %v3601
    %v3603 = vand.u32 2147483647, %v2333
    %vm3604 = vcmp.le.f32.partialorder %v3603, 0.7853982
    %vm3605 = vcmp.lt.s32.totalorder %v2333, 0
    %v3606 = vand.u32 %v2333, 2139095040
    %v3607 = vshrl.u32 %v3606, 23
    %v3608 = vsub.s32 %v3607, 127
    %v3609 = vand.u32 2147483647, %v2333
    %v3610 = vand.u32 %v3609, 8388607
    %v3611 = vor.u32 %v3610, 8388608
    %v3612 = vsub.s32 0, %v3611
    %v3613 = vadd.s32 %v3608, 1
    %vm3614 = vcmp.gt.s32.totalorder %v3613, 0
    %v3615 = vsel %vm3614, %v3613, 0
    %v3616 = vshrl.u32 %v3615, 5
    %v3617 = vand.u32 %v3615, 31
    %v3618 = vsub.s32 32, %v3617
    %v3619 = vshrl.u32 683565275, %v3618
    %v3620 = vshll.u32 683565275, %v3617
    %v3621 = vshrl.u32 2475754826, %v3618
    %v3622 = vor.u32 %v3620, %v3621
    %v3623 = vshll.u32 2475754826, %v3617
    %v3624 = vshrl.u32 2131351028, %v3618
    %v3625 = vor.u32 %v3623, %v3624
    %v3626 = vshll.u32 2131351028, %v3617
    %v3627 = vshrl.u32 2102212464, %v3618
    %v3628 = vor.u32 %v3626, %v3627
    %v3629 = vshll.u32 2102212464, %v3617
    %v3630 = vshrl.u32 920167782, %v3618
    %v3631 = vor.u32 %v3629, %v3630
    %v3632 = vshll.u32 920167782, %v3617
    %v3633 = vshrl.u32 1326507024, %v3618
    %v3634 = vor.u32 %v3632, %v3633
    %vm3635 = vcmp.lt.s32.totalorder %v3616, 1
    %vm3636 = vcmp.lt.s32.totalorder %v3616, 2
    %vm3637 = vcmp.lt.s32.totalorder %v3616, 3
    %vm3638 = vcmp.lt.s32.totalorder %v3616, 4
    %v3639 = vsel %vm3635, %v3619, %v3622
    %v3640 = vsel %vm3638, %v3628, 2102212464
    %v3641 = vsel %vm3637, %v3625, %v3640
    %v3642 = vsel %vm3636, %v3639, %v3641
    %v3643 = vsel %vm3635, %v3622, %v3625
    %v3644 = vsel %vm3638, %v3631, 920167782
    %v3645 = vsel %vm3637, %v3628, %v3644
    %v3646 = vsel %vm3636, %v3643, %v3645
    %v3647 = vsel %vm3635, %v3625, %v3628
    %v3648 = vsel %vm3638, %v3634, 1326507024
    %v3649 = vsel %vm3637, %v3631, %v3648
    %v3650 = vsel %vm3636, %v3647, %v3649
    %v3651 = vshll.u32 %v3611, 8
    %v3652 = vmul.u32.u64.compose %v3651, %v3650
    %v3653 = vextract.low.u32 %v3652
    %v3654 = vextract.high.u32 %v3652
    %v3655 = vmul.u32.u64.compose %v3651, %v3646
    %v3656 = vextract.low.u32 %v3655
    %v3657 = vextract.high.u32 %v3655
    %v3658 = vmul.u32 %v3651, %v3642
    %v3659 = vadd.s32 %v3654, %v3656
    %vm3660 = vc.u32 %v3654, %v3656
    %v3661 = vadd.s32 %v3657, 1
    %v3662 = vsel %vm3660, %v3661, %v3657
    %v3663 = vadd.s32 %v3658, %v3662
    %v3664 = vadd.s32 %v3663, 536870912
    %v3665 = vshrl.u32 %v3664, 30
    %v3666 = vshll.u32 %v3665, 30
    %v3667 = vsub.s32 %v3663, %v3666
    %vm3668 = vcmp.lt.s32.totalorder %v3667, 0
    %v3669 = vsub.s32 0, %v3667
    %v3670 = vsel %vm3668, %v3669, %v3667
    %v3671 = vclz %v3670
    %v3672 = vsub.s32 %v3671, 2
    %vm3673 = vcmp.gt.s32.totalorder 0, %v3672
    %v3674 = vsel %vm3673, 0, %v3672
    %v3675 = vsub.s32 32, %v3674
    %v3676 = vshll.u32 %v3667, %v3674
    %v3677 = vshrl.u32 %v3659, %v3675
    %v3678 = vor.u32 %v3676, %v3677
    %v3679 = vsub.s32 4294967266, %v3674
    %v3680 = vadd.s32 %v3679, 127
    %v3681 = vshll.u32 %v3680, 23
    %v3682 = vor.u32 4788187, %v3681
    %v3683 = vand.u32 2147483647, %v3682
    %v3685 = vcvt.s32.f32 %v3678
    %v3686 = vmul.f32 %v3685, %v3683
    %v3687 = vxor.u32 %v3686, 2147483648
    %v3688 = vsel %vm3605, %v3687, %v3686
    %v3689 = vsub.s32 4, %v3665
    %v3690 = vsel %vm3605, %v3689, %v3665
    %v3691 = vsel %vm3604, %v2333, %v3688
    %v3692 = vsel %vm3604, 0, %v3690
    %v3693 = vcosq.f32.pop %v3691
    %v3694 = vsinq.f32.pop %v3691
    %vm3695 = vweird.f32 %v2333
    %v3696 = vadd.s32 %v3692, 3
    %v3697 = vand.u32 %v3696, 3
    %vm3698 = vcmp.lt.s32.totalorder %v3697, 2
    %vm3699 = vcmp.eq.s32.totalorder %v3697, 0
    %v3700 = vxor.u32 %v3694, 2147483648
    %v3701 = vsel %vm3699, %v3693, %v3700
    %vm3702 = vcmp.eq.s32.totalorder %v3697, 2
    %v3703 = vxor.u32 %v3693, 2147483648
    %v3704 = vsel %vm3702, %v3703, %v3694
    %v3705 = vsel %vm3698, %v3701, %v3704
    %v3706 = vsel %vm3695, nan, %v3705
    %v3707 = vand.u32 2147483647, %v2334
    %vm3708 = vcmp.le.f32.partialorder %v3707, 0.7853982
    %vm3709 = vcmp.lt.s32.totalorder %v2334, 0
    %v3710 = vand.u32 %v2334, 2139095040
    %v3711 = vshrl.u32 %v3710, 23
    %v3712 = vsub.s32 %v3711, 127
    %v3713 = vand.u32 2147483647, %v2334
    %v3714 = vand.u32 %v3713, 8388607
    %v3715 = vor.u32 %v3714, 8388608
    %v3716 = vsub.s32 0, %v3715
    %v3717 = vadd.s32 %v3712, 1
    %vm3718 = vcmp.gt.s32.totalorder %v3717, 0
    %v3719 = vsel %vm3718, %v3717, 0
    %v3720 = vshrl.u32 %v3719, 5
    %v3721 = vand.u32 %v3719, 31
    %v3722 = vsub.s32 32, %v3721
    %v3723 = vshrl.u32 683565275, %v3722
    %v3724 = vshll.u32 683565275, %v3721
    %v3725 = vshrl.u32 2475754826, %v3722
    %v3726 = vor.u32 %v3724, %v3725
    %v3727 = vshll.u32 2475754826, %v3721
    %v3728 = vshrl.u32 2131351028, %v3722
    %v3729 = vor.u32 %v3727, %v3728
    %v3730 = vshll.u32 2131351028, %v3721
    %v3731 = vshrl.u32 2102212464, %v3722
    %v3732 = vor.u32 %v3730, %v3731
    %v3733 = vshll.u32 2102212464, %v3721
    %v3734 = vshrl.u32 920167782, %v3722
    %v3735 = vor.u32 %v3733, %v3734
    %v3736 = vshll.u32 920167782, %v3721
    %v3737 = vshrl.u32 1326507024, %v3722
    %v3738 = vor.u32 %v3736, %v3737
    %vm3739 = vcmp.lt.s32.totalorder %v3720, 1
    %vm3740 = vcmp.lt.s32.totalorder %v3720, 2
    %vm3741 = vcmp.lt.s32.totalorder %v3720, 3
    %vm3742 = vcmp.lt.s32.totalorder %v3720, 4
    %v3743 = vsel %vm3739, %v3723, %v3726
    %v3744 = vsel %vm3742, %v3732, 2102212464
    %v3745 = vsel %vm3741, %v3729, %v3744
    %v3746 = vsel %vm3740, %v3743, %v3745
    %v3747 = vsel %vm3739, %v3726, %v3729
    %v3748 = vsel %vm3742, %v3735, 920167782
    %v3749 = vsel %vm3741, %v3732, %v3748
    %v3750 = vsel %vm3740, %v3747, %v3749
    %v3751 = vsel %vm3739, %v3729, %v3732
    %v3752 = vsel %vm3742, %v3738, 1326507024
    %v3753 = vsel %vm3741, %v3735, %v3752
    %v3754 = vsel %vm3740, %v3751, %v3753
    %v3755 = vshll.u32 %v3715, 8
    %v3756 = vmul.u32.u64.compose %v3755, %v3754
    %v3757 = vextract.low.u32 %v3756
    %v3758 = vextract.high.u32 %v3756
    %v3759 = vmul.u32.u64.compose %v3755, %v3750
    %v3760 = vextract.low.u32 %v3759
    %v3761 = vextract.high.u32 %v3759
    %v3762 = vmul.u32 %v3755, %v3746
    %v3763 = vadd.s32 %v3758, %v3760
    %vm3764 = vc.u32 %v3758, %v3760
    %v3765 = vadd.s32 %v3761, 1
    %v3766 = vsel %vm3764, %v3765, %v3761
    %v3767 = vadd.s32 %v3762, %v3766
    %v3768 = vadd.s32 %v3767, 536870912
    %v3769 = vshrl.u32 %v3768, 30
    %v3770 = vshll.u32 %v3769, 30
    %v3771 = vsub.s32 %v3767, %v3770
    %vm3772 = vcmp.lt.s32.totalorder %v3771, 0
    %v3773 = vsub.s32 0, %v3771
    %v3774 = vsel %vm3772, %v3773, %v3771
    %v3775 = vclz %v3774
    %v3776 = vsub.s32 %v3775, 2
    %vm3777 = vcmp.gt.s32.totalorder 0, %v3776
    %v3778 = vsel %vm3777, 0, %v3776
    %v3779 = vsub.s32 32, %v3778
    %v3780 = vshll.u32 %v3771, %v3778
    %v3781 = vshrl.u32 %v3763, %v3779
    %v3782 = vor.u32 %v3780, %v3781
    %v3783 = vsub.s32 4294967266, %v3778
    %v3784 = vadd.s32 %v3783, 127
    %v3785 = vshll.u32 %v3784, 23
    %v3786 = vor.u32 4788187, %v3785
    %v3787 = vand.u32 2147483647, %v3786
    %v3789 = vcvt.s32.f32 %v3782
    %v3790 = vmul.f32 %v3789, %v3787
    %v3791 = vxor.u32 %v3790, 2147483648
    %v3792 = vsel %vm3709, %v3791, %v3790
    %v3793 = vsub.s32 4, %v3769
    %v3794 = vsel %vm3709, %v3793, %v3769
    %v3795 = vsel %vm3708, %v2334, %v3792
    %v3796 = vsel %vm3708, 0, %v3794
    %v3797 = vcosq.f32.pop %v3795
    %v3798 = vsinq.f32.pop %v3795
    %vm3799 = vweird.f32 %v2334
    %v3800 = vadd.s32 %v3796, 3
    %v3801 = vand.u32 %v3800, 3
    %vm3802 = vcmp.lt.s32.totalorder %v3801, 2
    %vm3803 = vcmp.eq.s32.totalorder %v3801, 0
    %v3804 = vxor.u32 %v3798, 2147483648
    %v3805 = vsel %vm3803, %v3797, %v3804
    %vm3806 = vcmp.eq.s32.totalorder %v3801, 2
    %v3807 = vxor.u32 %v3797, 2147483648
    %v3808 = vsel %vm3806, %v3807, %v3798
    %v3809 = vsel %vm3802, %v3805, %v3808
    %v3810 = vsel %vm3799, nan, %v3809
    %v3811 = vand.u32 2147483647, %v2335
    %vm3812 = vcmp.le.f32.partialorder %v3811, 0.7853982
    %vm3813 = vcmp.lt.s32.totalorder %v2335, 0
    %v3814 = vand.u32 %v2335, 2139095040
    %v3815 = vshrl.u32 %v3814, 23
    %v3816 = vsub.s32 %v3815, 127
    %v3817 = vand.u32 2147483647, %v2335
    %v3818 = vand.u32 %v3817, 8388607
    %v3819 = vor.u32 %v3818, 8388608
    %v3820 = vsub.s32 0, %v3819
    %v3821 = vadd.s32 %v3816, 1
    %vm3822 = vcmp.gt.s32.totalorder %v3821, 0
    %v3823 = vsel %vm3822, %v3821, 0
    %v3824 = vshrl.u32 %v3823, 5
    %v3825 = vand.u32 %v3823, 31
    %v3826 = vsub.s32 32, %v3825
    %v3827 = vshrl.u32 683565275, %v3826
    %v3828 = vshll.u32 683565275, %v3825
    %v3829 = vshrl.u32 2475754826, %v3826
    %v3830 = vor.u32 %v3828, %v3829
    %v3831 = vshll.u32 2475754826, %v3825
    %v3832 = vshrl.u32 2131351028, %v3826
    %v3833 = vor.u32 %v3831, %v3832
    %v3834 = vshll.u32 2131351028, %v3825
    %v3835 = vshrl.u32 2102212464, %v3826
    %v3836 = vor.u32 %v3834, %v3835
    %v3837 = vshll.u32 2102212464, %v3825
    %v3838 = vshrl.u32 920167782, %v3826
    %v3839 = vor.u32 %v3837, %v3838
    %v3840 = vshll.u32 920167782, %v3825
    %v3841 = vshrl.u32 1326507024, %v3826
    %v3842 = vor.u32 %v3840, %v3841
    %vm3843 = vcmp.lt.s32.totalorder %v3824, 1
    %vm3844 = vcmp.lt.s32.totalorder %v3824, 2
    %vm3845 = vcmp.lt.s32.totalorder %v3824, 3
    %vm3846 = vcmp.lt.s32.totalorder %v3824, 4
    %v3847 = vsel %vm3843, %v3827, %v3830
    %v3848 = vsel %vm3846, %v3836, 2102212464
    %v3849 = vsel %vm3845, %v3833, %v3848
    %v3850 = vsel %vm3844, %v3847, %v3849
    %v3851 = vsel %vm3843, %v3830, %v3833
    %v3852 = vsel %vm3846, %v3839, 920167782
    %v3853 = vsel %vm3845, %v3836, %v3852
    %v3854 = vsel %vm3844, %v3851, %v3853
    %v3855 = vsel %vm3843, %v3833, %v3836
    %v3856 = vsel %vm3846, %v3842, 1326507024
    %v3857 = vsel %vm3845, %v3839, %v3856
    %v3858 = vsel %vm3844, %v3855, %v3857
    %v3859 = vshll.u32 %v3819, 8
    %v3860 = vmul.u32.u64.compose %v3859, %v3858
    %v3861 = vextract.low.u32 %v3860
    %v3862 = vextract.high.u32 %v3860
    %v3863 = vmul.u32.u64.compose %v3859, %v3854
    %v3864 = vextract.low.u32 %v3863
    %v3865 = vextract.high.u32 %v3863
    %v3866 = vmul.u32 %v3859, %v3850
    %v3867 = vadd.s32 %v3862, %v3864
    %vm3868 = vc.u32 %v3862, %v3864
    %v3869 = vadd.s32 %v3865, 1
    %v3870 = vsel %vm3868, %v3869, %v3865
    %v3871 = vadd.s32 %v3866, %v3870
    %v3872 = vadd.s32 %v3871, 536870912
    %v3873 = vshrl.u32 %v3872, 30
    %v3874 = vshll.u32 %v3873, 30
    %v3875 = vsub.s32 %v3871, %v3874
    %vm3876 = vcmp.lt.s32.totalorder %v3875, 0
    %v3877 = vsub.s32 0, %v3875
    %v3878 = vsel %vm3876, %v3877, %v3875
    %v3879 = vclz %v3878
    %v3880 = vsub.s32 %v3879, 2
    %vm3881 = vcmp.gt.s32.totalorder 0, %v3880
    %v3882 = vsel %vm3881, 0, %v3880
    %v3883 = vsub.s32 32, %v3882
    %v3884 = vshll.u32 %v3875, %v3882
    %v3885 = vshrl.u32 %v3867, %v3883
    %v3886 = vor.u32 %v3884, %v3885
    %v3887 = vsub.s32 4294967266, %v3882
    %v3888 = vadd.s32 %v3887, 127
    %v3889 = vshll.u32 %v3888, 23
    %v3890 = vor.u32 4788187, %v3889
    %v3891 = vand.u32 2147483647, %v3890
    %v3893 = vcvt.s32.f32 %v3886
    %v3894 = vmul.f32 %v3893, %v3891
    %v3895 = vxor.u32 %v3894, 2147483648
    %v3896 = vsel %vm3813, %v3895, %v3894
    %v3897 = vsub.s32 4, %v3873
    %v3898 = vsel %vm3813, %v3897, %v3873
    %v3899 = vsel %vm3812, %v2335, %v3896
    %v3900 = vsel %vm3812, 0, %v3898
    %v3901 = vcosq.f32.pop %v3899
    %v3902 = vsinq.f32.pop %v3899
    %vm3903 = vweird.f32 %v2335
    %v3904 = vadd.s32 %v3900, 3
    %v3905 = vand.u32 %v3904, 3
    %vm3906 = vcmp.lt.s32.totalorder %v3905, 2
    %vm3907 = vcmp.eq.s32.totalorder %v3905, 0
    %v3908 = vxor.u32 %v3902, 2147483648
    %v3909 = vsel %vm3907, %v3901, %v3908
    %vm3910 = vcmp.eq.s32.totalorder %v3905, 2
    %v3911 = vxor.u32 %v3901, 2147483648
    %v3912 = vsel %vm3910, %v3911, %v3902
    %v3913 = vsel %vm3906, %v3909, %v3912
    %v3914 = vsel %vm3903, nan, %v3913
    %v3915 = vand.u32 2147483647, %v2336
    %vm3916 = vcmp.le.f32.partialorder %v3915, 0.7853982
    %vm3917 = vcmp.lt.s32.totalorder %v2336, 0
    %v3918 = vand.u32 %v2336, 2139095040
    %v3919 = vshrl.u32 %v3918, 23
    %v3920 = vsub.s32 %v3919, 127
    %v3921 = vand.u32 2147483647, %v2336
    %v3922 = vand.u32 %v3921, 8388607
    %v3923 = vor.u32 %v3922, 8388608
    %v3924 = vsub.s32 0, %v3923
    %v3925 = vadd.s32 %v3920, 1
    %vm3926 = vcmp.gt.s32.totalorder %v3925, 0
    %v3927 = vsel %vm3926, %v3925, 0
    %v3928 = vshrl.u32 %v3927, 5
    %v3929 = vand.u32 %v3927, 31
    %v3930 = vsub.s32 32, %v3929
    %v3931 = vshrl.u32 683565275, %v3930
    %v3932 = vshll.u32 683565275, %v3929
    %v3933 = vshrl.u32 2475754826, %v3930
    %v3934 = vor.u32 %v3932, %v3933
    %v3935 = vshll.u32 2475754826, %v3929
    %v3936 = vshrl.u32 2131351028, %v3930
    %v3937 = vor.u32 %v3935, %v3936
    %v3938 = vshll.u32 2131351028, %v3929
    %v3939 = vshrl.u32 2102212464, %v3930
    %v3940 = vor.u32 %v3938, %v3939
    %v3941 = vshll.u32 2102212464, %v3929
    %v3942 = vshrl.u32 920167782, %v3930
    %v3943 = vor.u32 %v3941, %v3942
    %v3944 = vshll.u32 920167782, %v3929
    %v3945 = vshrl.u32 1326507024, %v3930
    %v3946 = vor.u32 %v3944, %v3945
    %vm3947 = vcmp.lt.s32.totalorder %v3928, 1
    %vm3948 = vcmp.lt.s32.totalorder %v3928, 2
    %vm3949 = vcmp.lt.s32.totalorder %v3928, 3
    %vm3950 = vcmp.lt.s32.totalorder %v3928, 4
    %v3951 = vsel %vm3947, %v3931, %v3934
    %v3952 = vsel %vm3950, %v3940, 2102212464
    %v3953 = vsel %vm3949, %v3937, %v3952
    %v3954 = vsel %vm3948, %v3951, %v3953
    %v3955 = vsel %vm3947, %v3934, %v3937
    %v3956 = vsel %vm3950, %v3943, 920167782
    %v3957 = vsel %vm3949, %v3940, %v3956
    %v3958 = vsel %vm3948, %v3955, %v3957
    %v3959 = vsel %vm3947, %v3937, %v3940
    %v3960 = vsel %vm3950, %v3946, 1326507024
    %v3961 = vsel %vm3949, %v3943, %v3960
    %v3962 = vsel %vm3948, %v3959, %v3961
    %v3963 = vshll.u32 %v3923, 8
    %v3964 = vmul.u32.u64.compose %v3963, %v3962
    %v3965 = vextract.low.u32 %v3964
    %v3966 = vextract.high.u32 %v3964
    %v3967 = vmul.u32.u64.compose %v3963, %v3958
    %v3968 = vextract.low.u32 %v3967
    %v3969 = vextract.high.u32 %v3967
    %v3970 = vmul.u32 %v3963, %v3954
    %v3971 = vadd.s32 %v3966, %v3968
    %vm3972 = vc.u32 %v3966, %v3968
    %v3973 = vadd.s32 %v3969, 1
    %v3974 = vsel %vm3972, %v3973, %v3969
    %v3975 = vadd.s32 %v3970, %v3974
    %v3976 = vadd.s32 %v3975, 536870912
    %v3977 = vshrl.u32 %v3976, 30
    %v3978 = vshll.u32 %v3977, 30
    %v3979 = vsub.s32 %v3975, %v3978
    %vm3980 = vcmp.lt.s32.totalorder %v3979, 0
    %v3981 = vsub.s32 0, %v3979
    %v3982 = vsel %vm3980, %v3981, %v3979
    %v3983 = vclz %v3982
    %v3984 = vsub.s32 %v3983, 2
    %vm3985 = vcmp.gt.s32.totalorder 0, %v3984
    %v3986 = vsel %vm3985, 0, %v3984
    %v3987 = vsub.s32 32, %v3986
    %v3988 = vshll.u32 %v3979, %v3986
    %v3989 = vshrl.u32 %v3971, %v3987
    %v3990 = vor.u32 %v3988, %v3989
    %v3991 = vsub.s32 4294967266, %v3986
    %v3992 = vadd.s32 %v3991, 127
    %v3993 = vshll.u32 %v3992, 23
    %v3994 = vor.u32 4788187, %v3993
    %v3995 = vand.u32 2147483647, %v3994
    %v3997 = vcvt.s32.f32 %v3990
    %v3998 = vmul.f32 %v3997, %v3995
    %v3999 = vxor.u32 %v3998, 2147483648
    %v4000 = vsel %vm3917, %v3999, %v3998
    %v4001 = vsub.s32 4, %v3977
    %v4002 = vsel %vm3917, %v4001, %v3977
    %v4003 = vsel %vm3916, %v2336, %v4000
    %v4004 = vsel %vm3916, 0, %v4002
    %v4005 = vcosq.f32.pop %v4003
    %v4006 = vsinq.f32.pop %v4003
    %vm4007 = vweird.f32 %v2336
    %v4008 = vadd.s32 %v4004, 3
    %v4009 = vand.u32 %v4008, 3
    %vm4010 = vcmp.lt.s32.totalorder %v4009, 2
    %vm4011 = vcmp.eq.s32.totalorder %v4009, 0
    %v4012 = vxor.u32 %v4006, 2147483648
    %v4013 = vsel %vm4011, %v4005, %v4012
    %vm4014 = vcmp.eq.s32.totalorder %v4009, 2
    %v4015 = vxor.u32 %v4005, 2147483648
    %v4016 = vsel %vm4014, %v4015, %v4006
    %v4017 = vsel %vm4010, %v4013, %v4016
    %v4018 = vsel %vm4007, nan, %v4017
    %v4019 = vand.u32 2147483647, %v2337
    %vm4020 = vcmp.le.f32.partialorder %v4019, 0.7853982
    %vm4021 = vcmp.lt.s32.totalorder %v2337, 0
    %v4022 = vand.u32 %v2337, 2139095040
    %v4023 = vshrl.u32 %v4022, 23
    %v4024 = vsub.s32 %v4023, 127
    %v4025 = vand.u32 2147483647, %v2337
    %v4026 = vand.u32 %v4025, 8388607
    %v4027 = vor.u32 %v4026, 8388608
    %v4028 = vsub.s32 0, %v4027
    %v4029 = vadd.s32 %v4024, 1
    %vm4030 = vcmp.gt.s32.totalorder %v4029, 0
    %v4031 = vsel %vm4030, %v4029, 0
    %v4032 = vshrl.u32 %v4031, 5
    %v4033 = vand.u32 %v4031, 31
    %v4034 = vsub.s32 32, %v4033
    %v4035 = vshrl.u32 683565275, %v4034
    %v4036 = vshll.u32 683565275, %v4033
    %v4037 = vshrl.u32 2475754826, %v4034
    %v4038 = vor.u32 %v4036, %v4037
    %v4039 = vshll.u32 2475754826, %v4033
    %v4040 = vshrl.u32 2131351028, %v4034
    %v4041 = vor.u32 %v4039, %v4040
    %v4042 = vshll.u32 2131351028, %v4033
    %v4043 = vshrl.u32 2102212464, %v4034
    %v4044 = vor.u32 %v4042, %v4043
    %v4045 = vshll.u32 2102212464, %v4033
    %v4046 = vshrl.u32 920167782, %v4034
    %v4047 = vor.u32 %v4045, %v4046
    %v4048 = vshll.u32 920167782, %v4033
    %v4049 = vshrl.u32 1326507024, %v4034
    %v4050 = vor.u32 %v4048, %v4049
    %vm4051 = vcmp.lt.s32.totalorder %v4032, 1
    %vm4052 = vcmp.lt.s32.totalorder %v4032, 2
    %vm4053 = vcmp.lt.s32.totalorder %v4032, 3
    %vm4054 = vcmp.lt.s32.totalorder %v4032, 4
    %v4055 = vsel %vm4051, %v4035, %v4038
    %v4056 = vsel %vm4054, %v4044, 2102212464
    %v4057 = vsel %vm4053, %v4041, %v4056
    %v4058 = vsel %vm4052, %v4055, %v4057
    %v4059 = vsel %vm4051, %v4038, %v4041
    %v4060 = vsel %vm4054, %v4047, 920167782
    %v4061 = vsel %vm4053, %v4044, %v4060
    %v4062 = vsel %vm4052, %v4059, %v4061
    %v4063 = vsel %vm4051, %v4041, %v4044
    %v4064 = vsel %vm4054, %v4050, 1326507024
    %v4065 = vsel %vm4053, %v4047, %v4064
    %v4066 = vsel %vm4052, %v4063, %v4065
    %v4067 = vshll.u32 %v4027, 8
    %v4068 = vmul.u32.u64.compose %v4067, %v4066
    %v4069 = vextract.low.u32 %v4068
    %v4070 = vextract.high.u32 %v4068
    %v4071 = vmul.u32.u64.compose %v4067, %v4062
    %v4072 = vextract.low.u32 %v4071
    %v4073 = vextract.high.u32 %v4071
    %v4074 = vmul.u32 %v4067, %v4058
    %v4075 = vadd.s32 %v4070, %v4072
    %vm4076 = vc.u32 %v4070, %v4072
    %v4077 = vadd.s32 %v4073, 1
    %v4078 = vsel %vm4076, %v4077, %v4073
    %v4079 = vadd.s32 %v4074, %v4078
    %v4080 = vadd.s32 %v4079, 536870912
    %v4081 = vshrl.u32 %v4080, 30
    %v4082 = vshll.u32 %v4081, 30
    %v4083 = vsub.s32 %v4079, %v4082
    %vm4084 = vcmp.lt.s32.totalorder %v4083, 0
    %v4085 = vsub.s32 0, %v4083
    %v4086 = vsel %vm4084, %v4085, %v4083
    %v4087 = vclz %v4086
    %v4088 = vsub.s32 %v4087, 2
    %vm4089 = vcmp.gt.s32.totalorder 0, %v4088
    %v4090 = vsel %vm4089, 0, %v4088
    %v4091 = vsub.s32 32, %v4090
    %v4092 = vshll.u32 %v4083, %v4090
    %v4093 = vshrl.u32 %v4075, %v4091
    %v4094 = vor.u32 %v4092, %v4093
    %v4095 = vsub.s32 4294967266, %v4090
    %v4096 = vadd.s32 %v4095, 127
    %v4097 = vshll.u32 %v4096, 23
    %v4098 = vor.u32 4788187, %v4097
    %v4099 = vand.u32 2147483647, %v4098
    %v4101 = vcvt.s32.f32 %v4094
    %v4102 = vmul.f32 %v4101, %v4099
    %v4103 = vxor.u32 %v4102, 2147483648
    %v4104 = vsel %vm4021, %v4103, %v4102
    %v4105 = vsub.s32 4, %v4081
    %v4106 = vsel %vm4021, %v4105, %v4081
    %v4107 = vsel %vm4020, %v2337, %v4104
    %v4108 = vsel %vm4020, 0, %v4106
    %v4109 = vcosq.f32.pop %v4107
    %v4110 = vsinq.f32.pop %v4107
    %vm4111 = vweird.f32 %v2337
    %v4112 = vadd.s32 %v4108, 3
    %v4113 = vand.u32 %v4112, 3
    %vm4114 = vcmp.lt.s32.totalorder %v4113, 2
    %vm4115 = vcmp.eq.s32.totalorder %v4113, 0
    %v4116 = vxor.u32 %v4110, 2147483648
    %v4117 = vsel %vm4115, %v4109, %v4116
    %vm4118 = vcmp.eq.s32.totalorder %v4113, 2
    %v4119 = vxor.u32 %v4109, 2147483648
    %v4120 = vsel %vm4118, %v4119, %v4110
    %v4121 = vsel %vm4114, %v4117, %v4120
    %v4122 = vsel %vm4111, nan, %v4121
    %v4123 = vand.u32 2147483647, %v2338
    %vm4124 = vcmp.le.f32.partialorder %v4123, 0.7853982
    %vm4125 = vcmp.lt.s32.totalorder %v2338, 0
    %v4126 = vand.u32 %v2338, 2139095040
    %v4127 = vshrl.u32 %v4126, 23
    %v4128 = vsub.s32 %v4127, 127
    %v4129 = vand.u32 2147483647, %v2338
    %v4130 = vand.u32 %v4129, 8388607
    %v4131 = vor.u32 %v4130, 8388608
    %v4132 = vsub.s32 0, %v4131
    %v4133 = vadd.s32 %v4128, 1
    %vm4134 = vcmp.gt.s32.totalorder %v4133, 0
    %v4135 = vsel %vm4134, %v4133, 0
    %v4136 = vshrl.u32 %v4135, 5
    %v4137 = vand.u32 %v4135, 31
    %v4138 = vsub.s32 32, %v4137
    %v4139 = vshrl.u32 683565275, %v4138
    %v4140 = vshll.u32 683565275, %v4137
    %v4141 = vshrl.u32 2475754826, %v4138
    %v4142 = vor.u32 %v4140, %v4141
    %v4143 = vshll.u32 2475754826, %v4137
    %v4144 = vshrl.u32 2131351028, %v4138
    %v4145 = vor.u32 %v4143, %v4144
    %v4146 = vshll.u32 2131351028, %v4137
    %v4147 = vshrl.u32 2102212464, %v4138
    %v4148 = vor.u32 %v4146, %v4147
    %v4149 = vshll.u32 2102212464, %v4137
    %v4150 = vshrl.u32 920167782, %v4138
    %v4151 = vor.u32 %v4149, %v4150
    %v4152 = vshll.u32 920167782, %v4137
    %v4153 = vshrl.u32 1326507024, %v4138
    %v4154 = vor.u32 %v4152, %v4153
    %vm4155 = vcmp.lt.s32.totalorder %v4136, 1
    %vm4156 = vcmp.lt.s32.totalorder %v4136, 2
    %vm4157 = vcmp.lt.s32.totalorder %v4136, 3
    %vm4158 = vcmp.lt.s32.totalorder %v4136, 4
    %v4159 = vsel %vm4155, %v4139, %v4142
    %v4160 = vsel %vm4158, %v4148, 2102212464
    %v4161 = vsel %vm4157, %v4145, %v4160
    %v4162 = vsel %vm4156, %v4159, %v4161
    %v4163 = vsel %vm4155, %v4142, %v4145
    %v4164 = vsel %vm4158, %v4151, 920167782
    %v4165 = vsel %vm4157, %v4148, %v4164
    %v4166 = vsel %vm4156, %v4163, %v4165
    %v4167 = vsel %vm4155, %v4145, %v4148
    %v4168 = vsel %vm4158, %v4154, 1326507024
    %v4169 = vsel %vm4157, %v4151, %v4168
    %v4170 = vsel %vm4156, %v4167, %v4169
    %v4171 = vshll.u32 %v4131, 8
    %v4172 = vmul.u32.u64.compose %v4171, %v4170
    %v4173 = vextract.low.u32 %v4172
    %v4174 = vextract.high.u32 %v4172
    %v4175 = vmul.u32.u64.compose %v4171, %v4166
    %v4176 = vextract.low.u32 %v4175
    %v4177 = vextract.high.u32 %v4175
    %v4178 = vmul.u32 %v4171, %v4162
    %v4179 = vadd.s32 %v4174, %v4176
    %vm4180 = vc.u32 %v4174, %v4176
    %v4181 = vadd.s32 %v4177, 1
    %v4182 = vsel %vm4180, %v4181, %v4177
    %v4183 = vadd.s32 %v4178, %v4182
    %v4184 = vadd.s32 %v4183, 536870912
    %v4185 = vshrl.u32 %v4184, 30
    %v4186 = vshll.u32 %v4185, 30
    %v4187 = vsub.s32 %v4183, %v4186
    %vm4188 = vcmp.lt.s32.totalorder %v4187, 0
    %v4189 = vsub.s32 0, %v4187
    %v4190 = vsel %vm4188, %v4189, %v4187
    %v4191 = vclz %v4190
    %v4192 = vsub.s32 %v4191, 2
    %vm4193 = vcmp.gt.s32.totalorder 0, %v4192
    %v4194 = vsel %vm4193, 0, %v4192
    %v4195 = vsub.s32 32, %v4194
    %v4196 = vshll.u32 %v4187, %v4194
    %v4197 = vshrl.u32 %v4179, %v4195
    %v4198 = vor.u32 %v4196, %v4197
    %v4199 = vsub.s32 4294967266, %v4194
    %v4200 = vadd.s32 %v4199, 127
    %v4201 = vshll.u32 %v4200, 23
    %v4202 = vor.u32 4788187, %v4201
    %v4203 = vand.u32 2147483647, %v4202
    %v4205 = vcvt.s32.f32 %v4198
    %v4206 = vmul.f32 %v4205, %v4203
    %v4207 = vxor.u32 %v4206, 2147483648
    %v4208 = vsel %vm4125, %v4207, %v4206
    %v4209 = vsub.s32 4, %v4185
    %v4210 = vsel %vm4125, %v4209, %v4185
    %v4211 = vsel %vm4124, %v2338, %v4208
    %v4212 = vsel %vm4124, 0, %v4210
    %v4213 = vcosq.f32.pop %v4211
    %v4214 = vsinq.f32.pop %v4211
    %vm4215 = vweird.f32 %v2338
    %v4216 = vadd.s32 %v4212, 3
    %v4217 = vand.u32 %v4216, 3
    %vm4218 = vcmp.lt.s32.totalorder %v4217, 2
    %vm4219 = vcmp.eq.s32.totalorder %v4217, 0
    %v4220 = vxor.u32 %v4214, 2147483648
    %v4221 = vsel %vm4219, %v4213, %v4220
    %vm4222 = vcmp.eq.s32.totalorder %v4217, 2
    %v4223 = vxor.u32 %v4213, 2147483648
    %v4224 = vsel %vm4222, %v4223, %v4214
    %v4225 = vsel %vm4218, %v4221, %v4224
    %v4226 = vsel %vm4215, nan, %v4225
    %v4227 = vand.u32 2147483647, %v2339
    %vm4228 = vcmp.le.f32.partialorder %v4227, 0.7853982
    %vm4229 = vcmp.lt.s32.totalorder %v2339, 0
    %v4230 = vand.u32 %v2339, 2139095040
    %v4231 = vshrl.u32 %v4230, 23
    %v4232 = vsub.s32 %v4231, 127
    %v4233 = vand.u32 2147483647, %v2339
    %v4234 = vand.u32 %v4233, 8388607
    %v4235 = vor.u32 %v4234, 8388608
    %v4236 = vsub.s32 0, %v4235
    %v4237 = vadd.s32 %v4232, 1
    %vm4238 = vcmp.gt.s32.totalorder %v4237, 0
    %v4239 = vsel %vm4238, %v4237, 0
    %v4240 = vshrl.u32 %v4239, 5
    %v4241 = vand.u32 %v4239, 31
    %v4242 = vsub.s32 32, %v4241
    %v4243 = vshrl.u32 683565275, %v4242
    %v4244 = vshll.u32 683565275, %v4241
    %v4245 = vshrl.u32 2475754826, %v4242
    %v4246 = vor.u32 %v4244, %v4245
    %v4247 = vshll.u32 2475754826, %v4241
    %v4248 = vshrl.u32 2131351028, %v4242
    %v4249 = vor.u32 %v4247, %v4248
    %v4250 = vshll.u32 2131351028, %v4241
    %v4251 = vshrl.u32 2102212464, %v4242
    %v4252 = vor.u32 %v4250, %v4251
    %v4253 = vshll.u32 2102212464, %v4241
    %v4254 = vshrl.u32 920167782, %v4242
    %v4255 = vor.u32 %v4253, %v4254
    %v4256 = vshll.u32 920167782, %v4241
    %v4257 = vshrl.u32 1326507024, %v4242
    %v4258 = vor.u32 %v4256, %v4257
    %vm4259 = vcmp.lt.s32.totalorder %v4240, 1
    %vm4260 = vcmp.lt.s32.totalorder %v4240, 2
    %vm4261 = vcmp.lt.s32.totalorder %v4240, 3
    %vm4262 = vcmp.lt.s32.totalorder %v4240, 4
    %v4263 = vsel %vm4259, %v4243, %v4246
    %v4264 = vsel %vm4262, %v4252, 2102212464
    %v4265 = vsel %vm4261, %v4249, %v4264
    %v4266 = vsel %vm4260, %v4263, %v4265
    %v4267 = vsel %vm4259, %v4246, %v4249
    %v4268 = vsel %vm4262, %v4255, 920167782
    %v4269 = vsel %vm4261, %v4252, %v4268
    %v4270 = vsel %vm4260, %v4267, %v4269
    %v4271 = vsel %vm4259, %v4249, %v4252
    %v4272 = vsel %vm4262, %v4258, 1326507024
    %v4273 = vsel %vm4261, %v4255, %v4272
    %v4274 = vsel %vm4260, %v4271, %v4273
    %v4275 = vshll.u32 %v4235, 8
    %v4276 = vmul.u32.u64.compose %v4275, %v4274
    %v4277 = vextract.low.u32 %v4276
    %v4278 = vextract.high.u32 %v4276
    %v4279 = vmul.u32.u64.compose %v4275, %v4270
    %v4280 = vextract.low.u32 %v4279
    %v4281 = vextract.high.u32 %v4279
    %v4282 = vmul.u32 %v4275, %v4266
    %v4283 = vadd.s32 %v4278, %v4280
    %vm4284 = vc.u32 %v4278, %v4280
    %v4285 = vadd.s32 %v4281, 1
    %v4286 = vsel %vm4284, %v4285, %v4281
    %v4287 = vadd.s32 %v4282, %v4286
    %v4288 = vadd.s32 %v4287, 536870912
    %v4289 = vshrl.u32 %v4288, 30
    %v4290 = vshll.u32 %v4289, 30
    %v4291 = vsub.s32 %v4287, %v4290
    %vm4292 = vcmp.lt.s32.totalorder %v4291, 0
    %v4293 = vsub.s32 0, %v4291
    %v4294 = vsel %vm4292, %v4293, %v4291
    %v4295 = vclz %v4294
    %v4296 = vsub.s32 %v4295, 2
    %vm4297 = vcmp.gt.s32.totalorder 0, %v4296
    %v4298 = vsel %vm4297, 0, %v4296
    %v4299 = vsub.s32 32, %v4298
    %v4300 = vshll.u32 %v4291, %v4298
    %v4301 = vshrl.u32 %v4283, %v4299
    %v4302 = vor.u32 %v4300, %v4301
    %v4303 = vsub.s32 4294967266, %v4298
    %v4304 = vadd.s32 %v4303, 127
    %v4305 = vshll.u32 %v4304, 23
    %v4306 = vor.u32 4788187, %v4305
    %v4307 = vand.u32 2147483647, %v4306
    %v4309 = vcvt.s32.f32 %v4302
    %v4310 = vmul.f32 %v4309, %v4307
    %v4311 = vxor.u32 %v4310, 2147483648
    %v4312 = vsel %vm4229, %v4311, %v4310
    %v4313 = vsub.s32 4, %v4289
    %v4314 = vsel %vm4229, %v4313, %v4289
    %v4315 = vsel %vm4228, %v2339, %v4312
    %v4316 = vsel %vm4228, 0, %v4314
    %v4317 = vcosq.f32.pop %v4315
    %v4318 = vsinq.f32.pop %v4315
    %vm4319 = vweird.f32 %v2339
    %v4320 = vadd.s32 %v4316, 3
    %v4321 = vand.u32 %v4320, 3
    %vm4322 = vcmp.lt.s32.totalorder %v4321, 2
    %vm4323 = vcmp.eq.s32.totalorder %v4321, 0
    %v4324 = vxor.u32 %v4318, 2147483648
    %v4325 = vsel %vm4323, %v4317, %v4324
    %vm4326 = vcmp.eq.s32.totalorder %v4321, 2
    %v4327 = vxor.u32 %v4317, 2147483648
    %v4328 = vsel %vm4326, %v4327, %v4318
    %v4329 = vsel %vm4322, %v4325, %v4328
    %v4330 = vsel %vm4319, nan, %v4329
    %v4331 = vand.u32 2147483647, %v2340
    %vm4332 = vcmp.le.f32.partialorder %v4331, 0.7853982
    %vm4333 = vcmp.lt.s32.totalorder %v2340, 0
    %v4334 = vand.u32 %v2340, 2139095040
    %v4335 = vshrl.u32 %v4334, 23
    %v4336 = vsub.s32 %v4335, 127
    %v4337 = vand.u32 2147483647, %v2340
    %v4338 = vand.u32 %v4337, 8388607
    %v4339 = vor.u32 %v4338, 8388608
    %v4340 = vsub.s32 0, %v4339
    %v4341 = vadd.s32 %v4336, 1
    %vm4342 = vcmp.gt.s32.totalorder %v4341, 0
    %v4343 = vsel %vm4342, %v4341, 0
    %v4344 = vshrl.u32 %v4343, 5
    %v4345 = vand.u32 %v4343, 31
    %v4346 = vsub.s32 32, %v4345
    %v4347 = vshrl.u32 683565275, %v4346
    %v4348 = vshll.u32 683565275, %v4345
    %v4349 = vshrl.u32 2475754826, %v4346
    %v4350 = vor.u32 %v4348, %v4349
    %v4351 = vshll.u32 2475754826, %v4345
    %v4352 = vshrl.u32 2131351028, %v4346
    %v4353 = vor.u32 %v4351, %v4352
    %v4354 = vshll.u32 2131351028, %v4345
    %v4355 = vshrl.u32 2102212464, %v4346
    %v4356 = vor.u32 %v4354, %v4355
    %v4357 = vshll.u32 2102212464, %v4345
    %v4358 = vshrl.u32 920167782, %v4346
    %v4359 = vor.u32 %v4357, %v4358
    %v4360 = vshll.u32 920167782, %v4345
    %v4361 = vshrl.u32 1326507024, %v4346
    %v4362 = vor.u32 %v4360, %v4361
    %vm4363 = vcmp.lt.s32.totalorder %v4344, 1
    %vm4364 = vcmp.lt.s32.totalorder %v4344, 2
    %vm4365 = vcmp.lt.s32.totalorder %v4344, 3
    %vm4366 = vcmp.lt.s32.totalorder %v4344, 4
    %v4367 = vsel %vm4363, %v4347, %v4350
    %v4368 = vsel %vm4366, %v4356, 2102212464
    %v4369 = vsel %vm4365, %v4353, %v4368
    %v4370 = vsel %vm4364, %v4367, %v4369
    %v4371 = vsel %vm4363, %v4350, %v4353
    %v4372 = vsel %vm4366, %v4359, 920167782
    %v4373 = vsel %vm4365, %v4356, %v4372
    %v4374 = vsel %vm4364, %v4371, %v4373
    %v4375 = vsel %vm4363, %v4353, %v4356
    %v4376 = vsel %vm4366, %v4362, 1326507024
    %v4377 = vsel %vm4365, %v4359, %v4376
    %v4378 = vsel %vm4364, %v4375, %v4377
    %v4379 = vshll.u32 %v4339, 8
    %v4380 = vmul.u32.u64.compose %v4379, %v4378
    %v4381 = vextract.low.u32 %v4380
    %v4382 = vextract.high.u32 %v4380
    %v4383 = vmul.u32.u64.compose %v4379, %v4374
    %v4384 = vextract.low.u32 %v4383
    %v4385 = vextract.high.u32 %v4383
    %v4386 = vmul.u32 %v4379, %v4370
    %v4387 = vadd.s32 %v4382, %v4384
    %vm4388 = vc.u32 %v4382, %v4384
    %v4389 = vadd.s32 %v4385, 1
    %v4390 = vsel %vm4388, %v4389, %v4385
    %v4391 = vadd.s32 %v4386, %v4390
    %v4392 = vadd.s32 %v4391, 536870912
    %v4393 = vshrl.u32 %v4392, 30
    %v4394 = vshll.u32 %v4393, 30
    %v4395 = vsub.s32 %v4391, %v4394
    %vm4396 = vcmp.lt.s32.totalorder %v4395, 0
    %v4397 = vsub.s32 0, %v4395
    %v4398 = vsel %vm4396, %v4397, %v4395
    %v4399 = vclz %v4398
    %v4400 = vsub.s32 %v4399, 2
    %vm4401 = vcmp.gt.s32.totalorder 0, %v4400
    %v4402 = vsel %vm4401, 0, %v4400
    %v4403 = vsub.s32 32, %v4402
    %v4404 = vshll.u32 %v4395, %v4402
    %v4405 = vshrl.u32 %v4387, %v4403
    %v4406 = vor.u32 %v4404, %v4405
    %v4407 = vsub.s32 4294967266, %v4402
    %v4408 = vadd.s32 %v4407, 127
    %v4409 = vshll.u32 %v4408, 23
    %v4410 = vor.u32 4788187, %v4409
    %v4411 = vand.u32 2147483647, %v4410
    %v4413 = vcvt.s32.f32 %v4406
    %v4414 = vmul.f32 %v4413, %v4411
    %v4415 = vxor.u32 %v4414, 2147483648
    %v4416 = vsel %vm4333, %v4415, %v4414
    %v4417 = vsub.s32 4, %v4393
    %v4418 = vsel %vm4333, %v4417, %v4393
    %v4419 = vsel %vm4332, %v2340, %v4416
    %v4420 = vsel %vm4332, 0, %v4418
    %v4421 = vcosq.f32.pop %v4419
    %v4422 = vsinq.f32.pop %v4419
    %vm4423 = vweird.f32 %v2340
    %v4424 = vadd.s32 %v4420, 3
    %v4425 = vand.u32 %v4424, 3
    %vm4426 = vcmp.lt.s32.totalorder %v4425, 2
    %vm4427 = vcmp.eq.s32.totalorder %v4425, 0
    %v4428 = vxor.u32 %v4422, 2147483648
    %v4429 = vsel %vm4427, %v4421, %v4428
    %vm4430 = vcmp.eq.s32.totalorder %v4425, 2
    %v4431 = vxor.u32 %v4421, 2147483648
    %v4432 = vsel %vm4430, %v4431, %v4422
    %v4433 = vsel %vm4426, %v4429, %v4432
    %v4434 = vsel %vm4423, nan, %v4433
    %v4435 = vand.u32 2147483647, %v2341
    %vm4436 = vcmp.le.f32.partialorder %v4435, 0.7853982
    %vm4437 = vcmp.lt.s32.totalorder %v2341, 0
    %v4438 = vand.u32 %v2341, 2139095040
    %v4439 = vshrl.u32 %v4438, 23
    %v4440 = vsub.s32 %v4439, 127
    %v4441 = vand.u32 2147483647, %v2341
    %v4442 = vand.u32 %v4441, 8388607
    %v4443 = vor.u32 %v4442, 8388608
    %v4444 = vsub.s32 0, %v4443
    %v4445 = vadd.s32 %v4440, 1
    %vm4446 = vcmp.gt.s32.totalorder %v4445, 0
    %v4447 = vsel %vm4446, %v4445, 0
    %v4448 = vshrl.u32 %v4447, 5
    %v4449 = vand.u32 %v4447, 31
    %v4450 = vsub.s32 32, %v4449
    %v4451 = vshrl.u32 683565275, %v4450
    %v4452 = vshll.u32 683565275, %v4449
    %v4453 = vshrl.u32 2475754826, %v4450
    %v4454 = vor.u32 %v4452, %v4453
    %v4455 = vshll.u32 2475754826, %v4449
    %v4456 = vshrl.u32 2131351028, %v4450
    %v4457 = vor.u32 %v4455, %v4456
    %v4458 = vshll.u32 2131351028, %v4449
    %v4459 = vshrl.u32 2102212464, %v4450
    %v4460 = vor.u32 %v4458, %v4459
    %v4461 = vshll.u32 2102212464, %v4449
    %v4462 = vshrl.u32 920167782, %v4450
    %v4463 = vor.u32 %v4461, %v4462
    %v4464 = vshll.u32 920167782, %v4449
    %v4465 = vshrl.u32 1326507024, %v4450
    %v4466 = vor.u32 %v4464, %v4465
    %vm4467 = vcmp.lt.s32.totalorder %v4448, 1
    %vm4468 = vcmp.lt.s32.totalorder %v4448, 2
    %vm4469 = vcmp.lt.s32.totalorder %v4448, 3
    %vm4470 = vcmp.lt.s32.totalorder %v4448, 4
    %v4471 = vsel %vm4467, %v4451, %v4454
    %v4472 = vsel %vm4470, %v4460, 2102212464
    %v4473 = vsel %vm4469, %v4457, %v4472
    %v4474 = vsel %vm4468, %v4471, %v4473
    %v4475 = vsel %vm4467, %v4454, %v4457
    %v4476 = vsel %vm4470, %v4463, 920167782
    %v4477 = vsel %vm4469, %v4460, %v4476
    %v4478 = vsel %vm4468, %v4475, %v4477
    %v4479 = vsel %vm4467, %v4457, %v4460
    %v4480 = vsel %vm4470, %v4466, 1326507024
    %v4481 = vsel %vm4469, %v4463, %v4480
    %v4482 = vsel %vm4468, %v4479, %v4481
    %v4483 = vshll.u32 %v4443, 8
    %v4484 = vmul.u32.u64.compose %v4483, %v4482
    %v4485 = vextract.low.u32 %v4484
    %v4486 = vextract.high.u32 %v4484
    %v4487 = vmul.u32.u64.compose %v4483, %v4478
    %v4488 = vextract.low.u32 %v4487
    %v4489 = vextract.high.u32 %v4487
    %v4490 = vmul.u32 %v4483, %v4474
    %v4491 = vadd.s32 %v4486, %v4488
    %vm4492 = vc.u32 %v4486, %v4488
    %v4493 = vadd.s32 %v4489, 1
    %v4494 = vsel %vm4492, %v4493, %v4489
    %v4495 = vadd.s32 %v4490, %v4494
    %v4496 = vadd.s32 %v4495, 536870912
    %v4497 = vshrl.u32 %v4496, 30
    %v4498 = vshll.u32 %v4497, 30
    %v4499 = vsub.s32 %v4495, %v4498
    %vm4500 = vcmp.lt.s32.totalorder %v4499, 0
    %v4501 = vsub.s32 0, %v4499
    %v4502 = vsel %vm4500, %v4501, %v4499
    %v4503 = vclz %v4502
    %v4504 = vsub.s32 %v4503, 2
    %vm4505 = vcmp.gt.s32.totalorder 0, %v4504
    %v4506 = vsel %vm4505, 0, %v4504
    %v4507 = vsub.s32 32, %v4506
    %v4508 = vshll.u32 %v4499, %v4506
    %v4509 = vshrl.u32 %v4491, %v4507
    %v4510 = vor.u32 %v4508, %v4509
    %v4511 = vsub.s32 4294967266, %v4506
    %v4512 = vadd.s32 %v4511, 127
    %v4513 = vshll.u32 %v4512, 23
    %v4514 = vor.u32 4788187, %v4513
    %v4515 = vand.u32 2147483647, %v4514
    %v4517 = vcvt.s32.f32 %v4510
    %v4518 = vmul.f32 %v4517, %v4515
    %v4519 = vxor.u32 %v4518, 2147483648
    %v4520 = vsel %vm4437, %v4519, %v4518
    %v4521 = vsub.s32 4, %v4497
    %v4522 = vsel %vm4437, %v4521, %v4497
    %v4523 = vsel %vm4436, %v2341, %v4520
    %v4524 = vsel %vm4436, 0, %v4522
    %v4525 = vcosq.f32.pop %v4523
    %v4526 = vsinq.f32.pop %v4523
    %vm4527 = vweird.f32 %v2341
    %v4528 = vadd.s32 %v4524, 3
    %v4529 = vand.u32 %v4528, 3
    %vm4530 = vcmp.lt.s32.totalorder %v4529, 2
    %vm4531 = vcmp.eq.s32.totalorder %v4529, 0
    %v4532 = vxor.u32 %v4526, 2147483648
    %v4533 = vsel %vm4531, %v4525, %v4532
    %vm4534 = vcmp.eq.s32.totalorder %v4529, 2
    %v4535 = vxor.u32 %v4525, 2147483648
    %v4536 = vsel %vm4534, %v4535, %v4526
    %v4537 = vsel %vm4530, %v4533, %v4536
    %v4538 = vsel %vm4527, nan, %v4537
    %v4539 = vand.u32 2147483647, %v2342
    %vm4540 = vcmp.le.f32.partialorder %v4539, 0.7853982
    %vm4541 = vcmp.lt.s32.totalorder %v2342, 0
    %v4542 = vand.u32 %v2342, 2139095040
    %v4543 = vshrl.u32 %v4542, 23
    %v4544 = vsub.s32 %v4543, 127
    %v4545 = vand.u32 2147483647, %v2342
    %v4546 = vand.u32 %v4545, 8388607
    %v4547 = vor.u32 %v4546, 8388608
    %v4548 = vsub.s32 0, %v4547
    %v4549 = vadd.s32 %v4544, 1
    %vm4550 = vcmp.gt.s32.totalorder %v4549, 0
    %v4551 = vsel %vm4550, %v4549, 0
    %v4552 = vshrl.u32 %v4551, 5
    %v4553 = vand.u32 %v4551, 31
    %v4554 = vsub.s32 32, %v4553
    %v4555 = vshrl.u32 683565275, %v4554
    %v4556 = vshll.u32 683565275, %v4553
    %v4557 = vshrl.u32 2475754826, %v4554
    %v4558 = vor.u32 %v4556, %v4557
    %v4559 = vshll.u32 2475754826, %v4553
    %v4560 = vshrl.u32 2131351028, %v4554
    %v4561 = vor.u32 %v4559, %v4560
    %v4562 = vshll.u32 2131351028, %v4553
    %v4563 = vshrl.u32 2102212464, %v4554
    %v4564 = vor.u32 %v4562, %v4563
    %v4565 = vshll.u32 2102212464, %v4553
    %v4566 = vshrl.u32 920167782, %v4554
    %v4567 = vor.u32 %v4565, %v4566
    %v4568 = vshll.u32 920167782, %v4553
    %v4569 = vshrl.u32 1326507024, %v4554
    %v4570 = vor.u32 %v4568, %v4569
    %vm4571 = vcmp.lt.s32.totalorder %v4552, 1
    %vm4572 = vcmp.lt.s32.totalorder %v4552, 2
    %vm4573 = vcmp.lt.s32.totalorder %v4552, 3
    %vm4574 = vcmp.lt.s32.totalorder %v4552, 4
    %v4575 = vsel %vm4571, %v4555, %v4558
    %v4576 = vsel %vm4574, %v4564, 2102212464
    %v4577 = vsel %vm4573, %v4561, %v4576
    %v4578 = vsel %vm4572, %v4575, %v4577
    %v4579 = vsel %vm4571, %v4558, %v4561
    %v4580 = vsel %vm4574, %v4567, 920167782
    %v4581 = vsel %vm4573, %v4564, %v4580
    %v4582 = vsel %vm4572, %v4579, %v4581
    %v4583 = vsel %vm4571, %v4561, %v4564
    %v4584 = vsel %vm4574, %v4570, 1326507024
    %v4585 = vsel %vm4573, %v4567, %v4584
    %v4586 = vsel %vm4572, %v4583, %v4585
    %v4587 = vshll.u32 %v4547, 8
    %v4588 = vmul.u32.u64.compose %v4587, %v4586
    %v4589 = vextract.low.u32 %v4588
    %v4590 = vextract.high.u32 %v4588
    %v4591 = vmul.u32.u64.compose %v4587, %v4582
    %v4592 = vextract.low.u32 %v4591
    %v4593 = vextract.high.u32 %v4591
    %v4594 = vmul.u32 %v4587, %v4578
    %v4595 = vadd.s32 %v4590, %v4592
    %vm4596 = vc.u32 %v4590, %v4592
    %v4597 = vadd.s32 %v4593, 1
    %v4598 = vsel %vm4596, %v4597, %v4593
    %v4599 = vadd.s32 %v4594, %v4598
    %v4600 = vadd.s32 %v4599, 536870912
    %v4601 = vshrl.u32 %v4600, 30
    %v4602 = vshll.u32 %v4601, 30
    %v4603 = vsub.s32 %v4599, %v4602
    %vm4604 = vcmp.lt.s32.totalorder %v4603, 0
    %v4605 = vsub.s32 0, %v4603
    %v4606 = vsel %vm4604, %v4605, %v4603
    %v4607 = vclz %v4606
    %v4608 = vsub.s32 %v4607, 2
    %vm4609 = vcmp.gt.s32.totalorder 0, %v4608
    %v4610 = vsel %vm4609, 0, %v4608
    %v4611 = vsub.s32 32, %v4610
    %v4612 = vshll.u32 %v4603, %v4610
    %v4613 = vshrl.u32 %v4595, %v4611
    %v4614 = vor.u32 %v4612, %v4613
    %v4615 = vsub.s32 4294967266, %v4610
    %v4616 = vadd.s32 %v4615, 127
    %v4617 = vshll.u32 %v4616, 23
    %v4618 = vor.u32 4788187, %v4617
    %v4619 = vand.u32 2147483647, %v4618
    %v4621 = vcvt.s32.f32 %v4614
    %v4622 = vmul.f32 %v4621, %v4619
    %v4623 = vxor.u32 %v4622, 2147483648
    %v4624 = vsel %vm4541, %v4623, %v4622
    %v4625 = vsub.s32 4, %v4601
    %v4626 = vsel %vm4541, %v4625, %v4601
    %v4627 = vsel %vm4540, %v2342, %v4624
    %v4628 = vsel %vm4540, 0, %v4626
    %v4629 = vcosq.f32.pop %v4627
    %v4630 = vsinq.f32.pop %v4627
    %vm4631 = vweird.f32 %v2342
    %v4632 = vadd.s32 %v4628, 3
    %v4633 = vand.u32 %v4632, 3
    %vm4634 = vcmp.lt.s32.totalorder %v4633, 2
    %vm4635 = vcmp.eq.s32.totalorder %v4633, 0
    %v4636 = vxor.u32 %v4630, 2147483648
    %v4637 = vsel %vm4635, %v4629, %v4636
    %vm4638 = vcmp.eq.s32.totalorder %v4633, 2
    %v4639 = vxor.u32 %v4629, 2147483648
    %v4640 = vsel %vm4638, %v4639, %v4630
    %v4641 = vsel %vm4634, %v4637, %v4640
    %v4642 = vsel %vm4631, nan, %v4641
    %v4643 = vand.u32 2147483647, %v2343
    %vm4644 = vcmp.le.f32.partialorder %v4643, 0.7853982
    %vm4645 = vcmp.lt.s32.totalorder %v2343, 0
    %v4646 = vand.u32 %v2343, 2139095040
    %v4647 = vshrl.u32 %v4646, 23
    %v4648 = vsub.s32 %v4647, 127
    %v4649 = vand.u32 2147483647, %v2343
    %v4650 = vand.u32 %v4649, 8388607
    %v4651 = vor.u32 %v4650, 8388608
    %v4652 = vsub.s32 0, %v4651
    %v4653 = vadd.s32 %v4648, 1
    %vm4654 = vcmp.gt.s32.totalorder %v4653, 0
    %v4655 = vsel %vm4654, %v4653, 0
    %v4656 = vshrl.u32 %v4655, 5
    %v4657 = vand.u32 %v4655, 31
    %v4658 = vsub.s32 32, %v4657
    %v4659 = vshrl.u32 683565275, %v4658
    %v4660 = vshll.u32 683565275, %v4657
    %v4661 = vshrl.u32 2475754826, %v4658
    %v4662 = vor.u32 %v4660, %v4661
    %v4663 = vshll.u32 2475754826, %v4657
    %v4664 = vshrl.u32 2131351028, %v4658
    %v4665 = vor.u32 %v4663, %v4664
    %v4666 = vshll.u32 2131351028, %v4657
    %v4667 = vshrl.u32 2102212464, %v4658
    %v4668 = vor.u32 %v4666, %v4667
    %v4669 = vshll.u32 2102212464, %v4657
    %v4670 = vshrl.u32 920167782, %v4658
    %v4671 = vor.u32 %v4669, %v4670
    %v4672 = vshll.u32 920167782, %v4657
    %v4673 = vshrl.u32 1326507024, %v4658
    %v4674 = vor.u32 %v4672, %v4673
    %vm4675 = vcmp.lt.s32.totalorder %v4656, 1
    %vm4676 = vcmp.lt.s32.totalorder %v4656, 2
    %vm4677 = vcmp.lt.s32.totalorder %v4656, 3
    %vm4678 = vcmp.lt.s32.totalorder %v4656, 4
    %v4679 = vsel %vm4675, %v4659, %v4662
    %v4680 = vsel %vm4678, %v4668, 2102212464
    %v4681 = vsel %vm4677, %v4665, %v4680
    %v4682 = vsel %vm4676, %v4679, %v4681
    %v4683 = vsel %vm4675, %v4662, %v4665
    %v4684 = vsel %vm4678, %v4671, 920167782
    %v4685 = vsel %vm4677, %v4668, %v4684
    %v4686 = vsel %vm4676, %v4683, %v4685
    %v4687 = vsel %vm4675, %v4665, %v4668
    %v4688 = vsel %vm4678, %v4674, 1326507024
    %v4689 = vsel %vm4677, %v4671, %v4688
    %v4690 = vsel %vm4676, %v4687, %v4689
    %v4691 = vshll.u32 %v4651, 8
    %v4692 = vmul.u32.u64.compose %v4691, %v4690
    %v4693 = vextract.low.u32 %v4692
    %v4694 = vextract.high.u32 %v4692
    %v4695 = vmul.u32.u64.compose %v4691, %v4686
    %v4696 = vextract.low.u32 %v4695
    %v4697 = vextract.high.u32 %v4695
    %v4698 = vmul.u32 %v4691, %v4682
    %v4699 = vadd.s32 %v4694, %v4696
    %vm4700 = vc.u32 %v4694, %v4696
    %v4701 = vadd.s32 %v4697, 1
    %v4702 = vsel %vm4700, %v4701, %v4697
    %v4703 = vadd.s32 %v4698, %v4702
    %v4704 = vadd.s32 %v4703, 536870912
    %v4705 = vshrl.u32 %v4704, 30
    %v4706 = vshll.u32 %v4705, 30
    %v4707 = vsub.s32 %v4703, %v4706
    %vm4708 = vcmp.lt.s32.totalorder %v4707, 0
    %v4709 = vsub.s32 0, %v4707
    %v4710 = vsel %vm4708, %v4709, %v4707
    %v4711 = vclz %v4710
    %v4712 = vsub.s32 %v4711, 2
    %vm4713 = vcmp.gt.s32.totalorder 0, %v4712
    %v4714 = vsel %vm4713, 0, %v4712
    %v4715 = vsub.s32 32, %v4714
    %v4716 = vshll.u32 %v4707, %v4714
    %v4717 = vshrl.u32 %v4699, %v4715
    %v4718 = vor.u32 %v4716, %v4717
    %v4719 = vsub.s32 4294967266, %v4714
    %v4720 = vadd.s32 %v4719, 127
    %v4721 = vshll.u32 %v4720, 23
    %v4722 = vor.u32 4788187, %v4721
    %v4723 = vand.u32 2147483647, %v4722
    %v4725 = vcvt.s32.f32 %v4718
    %v4726 = vmul.f32 %v4725, %v4723
    %v4727 = vxor.u32 %v4726, 2147483648
    %v4728 = vsel %vm4645, %v4727, %v4726
    %v4729 = vsub.s32 4, %v4705
    %v4730 = vsel %vm4645, %v4729, %v4705
    %v4731 = vsel %vm4644, %v2343, %v4728
    %v4732 = vsel %vm4644, 0, %v4730
    %v4733 = vcosq.f32.pop %v4731
    %v4734 = vsinq.f32.pop %v4731
    %vm4735 = vweird.f32 %v2343
    %v4736 = vadd.s32 %v4732, 3
    %v4737 = vand.u32 %v4736, 3
    %vm4738 = vcmp.lt.s32.totalorder %v4737, 2
    %vm4739 = vcmp.eq.s32.totalorder %v4737, 0
    %v4740 = vxor.u32 %v4734, 2147483648
    %v4741 = vsel %vm4739, %v4733, %v4740
    %vm4742 = vcmp.eq.s32.totalorder %v4737, 2
    %v4743 = vxor.u32 %v4733, 2147483648
    %v4744 = vsel %vm4742, %v4743, %v4734
    %v4745 = vsel %vm4738, %v4741, %v4744
    %v4746 = vsel %vm4735, nan, %v4745
    %v4747 = vand.u32 2147483647, %v2344
    %vm4748 = vcmp.le.f32.partialorder %v4747, 0.7853982
    %vm4749 = vcmp.lt.s32.totalorder %v2344, 0
    %v4750 = vand.u32 %v2344, 2139095040
    %v4751 = vshrl.u32 %v4750, 23
    %v4752 = vsub.s32 %v4751, 127
    %v4753 = vand.u32 2147483647, %v2344
    %v4754 = vand.u32 %v4753, 8388607
    %v4755 = vor.u32 %v4754, 8388608
    %v4756 = vsub.s32 0, %v4755
    %v4757 = vadd.s32 %v4752, 1
    %vm4758 = vcmp.gt.s32.totalorder %v4757, 0
    %v4759 = vsel %vm4758, %v4757, 0
    %v4760 = vshrl.u32 %v4759, 5
    %v4761 = vand.u32 %v4759, 31
    %v4762 = vsub.s32 32, %v4761
    %v4763 = vshrl.u32 683565275, %v4762
    %v4764 = vshll.u32 683565275, %v4761
    %v4765 = vshrl.u32 2475754826, %v4762
    %v4766 = vor.u32 %v4764, %v4765
    %v4767 = vshll.u32 2475754826, %v4761
    %v4768 = vshrl.u32 2131351028, %v4762
    %v4769 = vor.u32 %v4767, %v4768
    %v4770 = vshll.u32 2131351028, %v4761
    %v4771 = vshrl.u32 2102212464, %v4762
    %v4772 = vor.u32 %v4770, %v4771
    %v4773 = vshll.u32 2102212464, %v4761
    %v4774 = vshrl.u32 920167782, %v4762
    %v4775 = vor.u32 %v4773, %v4774
    %v4776 = vshll.u32 920167782, %v4761
    %v4777 = vshrl.u32 1326507024, %v4762
    %v4778 = vor.u32 %v4776, %v4777
    %vm4779 = vcmp.lt.s32.totalorder %v4760, 1
    %vm4780 = vcmp.lt.s32.totalorder %v4760, 2
    %vm4781 = vcmp.lt.s32.totalorder %v4760, 3
    %vm4782 = vcmp.lt.s32.totalorder %v4760, 4
    %v4783 = vsel %vm4779, %v4763, %v4766
    %v4784 = vsel %vm4782, %v4772, 2102212464
    %v4785 = vsel %vm4781, %v4769, %v4784
    %v4786 = vsel %vm4780, %v4783, %v4785
    %v4787 = vsel %vm4779, %v4766, %v4769
    %v4788 = vsel %vm4782, %v4775, 920167782
    %v4789 = vsel %vm4781, %v4772, %v4788
    %v4790 = vsel %vm4780, %v4787, %v4789
    %v4791 = vsel %vm4779, %v4769, %v4772
    %v4792 = vsel %vm4782, %v4778, 1326507024
    %v4793 = vsel %vm4781, %v4775, %v4792
    %v4794 = vsel %vm4780, %v4791, %v4793
    %v4795 = vshll.u32 %v4755, 8
    %v4796 = vmul.u32.u64.compose %v4795, %v4794
    %v4797 = vextract.low.u32 %v4796
    %v4798 = vextract.high.u32 %v4796
    %v4799 = vmul.u32.u64.compose %v4795, %v4790
    %v4800 = vextract.low.u32 %v4799
    %v4801 = vextract.high.u32 %v4799
    %v4802 = vmul.u32 %v4795, %v4786
    %v4803 = vadd.s32 %v4798, %v4800
    %vm4804 = vc.u32 %v4798, %v4800
    %v4805 = vadd.s32 %v4801, 1
    %v4806 = vsel %vm4804, %v4805, %v4801
    %v4807 = vadd.s32 %v4802, %v4806
    %v4808 = vadd.s32 %v4807, 536870912
    %v4809 = vshrl.u32 %v4808, 30
    %v4810 = vshll.u32 %v4809, 30
    %v4811 = vsub.s32 %v4807, %v4810
    %vm4812 = vcmp.lt.s32.totalorder %v4811, 0
    %v4813 = vsub.s32 0, %v4811
    %v4814 = vsel %vm4812, %v4813, %v4811
    %v4815 = vclz %v4814
    %v4816 = vsub.s32 %v4815, 2
    %vm4817 = vcmp.gt.s32.totalorder 0, %v4816
    %v4818 = vsel %vm4817, 0, %v4816
    %v4819 = vsub.s32 32, %v4818
    %v4820 = vshll.u32 %v4811, %v4818
    %v4821 = vshrl.u32 %v4803, %v4819
    %v4822 = vor.u32 %v4820, %v4821
    %v4823 = vsub.s32 4294967266, %v4818
    %v4824 = vadd.s32 %v4823, 127
    %v4825 = vshll.u32 %v4824, 23
    %v4826 = vor.u32 4788187, %v4825
    %v4827 = vand.u32 2147483647, %v4826
    %v4829 = vcvt.s32.f32 %v4822
    %v4830 = vmul.f32 %v4829, %v4827
    %v4831 = vxor.u32 %v4830, 2147483648
    %v4832 = vsel %vm4749, %v4831, %v4830
    %v4833 = vsub.s32 4, %v4809
    %v4834 = vsel %vm4749, %v4833, %v4809
    %v4835 = vsel %vm4748, %v2344, %v4832
    %v4836 = vsel %vm4748, 0, %v4834
    %v4837 = vcosq.f32.pop %v4835
    %v4838 = vsinq.f32.pop %v4835
    %vm4839 = vweird.f32 %v2344
    %v4840 = vadd.s32 %v4836, 3
    %v4841 = vand.u32 %v4840, 3
    %vm4842 = vcmp.lt.s32.totalorder %v4841, 2
    %vm4843 = vcmp.eq.s32.totalorder %v4841, 0
    %v4844 = vxor.u32 %v4838, 2147483648
    %v4845 = vsel %vm4843, %v4837, %v4844
    %vm4846 = vcmp.eq.s32.totalorder %v4841, 2
    %v4847 = vxor.u32 %v4837, 2147483648
    %v4848 = vsel %vm4846, %v4847, %v4838
    %v4849 = vsel %vm4842, %v4845, %v4848
    %v4850 = vsel %vm4839, nan, %v4849
    %v4851 = vand.u32 2147483647, %v2345
    %vm4852 = vcmp.le.f32.partialorder %v4851, 0.7853982
    %vm4853 = vcmp.lt.s32.totalorder %v2345, 0
    %v4854 = vand.u32 %v2345, 2139095040
    %v4855 = vshrl.u32 %v4854, 23
    %v4856 = vsub.s32 %v4855, 127
    %v4857 = vand.u32 2147483647, %v2345
    %v4858 = vand.u32 %v4857, 8388607
    %v4859 = vor.u32 %v4858, 8388608
    %v4860 = vsub.s32 0, %v4859
    %v4861 = vadd.s32 %v4856, 1
    %vm4862 = vcmp.gt.s32.totalorder %v4861, 0
    %v4863 = vsel %vm4862, %v4861, 0
    %v4864 = vshrl.u32 %v4863, 5
    %v4865 = vand.u32 %v4863, 31
    %v4866 = vsub.s32 32, %v4865
    %v4867 = vshrl.u32 683565275, %v4866
    %v4868 = vshll.u32 683565275, %v4865
    %v4869 = vshrl.u32 2475754826, %v4866
    %v4870 = vor.u32 %v4868, %v4869
    %v4871 = vshll.u32 2475754826, %v4865
    %v4872 = vshrl.u32 2131351028, %v4866
    %v4873 = vor.u32 %v4871, %v4872
    %v4874 = vshll.u32 2131351028, %v4865
    %v4875 = vshrl.u32 2102212464, %v4866
    %v4876 = vor.u32 %v4874, %v4875
    %v4877 = vshll.u32 2102212464, %v4865
    %v4878 = vshrl.u32 920167782, %v4866
    %v4879 = vor.u32 %v4877, %v4878
    %v4880 = vshll.u32 920167782, %v4865
    %v4881 = vshrl.u32 1326507024, %v4866
    %v4882 = vor.u32 %v4880, %v4881
    %vm4883 = vcmp.lt.s32.totalorder %v4864, 1
    %vm4884 = vcmp.lt.s32.totalorder %v4864, 2
    %vm4885 = vcmp.lt.s32.totalorder %v4864, 3
    %vm4886 = vcmp.lt.s32.totalorder %v4864, 4
    %v4887 = vsel %vm4883, %v4867, %v4870
    %v4888 = vsel %vm4886, %v4876, 2102212464
    %v4889 = vsel %vm4885, %v4873, %v4888
    %v4890 = vsel %vm4884, %v4887, %v4889
    %v4891 = vsel %vm4883, %v4870, %v4873
    %v4892 = vsel %vm4886, %v4879, 920167782
    %v4893 = vsel %vm4885, %v4876, %v4892
    %v4894 = vsel %vm4884, %v4891, %v4893
    %v4895 = vsel %vm4883, %v4873, %v4876
    %v4896 = vsel %vm4886, %v4882, 1326507024
    %v4897 = vsel %vm4885, %v4879, %v4896
    %v4898 = vsel %vm4884, %v4895, %v4897
    %v4899 = vshll.u32 %v4859, 8
    %v4900 = vmul.u32.u64.compose %v4899, %v4898
    %v4901 = vextract.low.u32 %v4900
    %v4902 = vextract.high.u32 %v4900
    %v4903 = vmul.u32.u64.compose %v4899, %v4894
    %v4904 = vextract.low.u32 %v4903
    %v4905 = vextract.high.u32 %v4903
    %v4906 = vmul.u32 %v4899, %v4890
    %v4907 = vadd.s32 %v4902, %v4904
    %vm4908 = vc.u32 %v4902, %v4904
    %v4909 = vadd.s32 %v4905, 1
    %v4910 = vsel %vm4908, %v4909, %v4905
    %v4911 = vadd.s32 %v4906, %v4910
    %v4912 = vadd.s32 %v4911, 536870912
    %v4913 = vshrl.u32 %v4912, 30
    %v4914 = vshll.u32 %v4913, 30
    %v4915 = vsub.s32 %v4911, %v4914
    %vm4916 = vcmp.lt.s32.totalorder %v4915, 0
    %v4917 = vsub.s32 0, %v4915
    %v4918 = vsel %vm4916, %v4917, %v4915
    %v4919 = vclz %v4918
    %v4920 = vsub.s32 %v4919, 2
    %vm4921 = vcmp.gt.s32.totalorder 0, %v4920
    %v4922 = vsel %vm4921, 0, %v4920
    %v4923 = vsub.s32 32, %v4922
    %v4924 = vshll.u32 %v4915, %v4922
    %v4925 = vshrl.u32 %v4907, %v4923
    %v4926 = vor.u32 %v4924, %v4925
    %v4927 = vsub.s32 4294967266, %v4922
    %v4928 = vadd.s32 %v4927, 127
    %v4929 = vshll.u32 %v4928, 23
    %v4930 = vor.u32 4788187, %v4929
    %v4931 = vand.u32 2147483647, %v4930
    %v4933 = vcvt.s32.f32 %v4926
    %v4934 = vmul.f32 %v4933, %v4931
    %v4935 = vxor.u32 %v4934, 2147483648
    %v4936 = vsel %vm4853, %v4935, %v4934
    %v4937 = vsub.s32 4, %v4913
    %v4938 = vsel %vm4853, %v4937, %v4913
    %v4939 = vsel %vm4852, %v2345, %v4936
    %v4940 = vsel %vm4852, 0, %v4938
    %v4941 = vcosq.f32.pop %v4939
    %v4942 = vsinq.f32.pop %v4939
    %vm4943 = vweird.f32 %v2345
    %v4944 = vadd.s32 %v4940, 3
    %v4945 = vand.u32 %v4944, 3
    %vm4946 = vcmp.lt.s32.totalorder %v4945, 2
    %vm4947 = vcmp.eq.s32.totalorder %v4945, 0
    %v4948 = vxor.u32 %v4942, 2147483648
    %v4949 = vsel %vm4947, %v4941, %v4948
    %vm4950 = vcmp.eq.s32.totalorder %v4945, 2
    %v4951 = vxor.u32 %v4941, 2147483648
    %v4952 = vsel %vm4950, %v4951, %v4942
    %v4953 = vsel %vm4946, %v4949, %v4952
    %v4954 = vsel %vm4943, nan, %v4953
    %v4955 = vand.u32 2147483647, %v2346
    %vm4956 = vcmp.le.f32.partialorder %v4955, 0.7853982
    %vm4957 = vcmp.lt.s32.totalorder %v2346, 0
    %v4958 = vand.u32 %v2346, 2139095040
    %v4959 = vshrl.u32 %v4958, 23
    %v4960 = vsub.s32 %v4959, 127
    %v4961 = vand.u32 2147483647, %v2346
    %v4962 = vand.u32 %v4961, 8388607
    %v4963 = vor.u32 %v4962, 8388608
    %v4964 = vsub.s32 0, %v4963
    %v4965 = vadd.s32 %v4960, 1
    %vm4966 = vcmp.gt.s32.totalorder %v4965, 0
    %v4967 = vsel %vm4966, %v4965, 0
    %v4968 = vshrl.u32 %v4967, 5
    %v4969 = vand.u32 %v4967, 31
    %v4970 = vsub.s32 32, %v4969
    %v4971 = vshrl.u32 683565275, %v4970
    %v4972 = vshll.u32 683565275, %v4969
    %v4973 = vshrl.u32 2475754826, %v4970
    %v4974 = vor.u32 %v4972, %v4973
    %v4975 = vshll.u32 2475754826, %v4969
    %v4976 = vshrl.u32 2131351028, %v4970
    %v4977 = vor.u32 %v4975, %v4976
    %v4978 = vshll.u32 2131351028, %v4969
    %v4979 = vshrl.u32 2102212464, %v4970
    %v4980 = vor.u32 %v4978, %v4979
    %v4981 = vshll.u32 2102212464, %v4969
    %v4982 = vshrl.u32 920167782, %v4970
    %v4983 = vor.u32 %v4981, %v4982
    %v4984 = vshll.u32 920167782, %v4969
    %v4985 = vshrl.u32 1326507024, %v4970
    %v4986 = vor.u32 %v4984, %v4985
    %vm4987 = vcmp.lt.s32.totalorder %v4968, 1
    %vm4988 = vcmp.lt.s32.totalorder %v4968, 2
    %vm4989 = vcmp.lt.s32.totalorder %v4968, 3
    %vm4990 = vcmp.lt.s32.totalorder %v4968, 4
    %v4991 = vsel %vm4987, %v4971, %v4974
    %v4992 = vsel %vm4990, %v4980, 2102212464
    %v4993 = vsel %vm4989, %v4977, %v4992
    %v4994 = vsel %vm4988, %v4991, %v4993
    %v4995 = vsel %vm4987, %v4974, %v4977
    %v4996 = vsel %vm4990, %v4983, 920167782
    %v4997 = vsel %vm4989, %v4980, %v4996
    %v4998 = vsel %vm4988, %v4995, %v4997
    %v4999 = vsel %vm4987, %v4977, %v4980
    %v5000 = vsel %vm4990, %v4986, 1326507024
    %v5001 = vsel %vm4989, %v4983, %v5000
    %v5002 = vsel %vm4988, %v4999, %v5001
    %v5003 = vshll.u32 %v4963, 8
    %v5004 = vmul.u32.u64.compose %v5003, %v5002
    %v5005 = vextract.low.u32 %v5004
    %v5006 = vextract.high.u32 %v5004
    %v5007 = vmul.u32.u64.compose %v5003, %v4998
    %v5008 = vextract.low.u32 %v5007
    %v5009 = vextract.high.u32 %v5007
    %v5010 = vmul.u32 %v5003, %v4994
    %v5011 = vadd.s32 %v5006, %v5008
    %vm5012 = vc.u32 %v5006, %v5008
    %v5013 = vadd.s32 %v5009, 1
    %v5014 = vsel %vm5012, %v5013, %v5009
    %v5015 = vadd.s32 %v5010, %v5014
    %v5016 = vadd.s32 %v5015, 536870912
    %v5017 = vshrl.u32 %v5016, 30
    %v5018 = vshll.u32 %v5017, 30
    %v5019 = vsub.s32 %v5015, %v5018
    %vm5020 = vcmp.lt.s32.totalorder %v5019, 0
    %v5021 = vsub.s32 0, %v5019
    %v5022 = vsel %vm5020, %v5021, %v5019
    %v5023 = vclz %v5022
    %v5024 = vsub.s32 %v5023, 2
    %vm5025 = vcmp.gt.s32.totalorder 0, %v5024
    %v5026 = vsel %vm5025, 0, %v5024
    %v5027 = vsub.s32 32, %v5026
    %v5028 = vshll.u32 %v5019, %v5026
    %v5029 = vshrl.u32 %v5011, %v5027
    %v5030 = vor.u32 %v5028, %v5029
    %v5031 = vsub.s32 4294967266, %v5026
    %v5032 = vadd.s32 %v5031, 127
    %v5033 = vshll.u32 %v5032, 23
    %v5034 = vor.u32 4788187, %v5033
    %v5035 = vand.u32 2147483647, %v5034
    %v5037 = vcvt.s32.f32 %v5030
    %v5038 = vmul.f32 %v5037, %v5035
    %v5039 = vxor.u32 %v5038, 2147483648
    %v5040 = vsel %vm4957, %v5039, %v5038
    %v5041 = vsub.s32 4, %v5017
    %v5042 = vsel %vm4957, %v5041, %v5017
    %v5043 = vsel %vm4956, %v2346, %v5040
    %v5044 = vsel %vm4956, 0, %v5042
    %v5045 = vcosq.f32.pop %v5043
    %v5046 = vsinq.f32.pop %v5043
    %vm5047 = vweird.f32 %v2346
    %v5048 = vadd.s32 %v5044, 3
    %v5049 = vand.u32 %v5048, 3
    %vm5050 = vcmp.lt.s32.totalorder %v5049, 2
    %vm5051 = vcmp.eq.s32.totalorder %v5049, 0
    %v5052 = vxor.u32 %v5046, 2147483648
    %v5053 = vsel %vm5051, %v5045, %v5052
    %vm5054 = vcmp.eq.s32.totalorder %v5049, 2
    %v5055 = vxor.u32 %v5045, 2147483648
    %v5056 = vsel %vm5054, %v5055, %v5046
    %v5057 = vsel %vm5050, %v5053, %v5056
    %v5058 = vsel %vm5047, nan, %v5057
    %v5059 = vand.u32 2147483647, %v2347
    %vm5060 = vcmp.le.f32.partialorder %v5059, 0.7853982
    %vm5061 = vcmp.lt.s32.totalorder %v2347, 0
    %v5062 = vand.u32 %v2347, 2139095040
    %v5063 = vshrl.u32 %v5062, 23
    %v5064 = vsub.s32 %v5063, 127
    %v5065 = vand.u32 2147483647, %v2347
    %v5066 = vand.u32 %v5065, 8388607
    %v5067 = vor.u32 %v5066, 8388608
    %v5068 = vsub.s32 0, %v5067
    %v5069 = vadd.s32 %v5064, 1
    %vm5070 = vcmp.gt.s32.totalorder %v5069, 0
    %v5071 = vsel %vm5070, %v5069, 0
    %v5072 = vshrl.u32 %v5071, 5
    %v5073 = vand.u32 %v5071, 31
    %v5074 = vsub.s32 32, %v5073
    %v5075 = vshrl.u32 683565275, %v5074
    %v5076 = vshll.u32 683565275, %v5073
    %v5077 = vshrl.u32 2475754826, %v5074
    %v5078 = vor.u32 %v5076, %v5077
    %v5079 = vshll.u32 2475754826, %v5073
    %v5080 = vshrl.u32 2131351028, %v5074
    %v5081 = vor.u32 %v5079, %v5080
    %v5082 = vshll.u32 2131351028, %v5073
    %v5083 = vshrl.u32 2102212464, %v5074
    %v5084 = vor.u32 %v5082, %v5083
    %v5085 = vshll.u32 2102212464, %v5073
    %v5086 = vshrl.u32 920167782, %v5074
    %v5087 = vor.u32 %v5085, %v5086
    %v5088 = vshll.u32 920167782, %v5073
    %v5089 = vshrl.u32 1326507024, %v5074
    %v5090 = vor.u32 %v5088, %v5089
    %vm5091 = vcmp.lt.s32.totalorder %v5072, 1
    %vm5092 = vcmp.lt.s32.totalorder %v5072, 2
    %vm5093 = vcmp.lt.s32.totalorder %v5072, 3
    %vm5094 = vcmp.lt.s32.totalorder %v5072, 4
    %v5095 = vsel %vm5091, %v5075, %v5078
    %v5096 = vsel %vm5094, %v5084, 2102212464
    %v5097 = vsel %vm5093, %v5081, %v5096
    %v5098 = vsel %vm5092, %v5095, %v5097
    %v5099 = vsel %vm5091, %v5078, %v5081
    %v5100 = vsel %vm5094, %v5087, 920167782
    %v5101 = vsel %vm5093, %v5084, %v5100
    %v5102 = vsel %vm5092, %v5099, %v5101
    %v5103 = vsel %vm5091, %v5081, %v5084
    %v5104 = vsel %vm5094, %v5090, 1326507024
    %v5105 = vsel %vm5093, %v5087, %v5104
    %v5106 = vsel %vm5092, %v5103, %v5105
    %v5107 = vshll.u32 %v5067, 8
    %v5108 = vmul.u32.u64.compose %v5107, %v5106
    %v5109 = vextract.low.u32 %v5108
    %v5110 = vextract.high.u32 %v5108
    %v5111 = vmul.u32.u64.compose %v5107, %v5102
    %v5112 = vextract.low.u32 %v5111
    %v5113 = vextract.high.u32 %v5111
    %v5114 = vmul.u32 %v5107, %v5098
    %v5115 = vadd.s32 %v5110, %v5112
    %vm5116 = vc.u32 %v5110, %v5112
    %v5117 = vadd.s32 %v5113, 1
    %v5118 = vsel %vm5116, %v5117, %v5113
    %v5119 = vadd.s32 %v5114, %v5118
    %v5120 = vadd.s32 %v5119, 536870912
    %v5121 = vshrl.u32 %v5120, 30
    %v5122 = vshll.u32 %v5121, 30
    %v5123 = vsub.s32 %v5119, %v5122
    %vm5124 = vcmp.lt.s32.totalorder %v5123, 0
    %v5125 = vsub.s32 0, %v5123
    %v5126 = vsel %vm5124, %v5125, %v5123
    %v5127 = vclz %v5126
    %v5128 = vsub.s32 %v5127, 2
    %vm5129 = vcmp.gt.s32.totalorder 0, %v5128
    %v5130 = vsel %vm5129, 0, %v5128
    %v5131 = vsub.s32 32, %v5130
    %v5132 = vshll.u32 %v5123, %v5130
    %v5133 = vshrl.u32 %v5115, %v5131
    %v5134 = vor.u32 %v5132, %v5133
    %v5135 = vsub.s32 4294967266, %v5130
    %v5136 = vadd.s32 %v5135, 127
    %v5137 = vshll.u32 %v5136, 23
    %v5138 = vor.u32 4788187, %v5137
    %v5139 = vand.u32 2147483647, %v5138
    %v5141 = vcvt.s32.f32 %v5134
    %v5142 = vmul.f32 %v5141, %v5139
    %v5143 = vxor.u32 %v5142, 2147483648
    %v5144 = vsel %vm5061, %v5143, %v5142
    %v5145 = vsub.s32 4, %v5121
    %v5146 = vsel %vm5061, %v5145, %v5121
    %v5147 = vsel %vm5060, %v2347, %v5144
    %v5148 = vsel %vm5060, 0, %v5146
    %v5149 = vcosq.f32.pop %v5147
    %v5150 = vsinq.f32.pop %v5147
    %vm5151 = vweird.f32 %v2347
    %v5152 = vadd.s32 %v5148, 3
    %v5153 = vand.u32 %v5152, 3
    %vm5154 = vcmp.lt.s32.totalorder %v5153, 2
    %vm5155 = vcmp.eq.s32.totalorder %v5153, 0
    %v5156 = vxor.u32 %v5150, 2147483648
    %v5157 = vsel %vm5155, %v5149, %v5156
    %vm5158 = vcmp.eq.s32.totalorder %v5153, 2
    %v5159 = vxor.u32 %v5149, 2147483648
    %v5160 = vsel %vm5158, %v5159, %v5150
    %v5161 = vsel %vm5154, %v5157, %v5160
    %v5162 = vsel %vm5151, nan, %v5161
    %v5163 = vand.u32 2147483647, %v2348
    %vm5164 = vcmp.le.f32.partialorder %v5163, 0.7853982
    %vm5165 = vcmp.lt.s32.totalorder %v2348, 0
    %v5166 = vand.u32 %v2348, 2139095040
    %v5167 = vshrl.u32 %v5166, 23
    %v5168 = vsub.s32 %v5167, 127
    %v5169 = vand.u32 2147483647, %v2348
    %v5170 = vand.u32 %v5169, 8388607
    %v5171 = vor.u32 %v5170, 8388608
    %v5172 = vsub.s32 0, %v5171
    %v5173 = vadd.s32 %v5168, 1
    %vm5174 = vcmp.gt.s32.totalorder %v5173, 0
    %v5175 = vsel %vm5174, %v5173, 0
    %v5176 = vshrl.u32 %v5175, 5
    %v5177 = vand.u32 %v5175, 31
    %v5178 = vsub.s32 32, %v5177
    %v5179 = vshrl.u32 683565275, %v5178
    %v5180 = vshll.u32 683565275, %v5177
    %v5181 = vshrl.u32 2475754826, %v5178
    %v5182 = vor.u32 %v5180, %v5181
    %v5183 = vshll.u32 2475754826, %v5177
    %v5184 = vshrl.u32 2131351028, %v5178
    %v5185 = vor.u32 %v5183, %v5184
    %v5186 = vshll.u32 2131351028, %v5177
    %v5187 = vshrl.u32 2102212464, %v5178
    %v5188 = vor.u32 %v5186, %v5187
    %v5189 = vshll.u32 2102212464, %v5177
    %v5190 = vshrl.u32 920167782, %v5178
    %v5191 = vor.u32 %v5189, %v5190
    %v5192 = vshll.u32 920167782, %v5177
    %v5193 = vshrl.u32 1326507024, %v5178
    %v5194 = vor.u32 %v5192, %v5193
    %vm5195 = vcmp.lt.s32.totalorder %v5176, 1
    %vm5196 = vcmp.lt.s32.totalorder %v5176, 2
    %vm5197 = vcmp.lt.s32.totalorder %v5176, 3
    %vm5198 = vcmp.lt.s32.totalorder %v5176, 4
    %v5199 = vsel %vm5195, %v5179, %v5182
    %v5200 = vsel %vm5198, %v5188, 2102212464
    %v5201 = vsel %vm5197, %v5185, %v5200
    %v5202 = vsel %vm5196, %v5199, %v5201
    %v5203 = vsel %vm5195, %v5182, %v5185
    %v5204 = vsel %vm5198, %v5191, 920167782
    %v5205 = vsel %vm5197, %v5188, %v5204
    %v5206 = vsel %vm5196, %v5203, %v5205
    %v5207 = vsel %vm5195, %v5185, %v5188
    %v5208 = vsel %vm5198, %v5194, 1326507024
    %v5209 = vsel %vm5197, %v5191, %v5208
    %v5210 = vsel %vm5196, %v5207, %v5209
    %v5211 = vshll.u32 %v5171, 8
    %v5212 = vmul.u32.u64.compose %v5211, %v5210
    %v5213 = vextract.low.u32 %v5212
    %v5214 = vextract.high.u32 %v5212
    %v5215 = vmul.u32.u64.compose %v5211, %v5206
    %v5216 = vextract.low.u32 %v5215
    %v5217 = vextract.high.u32 %v5215
    %v5218 = vmul.u32 %v5211, %v5202
    %v5219 = vadd.s32 %v5214, %v5216
    %vm5220 = vc.u32 %v5214, %v5216
    %v5221 = vadd.s32 %v5217, 1
    %v5222 = vsel %vm5220, %v5221, %v5217
    %v5223 = vadd.s32 %v5218, %v5222
    %v5224 = vadd.s32 %v5223, 536870912
    %v5225 = vshrl.u32 %v5224, 30
    %v5226 = vshll.u32 %v5225, 30
    %v5227 = vsub.s32 %v5223, %v5226
    %vm5228 = vcmp.lt.s32.totalorder %v5227, 0
    %v5229 = vsub.s32 0, %v5227
    %v5230 = vsel %vm5228, %v5229, %v5227
    %v5231 = vclz %v5230
    %v5232 = vsub.s32 %v5231, 2
    %vm5233 = vcmp.gt.s32.totalorder 0, %v5232
    %v5234 = vsel %vm5233, 0, %v5232
    %v5235 = vsub.s32 32, %v5234
    %v5236 = vshll.u32 %v5227, %v5234
    %v5237 = vshrl.u32 %v5219, %v5235
    %v5238 = vor.u32 %v5236, %v5237
    %v5239 = vsub.s32 4294967266, %v5234
    %v5240 = vadd.s32 %v5239, 127
    %v5241 = vshll.u32 %v5240, 23
    %v5242 = vor.u32 4788187, %v5241
    %v5243 = vand.u32 2147483647, %v5242
    %v5245 = vcvt.s32.f32 %v5238
    %v5246 = vmul.f32 %v5245, %v5243
    %v5247 = vxor.u32 %v5246, 2147483648
    %v5248 = vsel %vm5165, %v5247, %v5246
    %v5249 = vsub.s32 4, %v5225
    %v5250 = vsel %vm5165, %v5249, %v5225
    %v5251 = vsel %vm5164, %v2348, %v5248
    %v5252 = vsel %vm5164, 0, %v5250
    %v5253 = vcosq.f32.pop %v5251
    %v5254 = vsinq.f32.pop %v5251
    %vm5255 = vweird.f32 %v2348
    %v5256 = vadd.s32 %v5252, 3
    %v5257 = vand.u32 %v5256, 3
    %vm5258 = vcmp.lt.s32.totalorder %v5257, 2
    %vm5259 = vcmp.eq.s32.totalorder %v5257, 0
    %v5260 = vxor.u32 %v5254, 2147483648
    %v5261 = vsel %vm5259, %v5253, %v5260
    %vm5262 = vcmp.eq.s32.totalorder %v5257, 2
    %v5263 = vxor.u32 %v5253, 2147483648
    %v5264 = vsel %vm5262, %v5263, %v5254
    %v5265 = vsel %vm5258, %v5261, %v5264
    %v5266 = vsel %vm5255, nan, %v5265
    %v5267 = vand.u32 2147483647, %v2349
    %vm5268 = vcmp.le.f32.partialorder %v5267, 0.7853982
    %vm5269 = vcmp.lt.s32.totalorder %v2349, 0
    %v5270 = vand.u32 %v2349, 2139095040
    %v5271 = vshrl.u32 %v5270, 23
    %v5272 = vsub.s32 %v5271, 127
    %v5273 = vand.u32 2147483647, %v2349
    %v5274 = vand.u32 %v5273, 8388607
    %v5275 = vor.u32 %v5274, 8388608
    %v5276 = vsub.s32 0, %v5275
    %v5277 = vadd.s32 %v5272, 1
    %vm5278 = vcmp.gt.s32.totalorder %v5277, 0
    %v5279 = vsel %vm5278, %v5277, 0
    %v5280 = vshrl.u32 %v5279, 5
    %v5281 = vand.u32 %v5279, 31
    %v5282 = vsub.s32 32, %v5281
    %v5283 = vshrl.u32 683565275, %v5282
    %v5284 = vshll.u32 683565275, %v5281
    %v5285 = vshrl.u32 2475754826, %v5282
    %v5286 = vor.u32 %v5284, %v5285
    %v5287 = vshll.u32 2475754826, %v5281
    %v5288 = vshrl.u32 2131351028, %v5282
    %v5289 = vor.u32 %v5287, %v5288
    %v5290 = vshll.u32 2131351028, %v5281
    %v5291 = vshrl.u32 2102212464, %v5282
    %v5292 = vor.u32 %v5290, %v5291
    %v5293 = vshll.u32 2102212464, %v5281
    %v5294 = vshrl.u32 920167782, %v5282
    %v5295 = vor.u32 %v5293, %v5294
    %v5296 = vshll.u32 920167782, %v5281
    %v5297 = vshrl.u32 1326507024, %v5282
    %v5298 = vor.u32 %v5296, %v5297
    %vm5299 = vcmp.lt.s32.totalorder %v5280, 1
    %vm5300 = vcmp.lt.s32.totalorder %v5280, 2
    %vm5301 = vcmp.lt.s32.totalorder %v5280, 3
    %vm5302 = vcmp.lt.s32.totalorder %v5280, 4
    %v5303 = vsel %vm5299, %v5283, %v5286
    %v5304 = vsel %vm5302, %v5292, 2102212464
    %v5305 = vsel %vm5301, %v5289, %v5304
    %v5306 = vsel %vm5300, %v5303, %v5305
    %v5307 = vsel %vm5299, %v5286, %v5289
    %v5308 = vsel %vm5302, %v5295, 920167782
    %v5309 = vsel %vm5301, %v5292, %v5308
    %v5310 = vsel %vm5300, %v5307, %v5309
    %v5311 = vsel %vm5299, %v5289, %v5292
    %v5312 = vsel %vm5302, %v5298, 1326507024
    %v5313 = vsel %vm5301, %v5295, %v5312
    %v5314 = vsel %vm5300, %v5311, %v5313
    %v5315 = vshll.u32 %v5275, 8
    %v5316 = vmul.u32.u64.compose %v5315, %v5314
    %v5317 = vextract.low.u32 %v5316
    %v5318 = vextract.high.u32 %v5316
    %v5319 = vmul.u32.u64.compose %v5315, %v5310
    %v5320 = vextract.low.u32 %v5319
    %v5321 = vextract.high.u32 %v5319
    %v5322 = vmul.u32 %v5315, %v5306
    %v5323 = vadd.s32 %v5318, %v5320
    %vm5324 = vc.u32 %v5318, %v5320
    %v5325 = vadd.s32 %v5321, 1
    %v5326 = vsel %vm5324, %v5325, %v5321
    %v5327 = vadd.s32 %v5322, %v5326
    %v5328 = vadd.s32 %v5327, 536870912
    %v5329 = vshrl.u32 %v5328, 30
    %v5330 = vshll.u32 %v5329, 30
    %v5331 = vsub.s32 %v5327, %v5330
    %vm5332 = vcmp.lt.s32.totalorder %v5331, 0
    %v5333 = vsub.s32 0, %v5331
    %v5334 = vsel %vm5332, %v5333, %v5331
    %v5335 = vclz %v5334
    %v5336 = vsub.s32 %v5335, 2
    %vm5337 = vcmp.gt.s32.totalorder 0, %v5336
    %v5338 = vsel %vm5337, 0, %v5336
    %v5339 = vsub.s32 32, %v5338
    %v5340 = vshll.u32 %v5331, %v5338
    %v5341 = vshrl.u32 %v5323, %v5339
    %v5342 = vor.u32 %v5340, %v5341
    %v5343 = vsub.s32 4294967266, %v5338
    %v5344 = vadd.s32 %v5343, 127
    %v5345 = vshll.u32 %v5344, 23
    %v5346 = vor.u32 4788187, %v5345
    %v5347 = vand.u32 2147483647, %v5346
    %v5349 = vcvt.s32.f32 %v5342
    %v5350 = vmul.f32 %v5349, %v5347
    %v5351 = vxor.u32 %v5350, 2147483648
    %v5352 = vsel %vm5269, %v5351, %v5350
    %v5353 = vsub.s32 4, %v5329
    %v5354 = vsel %vm5269, %v5353, %v5329
    %v5355 = vsel %vm5268, %v2349, %v5352
    %v5356 = vsel %vm5268, 0, %v5354
    %v5357 = vcosq.f32.pop %v5355
    %v5358 = vsinq.f32.pop %v5355
    %vm5359 = vweird.f32 %v2349
    %v5360 = vadd.s32 %v5356, 3
    %v5361 = vand.u32 %v5360, 3
    %vm5362 = vcmp.lt.s32.totalorder %v5361, 2
    %vm5363 = vcmp.eq.s32.totalorder %v5361, 0
    %v5364 = vxor.u32 %v5358, 2147483648
    %v5365 = vsel %vm5363, %v5357, %v5364
    %vm5366 = vcmp.eq.s32.totalorder %v5361, 2
    %v5367 = vxor.u32 %v5357, 2147483648
    %v5368 = vsel %vm5366, %v5367, %v5358
    %v5369 = vsel %vm5362, %v5365, %v5368
    %v5370 = vsel %vm5359, nan, %v5369
    %v5371 = vand.u32 2147483647, %v2350
    %vm5372 = vcmp.le.f32.partialorder %v5371, 0.7853982
    %vm5373 = vcmp.lt.s32.totalorder %v2350, 0
    %v5374 = vand.u32 %v2350, 2139095040
    %v5375 = vshrl.u32 %v5374, 23
    %v5376 = vsub.s32 %v5375, 127
    %v5377 = vand.u32 2147483647, %v2350
    %v5378 = vand.u32 %v5377, 8388607
    %v5379 = vor.u32 %v5378, 8388608
    %v5380 = vsub.s32 0, %v5379
    %v5381 = vadd.s32 %v5376, 1
    %vm5382 = vcmp.gt.s32.totalorder %v5381, 0
    %v5383 = vsel %vm5382, %v5381, 0
    %v5384 = vshrl.u32 %v5383, 5
    %v5385 = vand.u32 %v5383, 31
    %v5386 = vsub.s32 32, %v5385
    %v5387 = vshrl.u32 683565275, %v5386
    %v5388 = vshll.u32 683565275, %v5385
    %v5389 = vshrl.u32 2475754826, %v5386
    %v5390 = vor.u32 %v5388, %v5389
    %v5391 = vshll.u32 2475754826, %v5385
    %v5392 = vshrl.u32 2131351028, %v5386
    %v5393 = vor.u32 %v5391, %v5392
    %v5394 = vshll.u32 2131351028, %v5385
    %v5395 = vshrl.u32 2102212464, %v5386
    %v5396 = vor.u32 %v5394, %v5395
    %v5397 = vshll.u32 2102212464, %v5385
    %v5398 = vshrl.u32 920167782, %v5386
    %v5399 = vor.u32 %v5397, %v5398
    %v5400 = vshll.u32 920167782, %v5385
    %v5401 = vshrl.u32 1326507024, %v5386
    %v5402 = vor.u32 %v5400, %v5401
    %vm5403 = vcmp.lt.s32.totalorder %v5384, 1
    %vm5404 = vcmp.lt.s32.totalorder %v5384, 2
    %vm5405 = vcmp.lt.s32.totalorder %v5384, 3
    %vm5406 = vcmp.lt.s32.totalorder %v5384, 4
    %v5407 = vsel %vm5403, %v5387, %v5390
    %v5408 = vsel %vm5406, %v5396, 2102212464
    %v5409 = vsel %vm5405, %v5393, %v5408
    %v5410 = vsel %vm5404, %v5407, %v5409
    %v5411 = vsel %vm5403, %v5390, %v5393
    %v5412 = vsel %vm5406, %v5399, 920167782
    %v5413 = vsel %vm5405, %v5396, %v5412
    %v5414 = vsel %vm5404, %v5411, %v5413
    %v5415 = vsel %vm5403, %v5393, %v5396
    %v5416 = vsel %vm5406, %v5402, 1326507024
    %v5417 = vsel %vm5405, %v5399, %v5416
    %v5418 = vsel %vm5404, %v5415, %v5417
    %v5419 = vshll.u32 %v5379, 8
    %v5420 = vmul.u32.u64.compose %v5419, %v5418
    %v5421 = vextract.low.u32 %v5420
    %v5422 = vextract.high.u32 %v5420
    %v5423 = vmul.u32.u64.compose %v5419, %v5414
    %v5424 = vextract.low.u32 %v5423
    %v5425 = vextract.high.u32 %v5423
    %v5426 = vmul.u32 %v5419, %v5410
    %v5427 = vadd.s32 %v5422, %v5424
    %vm5428 = vc.u32 %v5422, %v5424
    %v5429 = vadd.s32 %v5425, 1
    %v5430 = vsel %vm5428, %v5429, %v5425
    %v5431 = vadd.s32 %v5426, %v5430
    %v5432 = vadd.s32 %v5431, 536870912
    %v5433 = vshrl.u32 %v5432, 30
    %v5434 = vshll.u32 %v5433, 30
    %v5435 = vsub.s32 %v5431, %v5434
    %vm5436 = vcmp.lt.s32.totalorder %v5435, 0
    %v5437 = vsub.s32 0, %v5435
    %v5438 = vsel %vm5436, %v5437, %v5435
    %v5439 = vclz %v5438
    %v5440 = vsub.s32 %v5439, 2
    %vm5441 = vcmp.gt.s32.totalorder 0, %v5440
    %v5442 = vsel %vm5441, 0, %v5440
    %v5443 = vsub.s32 32, %v5442
    %v5444 = vshll.u32 %v5435, %v5442
    %v5445 = vshrl.u32 %v5427, %v5443
    %v5446 = vor.u32 %v5444, %v5445
    %v5447 = vsub.s32 4294967266, %v5442
    %v5448 = vadd.s32 %v5447, 127
    %v5449 = vshll.u32 %v5448, 23
    %v5450 = vor.u32 4788187, %v5449
    %v5451 = vand.u32 2147483647, %v5450
    %v5453 = vcvt.s32.f32 %v5446
    %v5454 = vmul.f32 %v5453, %v5451
    %v5455 = vxor.u32 %v5454, 2147483648
    %v5456 = vsel %vm5373, %v5455, %v5454
    %v5457 = vsub.s32 4, %v5433
    %v5458 = vsel %vm5373, %v5457, %v5433
    %v5459 = vsel %vm5372, %v2350, %v5456
    %v5460 = vsel %vm5372, 0, %v5458
    %v5461 = vcosq.f32.pop %v5459
    %v5462 = vsinq.f32.pop %v5459
    %vm5463 = vweird.f32 %v2350
    %v5464 = vadd.s32 %v5460, 3
    %v5465 = vand.u32 %v5464, 3
    %vm5466 = vcmp.lt.s32.totalorder %v5465, 2
    %vm5467 = vcmp.eq.s32.totalorder %v5465, 0
    %v5468 = vxor.u32 %v5462, 2147483648
    %v5469 = vsel %vm5467, %v5461, %v5468
    %vm5470 = vcmp.eq.s32.totalorder %v5465, 2
    %v5471 = vxor.u32 %v5461, 2147483648
    %v5472 = vsel %vm5470, %v5471, %v5462
    %v5473 = vsel %vm5466, %v5469, %v5472
    %v5474 = vsel %vm5463, nan, %v5473
    %v5475 = vand.u32 2147483647, %v2351
    %vm5476 = vcmp.le.f32.partialorder %v5475, 0.7853982
    %vm5477 = vcmp.lt.s32.totalorder %v2351, 0
    %v5478 = vand.u32 %v2351, 2139095040
    %v5479 = vshrl.u32 %v5478, 23
    %v5480 = vsub.s32 %v5479, 127
    %v5481 = vand.u32 2147483647, %v2351
    %v5482 = vand.u32 %v5481, 8388607
    %v5483 = vor.u32 %v5482, 8388608
    %v5484 = vsub.s32 0, %v5483
    %v5485 = vadd.s32 %v5480, 1
    %vm5486 = vcmp.gt.s32.totalorder %v5485, 0
    %v5487 = vsel %vm5486, %v5485, 0
    %v5488 = vshrl.u32 %v5487, 5
    %v5489 = vand.u32 %v5487, 31
    %v5490 = vsub.s32 32, %v5489
    %v5491 = vshrl.u32 683565275, %v5490
    %v5492 = vshll.u32 683565275, %v5489
    %v5493 = vshrl.u32 2475754826, %v5490
    %v5494 = vor.u32 %v5492, %v5493
    %v5495 = vshll.u32 2475754826, %v5489
    %v5496 = vshrl.u32 2131351028, %v5490
    %v5497 = vor.u32 %v5495, %v5496
    %v5498 = vshll.u32 2131351028, %v5489
    %v5499 = vshrl.u32 2102212464, %v5490
    %v5500 = vor.u32 %v5498, %v5499
    %v5501 = vshll.u32 2102212464, %v5489
    %v5502 = vshrl.u32 920167782, %v5490
    %v5503 = vor.u32 %v5501, %v5502
    %v5504 = vshll.u32 920167782, %v5489
    %v5505 = vshrl.u32 1326507024, %v5490
    %v5506 = vor.u32 %v5504, %v5505
    %vm5507 = vcmp.lt.s32.totalorder %v5488, 1
    %vm5508 = vcmp.lt.s32.totalorder %v5488, 2
    %vm5509 = vcmp.lt.s32.totalorder %v5488, 3
    %vm5510 = vcmp.lt.s32.totalorder %v5488, 4
    %v5511 = vsel %vm5507, %v5491, %v5494
    %v5512 = vsel %vm5510, %v5500, 2102212464
    %v5513 = vsel %vm5509, %v5497, %v5512
    %v5514 = vsel %vm5508, %v5511, %v5513
    %v5515 = vsel %vm5507, %v5494, %v5497
    %v5516 = vsel %vm5510, %v5503, 920167782
    %v5517 = vsel %vm5509, %v5500, %v5516
    %v5518 = vsel %vm5508, %v5515, %v5517
    %v5519 = vsel %vm5507, %v5497, %v5500
    %v5520 = vsel %vm5510, %v5506, 1326507024
    %v5521 = vsel %vm5509, %v5503, %v5520
    %v5522 = vsel %vm5508, %v5519, %v5521
    %v5523 = vshll.u32 %v5483, 8
    %v5524 = vmul.u32.u64.compose %v5523, %v5522
    %v5525 = vextract.low.u32 %v5524
    %v5526 = vextract.high.u32 %v5524
    %v5527 = vmul.u32.u64.compose %v5523, %v5518
    %v5528 = vextract.low.u32 %v5527
    %v5529 = vextract.high.u32 %v5527
    %v5530 = vmul.u32 %v5523, %v5514
    %v5531 = vadd.s32 %v5526, %v5528
    %vm5532 = vc.u32 %v5526, %v5528
    %v5533 = vadd.s32 %v5529, 1
    %v5534 = vsel %vm5532, %v5533, %v5529
    %v5535 = vadd.s32 %v5530, %v5534
    %v5536 = vadd.s32 %v5535, 536870912
    %v5537 = vshrl.u32 %v5536, 30
    %v5538 = vshll.u32 %v5537, 30
    %v5539 = vsub.s32 %v5535, %v5538
    %vm5540 = vcmp.lt.s32.totalorder %v5539, 0
    %v5541 = vsub.s32 0, %v5539
    %v5542 = vsel %vm5540, %v5541, %v5539
    %v5543 = vclz %v5542
    %v5544 = vsub.s32 %v5543, 2
    %vm5545 = vcmp.gt.s32.totalorder 0, %v5544
    %v5546 = vsel %vm5545, 0, %v5544
    %v5547 = vsub.s32 32, %v5546
    %v5548 = vshll.u32 %v5539, %v5546
    %v5549 = vshrl.u32 %v5531, %v5547
    %v5550 = vor.u32 %v5548, %v5549
    %v5551 = vsub.s32 4294967266, %v5546
    %v5552 = vadd.s32 %v5551, 127
    %v5553 = vshll.u32 %v5552, 23
    %v5554 = vor.u32 4788187, %v5553
    %v5555 = vand.u32 2147483647, %v5554
    %v5557 = vcvt.s32.f32 %v5550
    %v5558 = vmul.f32 %v5557, %v5555
    %v5559 = vxor.u32 %v5558, 2147483648
    %v5560 = vsel %vm5477, %v5559, %v5558
    %v5561 = vsub.s32 4, %v5537
    %v5562 = vsel %vm5477, %v5561, %v5537
    %v5563 = vsel %vm5476, %v2351, %v5560
    %v5564 = vsel %vm5476, 0, %v5562
    %v5565 = vcosq.f32.pop %v5563
    %v5566 = vsinq.f32.pop %v5563
    %vm5567 = vweird.f32 %v2351
    %v5568 = vadd.s32 %v5564, 3
    %v5569 = vand.u32 %v5568, 3
    %vm5570 = vcmp.lt.s32.totalorder %v5569, 2
    %vm5571 = vcmp.eq.s32.totalorder %v5569, 0
    %v5572 = vxor.u32 %v5566, 2147483648
    %v5573 = vsel %vm5571, %v5565, %v5572
    %vm5574 = vcmp.eq.s32.totalorder %v5569, 2
    %v5575 = vxor.u32 %v5565, 2147483648
    %v5576 = vsel %vm5574, %v5575, %v5566
    %v5577 = vsel %vm5570, %v5573, %v5576
    %v5578 = vsel %vm5567, nan, %v5577
    %v5579 = vand.u32 2147483647, %v2352
    %vm5580 = vcmp.le.f32.partialorder %v5579, 0.7853982
    %vm5581 = vcmp.lt.s32.totalorder %v2352, 0
    %v5582 = vand.u32 %v2352, 2139095040
    %v5583 = vshrl.u32 %v5582, 23
    %v5584 = vsub.s32 %v5583, 127
    %v5585 = vand.u32 2147483647, %v2352
    %v5586 = vand.u32 %v5585, 8388607
    %v5587 = vor.u32 %v5586, 8388608
    %v5588 = vsub.s32 0, %v5587
    %v5589 = vadd.s32 %v5584, 1
    %vm5590 = vcmp.gt.s32.totalorder %v5589, 0
    %v5591 = vsel %vm5590, %v5589, 0
    %v5592 = vshrl.u32 %v5591, 5
    %v5593 = vand.u32 %v5591, 31
    %v5594 = vsub.s32 32, %v5593
    %v5595 = vshrl.u32 683565275, %v5594
    %v5596 = vshll.u32 683565275, %v5593
    %v5597 = vshrl.u32 2475754826, %v5594
    %v5598 = vor.u32 %v5596, %v5597
    %v5599 = vshll.u32 2475754826, %v5593
    %v5600 = vshrl.u32 2131351028, %v5594
    %v5601 = vor.u32 %v5599, %v5600
    %v5602 = vshll.u32 2131351028, %v5593
    %v5603 = vshrl.u32 2102212464, %v5594
    %v5604 = vor.u32 %v5602, %v5603
    %v5605 = vshll.u32 2102212464, %v5593
    %v5606 = vshrl.u32 920167782, %v5594
    %v5607 = vor.u32 %v5605, %v5606
    %v5608 = vshll.u32 920167782, %v5593
    %v5609 = vshrl.u32 1326507024, %v5594
    %v5610 = vor.u32 %v5608, %v5609
    %vm5611 = vcmp.lt.s32.totalorder %v5592, 1
    %vm5612 = vcmp.lt.s32.totalorder %v5592, 2
    %vm5613 = vcmp.lt.s32.totalorder %v5592, 3
    %vm5614 = vcmp.lt.s32.totalorder %v5592, 4
    %v5615 = vsel %vm5611, %v5595, %v5598
    %v5616 = vsel %vm5614, %v5604, 2102212464
    %v5617 = vsel %vm5613, %v5601, %v5616
    %v5618 = vsel %vm5612, %v5615, %v5617
    %v5619 = vsel %vm5611, %v5598, %v5601
    %v5620 = vsel %vm5614, %v5607, 920167782
    %v5621 = vsel %vm5613, %v5604, %v5620
    %v5622 = vsel %vm5612, %v5619, %v5621
    %v5623 = vsel %vm5611, %v5601, %v5604
    %v5624 = vsel %vm5614, %v5610, 1326507024
    %v5625 = vsel %vm5613, %v5607, %v5624
    %v5626 = vsel %vm5612, %v5623, %v5625
    %v5627 = vshll.u32 %v5587, 8
    %v5628 = vmul.u32.u64.compose %v5627, %v5626
    %v5629 = vextract.low.u32 %v5628
    %v5630 = vextract.high.u32 %v5628
    %v5631 = vmul.u32.u64.compose %v5627, %v5622
    %v5632 = vextract.low.u32 %v5631
    %v5633 = vextract.high.u32 %v5631
    %v5634 = vmul.u32 %v5627, %v5618
    %v5635 = vadd.s32 %v5630, %v5632
    %vm5636 = vc.u32 %v5630, %v5632
    %v5637 = vadd.s32 %v5633, 1
    %v5638 = vsel %vm5636, %v5637, %v5633
    %v5639 = vadd.s32 %v5634, %v5638
    %v5640 = vadd.s32 %v5639, 536870912
    %v5641 = vshrl.u32 %v5640, 30
    %v5642 = vshll.u32 %v5641, 30
    %v5643 = vsub.s32 %v5639, %v5642
    %vm5644 = vcmp.lt.s32.totalorder %v5643, 0
    %v5645 = vsub.s32 0, %v5643
    %v5646 = vsel %vm5644, %v5645, %v5643
    %v5647 = vclz %v5646
    %v5648 = vsub.s32 %v5647, 2
    %vm5649 = vcmp.gt.s32.totalorder 0, %v5648
    %v5650 = vsel %vm5649, 0, %v5648
    %v5651 = vsub.s32 32, %v5650
    %v5652 = vshll.u32 %v5643, %v5650
    %v5653 = vshrl.u32 %v5635, %v5651
    %v5654 = vor.u32 %v5652, %v5653
    %v5655 = vsub.s32 4294967266, %v5650
    %v5656 = vadd.s32 %v5655, 127
    %v5657 = vshll.u32 %v5656, 23
    %v5658 = vor.u32 4788187, %v5657
    %v5659 = vand.u32 2147483647, %v5658
    %v5661 = vcvt.s32.f32 %v5654
    %v5662 = vmul.f32 %v5661, %v5659
    %v5663 = vxor.u32 %v5662, 2147483648
    %v5664 = vsel %vm5581, %v5663, %v5662
    %v5665 = vsub.s32 4, %v5641
    %v5666 = vsel %vm5581, %v5665, %v5641
    %v5667 = vsel %vm5580, %v2352, %v5664
    %v5668 = vsel %vm5580, 0, %v5666
    %v5669 = vcosq.f32.pop %v5667
    %v5670 = vsinq.f32.pop %v5667
    %vm5671 = vweird.f32 %v2352
    %v5672 = vadd.s32 %v5668, 3
    %v5673 = vand.u32 %v5672, 3
    %vm5674 = vcmp.lt.s32.totalorder %v5673, 2
    %vm5675 = vcmp.eq.s32.totalorder %v5673, 0
    %v5676 = vxor.u32 %v5670, 2147483648
    %v5677 = vsel %vm5675, %v5669, %v5676
    %vm5678 = vcmp.eq.s32.totalorder %v5673, 2
    %v5679 = vxor.u32 %v5669, 2147483648
    %v5680 = vsel %vm5678, %v5679, %v5670
    %v5681 = vsel %vm5674, %v5677, %v5680
    %v5682 = vsel %vm5671, nan, %v5681
    %v5683 = vand.u32 2147483647, %v2353
    %vm5684 = vcmp.le.f32.partialorder %v5683, 0.7853982
    %vm5685 = vcmp.lt.s32.totalorder %v2353, 0
    %v5686 = vand.u32 %v2353, 2139095040
    %v5687 = vshrl.u32 %v5686, 23
    %v5688 = vsub.s32 %v5687, 127
    %v5689 = vand.u32 2147483647, %v2353
    %v5690 = vand.u32 %v5689, 8388607
    %v5691 = vor.u32 %v5690, 8388608
    %v5692 = vsub.s32 0, %v5691
    %v5693 = vadd.s32 %v5688, 1
    %vm5694 = vcmp.gt.s32.totalorder %v5693, 0
    %v5695 = vsel %vm5694, %v5693, 0
    %v5696 = vshrl.u32 %v5695, 5
    %v5697 = vand.u32 %v5695, 31
    %v5698 = vsub.s32 32, %v5697
    %v5699 = vshrl.u32 683565275, %v5698
    %v5700 = vshll.u32 683565275, %v5697
    %v5701 = vshrl.u32 2475754826, %v5698
    %v5702 = vor.u32 %v5700, %v5701
    %v5703 = vshll.u32 2475754826, %v5697
    %v5704 = vshrl.u32 2131351028, %v5698
    %v5705 = vor.u32 %v5703, %v5704
    %v5706 = vshll.u32 2131351028, %v5697
    %v5707 = vshrl.u32 2102212464, %v5698
    %v5708 = vor.u32 %v5706, %v5707
    %v5709 = vshll.u32 2102212464, %v5697
    %v5710 = vshrl.u32 920167782, %v5698
    %v5711 = vor.u32 %v5709, %v5710
    %v5712 = vshll.u32 920167782, %v5697
    %v5713 = vshrl.u32 1326507024, %v5698
    %v5714 = vor.u32 %v5712, %v5713
    %vm5715 = vcmp.lt.s32.totalorder %v5696, 1
    %vm5716 = vcmp.lt.s32.totalorder %v5696, 2
    %vm5717 = vcmp.lt.s32.totalorder %v5696, 3
    %vm5718 = vcmp.lt.s32.totalorder %v5696, 4
    %v5719 = vsel %vm5715, %v5699, %v5702
    %v5720 = vsel %vm5718, %v5708, 2102212464
    %v5721 = vsel %vm5717, %v5705, %v5720
    %v5722 = vsel %vm5716, %v5719, %v5721
    %v5723 = vsel %vm5715, %v5702, %v5705
    %v5724 = vsel %vm5718, %v5711, 920167782
    %v5725 = vsel %vm5717, %v5708, %v5724
    %v5726 = vsel %vm5716, %v5723, %v5725
    %v5727 = vsel %vm5715, %v5705, %v5708
    %v5728 = vsel %vm5718, %v5714, 1326507024
    %v5729 = vsel %vm5717, %v5711, %v5728
    %v5730 = vsel %vm5716, %v5727, %v5729
    %v5731 = vshll.u32 %v5691, 8
    %v5732 = vmul.u32.u64.compose %v5731, %v5730
    %v5733 = vextract.low.u32 %v5732
    %v5734 = vextract.high.u32 %v5732
    %v5735 = vmul.u32.u64.compose %v5731, %v5726
    %v5736 = vextract.low.u32 %v5735
    %v5737 = vextract.high.u32 %v5735
    %v5738 = vmul.u32 %v5731, %v5722
    %v5739 = vadd.s32 %v5734, %v5736
    %vm5740 = vc.u32 %v5734, %v5736
    %v5741 = vadd.s32 %v5737, 1
    %v5742 = vsel %vm5740, %v5741, %v5737
    %v5743 = vadd.s32 %v5738, %v5742
    %v5744 = vadd.s32 %v5743, 536870912
    %v5745 = vshrl.u32 %v5744, 30
    %v5746 = vshll.u32 %v5745, 30
    %v5747 = vsub.s32 %v5743, %v5746
    %vm5748 = vcmp.lt.s32.totalorder %v5747, 0
    %v5749 = vsub.s32 0, %v5747
    %v5750 = vsel %vm5748, %v5749, %v5747
    %v5751 = vclz %v5750
    %v5752 = vsub.s32 %v5751, 2
    %vm5753 = vcmp.gt.s32.totalorder 0, %v5752
    %v5754 = vsel %vm5753, 0, %v5752
    %v5755 = vsub.s32 32, %v5754
    %v5756 = vshll.u32 %v5747, %v5754
    %v5757 = vshrl.u32 %v5739, %v5755
    %v5758 = vor.u32 %v5756, %v5757
    %v5759 = vsub.s32 4294967266, %v5754
    %v5760 = vadd.s32 %v5759, 127
    %v5761 = vshll.u32 %v5760, 23
    %v5762 = vor.u32 4788187, %v5761
    %v5763 = vand.u32 2147483647, %v5762
    %v5765 = vcvt.s32.f32 %v5758
    %v5766 = vmul.f32 %v5765, %v5763
    %v5767 = vxor.u32 %v5766, 2147483648
    %v5768 = vsel %vm5685, %v5767, %v5766
    %v5769 = vsub.s32 4, %v5745
    %v5770 = vsel %vm5685, %v5769, %v5745
    %v5771 = vsel %vm5684, %v2353, %v5768
    %v5772 = vsel %vm5684, 0, %v5770
    %v5773 = vcosq.f32.pop %v5771
    %v5774 = vsinq.f32.pop %v5771
    %vm5775 = vweird.f32 %v2353
    %v5776 = vadd.s32 %v5772, 3
    %v5777 = vand.u32 %v5776, 3
    %vm5778 = vcmp.lt.s32.totalorder %v5777, 2
    %vm5779 = vcmp.eq.s32.totalorder %v5777, 0
    %v5780 = vxor.u32 %v5774, 2147483648
    %v5781 = vsel %vm5779, %v5773, %v5780
    %vm5782 = vcmp.eq.s32.totalorder %v5777, 2
    %v5783 = vxor.u32 %v5773, 2147483648
    %v5784 = vsel %vm5782, %v5783, %v5774
    %v5785 = vsel %vm5778, %v5781, %v5784
    %v5786 = vsel %vm5775, nan, %v5785
    %v5787 = vand.u32 2147483647, %v2354
    %vm5788 = vcmp.le.f32.partialorder %v5787, 0.7853982
    %vm5789 = vcmp.lt.s32.totalorder %v2354, 0
    %v5790 = vand.u32 %v2354, 2139095040
    %v5791 = vshrl.u32 %v5790, 23
    %v5792 = vsub.s32 %v5791, 127
    %v5793 = vand.u32 2147483647, %v2354
    %v5794 = vand.u32 %v5793, 8388607
    %v5795 = vor.u32 %v5794, 8388608
    %v5796 = vsub.s32 0, %v5795
    %v5797 = vadd.s32 %v5792, 1
    %vm5798 = vcmp.gt.s32.totalorder %v5797, 0
    %v5799 = vsel %vm5798, %v5797, 0
    %v5800 = vshrl.u32 %v5799, 5
    %v5801 = vand.u32 %v5799, 31
    %v5802 = vsub.s32 32, %v5801
    %v5803 = vshrl.u32 683565275, %v5802
    %v5804 = vshll.u32 683565275, %v5801
    %v5805 = vshrl.u32 2475754826, %v5802
    %v5806 = vor.u32 %v5804, %v5805
    %v5807 = vshll.u32 2475754826, %v5801
    %v5808 = vshrl.u32 2131351028, %v5802
    %v5809 = vor.u32 %v5807, %v5808
    %v5810 = vshll.u32 2131351028, %v5801
    %v5811 = vshrl.u32 2102212464, %v5802
    %v5812 = vor.u32 %v5810, %v5811
    %v5813 = vshll.u32 2102212464, %v5801
    %v5814 = vshrl.u32 920167782, %v5802
    %v5815 = vor.u32 %v5813, %v5814
    %v5816 = vshll.u32 920167782, %v5801
    %v5817 = vshrl.u32 1326507024, %v5802
    %v5818 = vor.u32 %v5816, %v5817
    %vm5819 = vcmp.lt.s32.totalorder %v5800, 1
    %vm5820 = vcmp.lt.s32.totalorder %v5800, 2
    %vm5821 = vcmp.lt.s32.totalorder %v5800, 3
    %vm5822 = vcmp.lt.s32.totalorder %v5800, 4
    %v5823 = vsel %vm5819, %v5803, %v5806
    %v5824 = vsel %vm5822, %v5812, 2102212464
    %v5825 = vsel %vm5821, %v5809, %v5824
    %v5826 = vsel %vm5820, %v5823, %v5825
    %v5827 = vsel %vm5819, %v5806, %v5809
    %v5828 = vsel %vm5822, %v5815, 920167782
    %v5829 = vsel %vm5821, %v5812, %v5828
    %v5830 = vsel %vm5820, %v5827, %v5829
    %v5831 = vsel %vm5819, %v5809, %v5812
    %v5832 = vsel %vm5822, %v5818, 1326507024
    %v5833 = vsel %vm5821, %v5815, %v5832
    %v5834 = vsel %vm5820, %v5831, %v5833
    %v5835 = vshll.u32 %v5795, 8
    %v5836 = vmul.u32.u64.compose %v5835, %v5834
    %v5837 = vextract.low.u32 %v5836
    %v5838 = vextract.high.u32 %v5836
    %v5839 = vmul.u32.u64.compose %v5835, %v5830
    %v5840 = vextract.low.u32 %v5839
    %v5841 = vextract.high.u32 %v5839
    %v5842 = vmul.u32 %v5835, %v5826
    %v5843 = vadd.s32 %v5838, %v5840
    %vm5844 = vc.u32 %v5838, %v5840
    %v5845 = vadd.s32 %v5841, 1
    %v5846 = vsel %vm5844, %v5845, %v5841
    %v5847 = vadd.s32 %v5842, %v5846
    %v5848 = vadd.s32 %v5847, 536870912
    %v5849 = vshrl.u32 %v5848, 30
    %v5850 = vshll.u32 %v5849, 30
    %v5851 = vsub.s32 %v5847, %v5850
    %vm5852 = vcmp.lt.s32.totalorder %v5851, 0
    %v5853 = vsub.s32 0, %v5851
    %v5854 = vsel %vm5852, %v5853, %v5851
    %v5855 = vclz %v5854
    %v5856 = vsub.s32 %v5855, 2
    %vm5857 = vcmp.gt.s32.totalorder 0, %v5856
    %v5858 = vsel %vm5857, 0, %v5856
    %v5859 = vsub.s32 32, %v5858
    %v5860 = vshll.u32 %v5851, %v5858
    %v5861 = vshrl.u32 %v5843, %v5859
    %v5862 = vor.u32 %v5860, %v5861
    %v5863 = vsub.s32 4294967266, %v5858
    %v5864 = vadd.s32 %v5863, 127
    %v5865 = vshll.u32 %v5864, 23
    %v5866 = vor.u32 4788187, %v5865
    %v5867 = vand.u32 2147483647, %v5866
    %v5869 = vcvt.s32.f32 %v5862
    %v5870 = vmul.f32 %v5869, %v5867
    %v5871 = vxor.u32 %v5870, 2147483648
    %v5872 = vsel %vm5789, %v5871, %v5870
    %v5873 = vsub.s32 4, %v5849
    %v5874 = vsel %vm5789, %v5873, %v5849
    %v5875 = vsel %vm5788, %v2354, %v5872
    %v5876 = vsel %vm5788, 0, %v5874
    %v5877 = vcosq.f32.pop %v5875
    %v5878 = vsinq.f32.pop %v5875
    %vm5879 = vweird.f32 %v2354
    %v5880 = vadd.s32 %v5876, 3
    %v5881 = vand.u32 %v5880, 3
    %vm5882 = vcmp.lt.s32.totalorder %v5881, 2
    %vm5883 = vcmp.eq.s32.totalorder %v5881, 0
    %v5884 = vxor.u32 %v5878, 2147483648
    %v5885 = vsel %vm5883, %v5877, %v5884
    %vm5886 = vcmp.eq.s32.totalorder %v5881, 2
    %v5887 = vxor.u32 %v5877, 2147483648
    %v5888 = vsel %vm5886, %v5887, %v5878
    %v5889 = vsel %vm5882, %v5885, %v5888
    %v5890 = vsel %vm5879, nan, %v5889
    %v5891 = vld [vmem:[#allocation8] sm:$0xff]
    %v5892 = vld [vmem:[#allocation8 + $0x8] sm:$0xff]
    %v5893 = vld [vmem:[#allocation8 + $0x10] sm:$0x1]
    %vm5894 = vcmp.gt.f32.partialorder %v5891, 0.5
    %vm5895 = vcmp.gt.f32.partialorder %v5892, 0.5
    %vm5896 = vcmp.gt.f32.partialorder %v5893, 0.5
    %v5897 = vsel %vm5894, 1, 0
    %v5898 = vsel %vm5895, 1, 0
    %v5899 = vsel %vm5896, 1, 0
    %v5900 = vlaneseq
    %v5901 = vshrl.u32 %v5900, 7
    %v5902 = vsub.s32 0, %v5901
    %v5903 = vrot.slane %v5897, %v5902
    %v5904 = vlaneseq
    %v5905 = vshrl.u32 %v5904, 7
    %v5906 = vsub.s32 1, %v5905
    %v5907 = vrot.slane %v5897, %v5906
    %v5908 = vlaneseq
    %v5909 = vshrl.u32 %v5908, 7
    %v5910 = vsub.s32 2, %v5909
    %v5911 = vrot.slane %v5897, %v5910
    %v5912 = vlaneseq
    %v5913 = vshrl.u32 %v5912, 7
    %v5914 = vsub.s32 3, %v5913
    %v5915 = vrot.slane %v5897, %v5914
    %v5916 = vlaneseq
    %v5917 = vshrl.u32 %v5916, 7
    %v5918 = vsub.s32 4, %v5917
    %v5919 = vrot.slane %v5897, %v5918
    %v5920 = vlaneseq
    %v5921 = vshrl.u32 %v5920, 7
    %v5922 = vsub.s32 5, %v5921
    %v5923 = vrot.slane %v5897, %v5922
    %v5924 = vlaneseq
    %v5925 = vshrl.u32 %v5924, 7
    %v5926 = vsub.s32 6, %v5925
    %v5927 = vrot.slane %v5897, %v5926
    %v5928 = vlaneseq
    %v5929 = vshrl.u32 %v5928, 7
    %v5930 = vsub.s32 7, %v5929
    %v5931 = vrot.slane %v5897, %v5930
    %v5932 = vlaneseq
    %v5933 = vshrl.u32 %v5932, 7
    %v5934 = vsub.s32 0, %v5933
    %v5935 = vrot.slane %v5898, %v5934
    %v5936 = vlaneseq
    %v5937 = vshrl.u32 %v5936, 7
    %v5938 = vsub.s32 1, %v5937
    %v5939 = vrot.slane %v5898, %v5938
    %v5940 = vlaneseq
    %v5941 = vshrl.u32 %v5940, 7
    %v5942 = vsub.s32 2, %v5941
    %v5943 = vrot.slane %v5898, %v5942
    %v5944 = vlaneseq
    %v5945 = vshrl.u32 %v5944, 7
    %v5946 = vsub.s32 3, %v5945
    %v5947 = vrot.slane %v5898, %v5946
    %v5948 = vlaneseq
    %v5949 = vshrl.u32 %v5948, 7
    %v5950 = vsub.s32 4, %v5949
    %v5951 = vrot.slane %v5898, %v5950
    %v5952 = vlaneseq
    %v5953 = vshrl.u32 %v5952, 7
    %v5954 = vsub.s32 5, %v5953
    %v5955 = vrot.slane %v5898, %v5954
    %v5956 = vlaneseq
    %v5957 = vshrl.u32 %v5956, 7
    %v5958 = vsub.s32 6, %v5957
    %v5959 = vrot.slane %v5898, %v5958
    %v5960 = vlaneseq
    %v5961 = vshrl.u32 %v5960, 7
    %v5962 = vsub.s32 7, %v5961
    %v5963 = vrot.slane %v5898, %v5962
    %v5964 = vlaneseq
    %v5965 = vshrl.u32 %v5964, 7
    %v5966 = vsub.s32 0, %v5965
    %v5967 = vrot.slane %v5899, %v5966
    %vm5968 = vcmp.eq.s32.totalorder %v5903, 1
    %vm5969 = vcmp.eq.s32.totalorder %v5907, 1
    %vm5970 = vcmp.eq.s32.totalorder %v5911, 1
    %vm5971 = vcmp.eq.s32.totalorder %v5915, 1
    %vm5972 = vcmp.eq.s32.totalorder %v5919, 1
    %vm5973 = vcmp.eq.s32.totalorder %v5923, 1
    %vm5974 = vcmp.eq.s32.totalorder %v5927, 1
    %vm5975 = vcmp.eq.s32.totalorder %v5931, 1
    %vm5976 = vcmp.eq.s32.totalorder %v5935, 1
    %vm5977 = vcmp.eq.s32.totalorder %v5939, 1
    %vm5978 = vcmp.eq.s32.totalorder %v5943, 1
    %vm5979 = vcmp.eq.s32.totalorder %v5947, 1
    %vm5980 = vcmp.eq.s32.totalorder %v5951, 1
    %vm5981 = vcmp.eq.s32.totalorder %v5955, 1
    %vm5982 = vcmp.eq.s32.totalorder %v5959, 1
    %vm5983 = vcmp.eq.s32.totalorder %v5963, 1
    %vm5984 = vcmp.eq.s32.totalorder %v5967, 1
    %v5985 = vsel %vm5968, %v2071, %v2458
    %v5986 = vsel %vm5969, %v2072, %v2562
    %v5987 = vsel %vm5970, %v2073, %v2666
    %v5988 = vsel %vm5971, %v2074, %v2770
    %v5989 = vsel %vm5972, %v2075, %v2874
    %v5990 = vsel %vm5973, %v2076, %v2978
    %v5991 = vsel %vm5974, %v2077, %v3082
    %v5992 = vsel %vm5975, %v2078, %v3186
    %v5993 = vsel %vm5976, %v2079, %v3290
    %v5994 = vsel %vm5977, %v2080, %v3394
    %v5995 = vsel %vm5978, %v2081, %v3498
    %v5996 = vsel %vm5979, %v2082, %v3602
    %v5997 = vsel %vm5980, %v2083, %v3706
    %v5998 = vsel %vm5981, %v2084, %v3810
    %v5999 = vsel %vm5982, %v2085, %v3914
    %v6000 = vsel %vm5983, %v2086, %v4018
    %v6001 = vsel %vm5984, %v2087, %v4122
    %v6002 = vsel %vm5968, %v2088, %v4226
    %v6003 = vsel %vm5969, %v2089, %v4330
    %v6004 = vsel %vm5970, %v2090, %v4434
    %v6005 = vsel %vm5971, %v2091, %v4538
    %v6006 = vsel %vm5972, %v2092, %v4642
    %v6007 = vsel %vm5973, %v2093, %v4746
    %v6008 = vsel %vm5974, %v2094, %v4850
    %v6009 = vsel %vm5975, %v2095, %v4954
    %v6010 = vsel %vm5976, %v2096, %v5058
    %v6011 = vsel %vm5977, %v2097, %v5162
    %v6012 = vsel %vm5978, %v2098, %v5266
    %v6013 = vsel %vm5979, %v2099, %v5370
    %v6014 = vsel %vm5980, %v2100, %v5474
    %v6015 = vsel %vm5981, %v2101, %v5578
    %v6016 = vsel %vm5982, %v2102, %v5682
    %v6017 = vsel %vm5983, %v2103, %v5786
    %v6018 = vsel %vm5984, %v2104, %v5890
    %v6053 = vcombine.low %v5985, %v5986
    %v6054 = vcombine.high %v5985, %v5986
    %v6055 = vcombine.low %v5987, %v5988
    %v6056 = vcombine.high %v5987, %v5988
    %v6057 = vcombine.low %v5989, %v5990
    %v6058 = vcombine.high %v5989, %v5990
    %v6059 = vcombine.low %v5991, %v5992
    %v6060 = vcombine.high %v5991, %v5992
    %v6061 = vcombine.low %v5993, %v5994
    %v6062 = vcombine.high %v5993, %v5994
    %v6063 = vcombine.low %v5995, %v5996
    %v6064 = vcombine.high %v5995, %v5996
    %v6065 = vcombine.low %v5997, %v5998
    %v6066 = vcombine.high %v5997, %v5998
    %v6067 = vcombine.low %v5999, %v6000
    %v6068 = vcombine.high %v5999, %v6000
    %v6069 = vcombine.high %v6001, %v6001
    %v6070 = vcombine.low %v6002, %v6003
    %v6071 = vcombine.high %v6002, %v6003
    %v6072 = vcombine.low %v6004, %v6005
    %v6073 = vcombine.high %v6004, %v6005
    %v6074 = vcombine.low %v6006, %v6007
    %v6075 = vcombine.high %v6006, %v6007
    %v6076 = vcombine.low %v6008, %v6009
    %v6077 = vcombine.high %v6008, %v6009
    %v6078 = vcombine.low %v6010, %v6011
    %v6079 = vcombine.high %v6010, %v6011
    %v6080 = vcombine.low %v6012, %v6013
    %v6081 = vcombine.high %v6012, %v6013
    %v6082 = vcombine.low %v6014, %v6015
    %v6083 = vcombine.high %v6014, %v6015
    %v6084 = vcombine.low %v6016, %v6017
    %v6085 = vcombine.high %v6016, %v6017
    %v6086 = vcombine.high %v6018, %v6018
    %6121 = vst [vmem:[#allocation10] sm:$0xff] %v6053
    %6122 = vst [vmem:[#allocation10 + $0x8] sm:$0xff] %v6055
    %6123 = vst [vmem:[#allocation10 + $0x10] sm:$0xff] %v6057
    %6124 = vst [vmem:[#allocation10 + $0x18] sm:$0xff] %v6059
    %6125 = vst [vmem:[#allocation10 + $0x20] sm:$0xff] %v6061
    %6126 = vst [vmem:[#allocation10 + $0x28] sm:$0xff] %v6063
    %6127 = vst [vmem:[#allocation10 + $0x30] sm:$0xff] %v6065
    %6128 = vst [vmem:[#allocation10 + $0x38] sm:$0xff] %v6067
    %6129 = vst [vmem:[#allocation10 + $0x40] sm:$0xf] %v6001
    %6130 = vst [vmem:[#allocation10 + $0x44] sm:$0xff] %v6054
    %6131 = vst [vmem:[#allocation10 + $0x4c] sm:$0xff] %v6056
    %6132 = vst [vmem:[#allocation10 + $0x54] sm:$0xff] %v6058
    %6133 = vst [vmem:[#allocation10 + $0x5c] sm:$0xff] %v6060
    %6134 = vst [vmem:[#allocation10 + $0x64] sm:$0xff] %v6062
    %6135 = vst [vmem:[#allocation10 + $0x6c] sm:$0xff] %v6064
    %6136 = vst [vmem:[#allocation10 + $0x74] sm:$0xff] %v6066
    %6137 = vst [vmem:[#allocation10 + $0x7c] sm:$0xff] %v6068
    %6138 = vst [vmem:[#allocation10 + $0x84] sm:$0xf] %v6069
    %6139 = vst [vmem:[#allocation10 + $0x88] sm:$0xff] %v6070
    %6140 = vst [vmem:[#allocation10 + $0x90] sm:$0xff] %v6072
    %6141 = vst [vmem:[#allocation10 + $0x98] sm:$0xff] %v6074
    %6142 = vst [vmem:[#allocation10 + $0xa0] sm:$0xff] %v6076
    %6143 = vst [vmem:[#allocation10 + $0xa8] sm:$0xff] %v6078
    %6144 = vst [vmem:[#allocation10 + $0xb0] sm:$0xff] %v6080
    %6145 = vst [vmem:[#allocation10 + $0xb8] sm:$0xff] %v6082
    %6146 = vst [vmem:[#allocation10 + $0xc0] sm:$0xff] %v6084
    %6147 = vst [vmem:[#allocation10 + $0xc8] sm:$0xf] %v6018
    %6148 = vst [vmem:[#allocation10 + $0xcc] sm:$0xff] %v6071
    %6149 = vst [vmem:[#allocation10 + $0xd4] sm:$0xff] %v6073
    %6150 = vst [vmem:[#allocation10 + $0xdc] sm:$0xff] %v6075
    %6151 = vst [vmem:[#allocation10 + $0xe4] sm:$0xff] %v6077
    %6152 = vst [vmem:[#allocation10 + $0xec] sm:$0xff] %v6079
    %6153 = vst [vmem:[#allocation10 + $0xf4] sm:$0xff] %v6081
    %6154 = vst [vmem:[#allocation10 + $0xfc] sm:$0xff] %v6083
    %6155 = vst [vmem:[#allocation10 + $0x104] sm:$0xff] %v6085
    %6156 = vst [vmem:[#allocation10 + $0x10c] sm:$0xf] %v6086
    // Predicated region
    $region38: #{tpu_custom_call.1} parent=1 // pred_check
      _
    $region39: #{tpu_custom_call.1} parent=1 // pred_check_branch
      %6158 = sbr.rel (0) target = $region41
    $region40: #{tpu_custom_call.1} parent=1 // pred_region
      %s6160 = ssub.s32 4352, 1088
      %6161 = vsyncadd [#allocation4], %s6160
      %s6162 = sshll.u32 [#allocation10], 4
      %s6163 = int_to_ptr.vmem [resolvable:$true] %s6162
      %6168 = dma.vmem_to_hbm [thread:$0]  %s6163, 1088, %s5, [#allocation4], 1088, 1088, 68
    $region41: #{tpu_custom_call.1} parent=1 // pred_fallthru
      _
    // Predicated region
    $region42: #{tpu_custom_call.1} parent=1 // pred_check
      _
    $region43: #{tpu_custom_call.1} parent=1 // pred_check_branch
      %6170 = sbr.rel (0) target = $region45
    $region44: #{tpu_custom_call.1} parent=1 // pred_region
      %6171 = dma.done [#allocation4], 4352
    $region45: #{tpu_custom_call.1} parent=1 // pred_fallthru
      _
    %6172 = vsyncpa [#allocation3], 1
    %6173 = vsyncpa [#allocation6], 1
    %6174 = vsyncpa [#allocation9], 1
    %6175 = vsyncpa [#allocation4], 1

</llo_original>
